<compile_context>
chip_gen: v5e
topology: v5e:2x2
jax: 0.10.0
libtpu: 0.0.40
codegen_flags: <defaults>
</compile_context>

<pallas_src>
import functools

import jax
import jax.numpy as jnp
from jax import lax
from jax.experimental import pallas as pl
from jax.experimental.pallas import tpu as pltpu


# ------------------------------------------------------------------ kernel ---

def _decoder_kernel(*refs, hidden, n_true, n_pad, eps, has_llfs):
    if has_llfs:
        (a_ref, l_ref, f_ref, wcat_ref, bcat_ref, w2p_ref,
         g_ref, beta_ref, o_ref) = refs
        c32 = (a_ref[...].astype(jnp.float32)
               + l_ref[...].astype(jnp.float32)
               + f_ref[...].astype(jnp.float32))
    else:
        (a_ref, l_ref, wcat_ref, bcat_ref, w2p_ref,
         g_ref, beta_ref, o_ref) = refs
        c32 = a_ref[...].astype(jnp.float32) + l_ref[...].astype(jnp.float32)

    c = c32.astype(jnp.bfloat16)                                         # (BT, IN)

    # One wide c-consuming matmul: columns [0:H) are the relu branch
    # (c @ W1 + b1); columns [H:) are the projection-folded shortcut branch.
    t = jnp.dot(c, wcat_ref[...],
                preferred_element_type=jnp.float32) + bcat_ref[...]      # (BT, H+NP)

    h = jnp.maximum(t[:, :hidden], 0.0).astype(jnp.bfloat16)             # (BT, H)

    out = jnp.dot(h, w2p_ref[...],
                  preferred_element_type=jnp.float32) + t[:, hidden:]    # (BT, NP)

    # LayerNorm over the true n_true columns.  Padded columns of `out` are
    # exactly zero (zero-padded folded weights/biases), so the plain lane sum
    # already equals the masked sum; the padded lanes of (out - mean) equal
    # -mean, so their squared contribution (n_pad - n_true) * mean^2 is
    # subtracted analytically instead of masking (no iota/compare/select).
    n_zero = n_pad - n_true
    inv_n = 1.0 / n_true
    mean = jnp.sum(out, axis=-1, keepdims=True) * inv_n
    cen = out - mean
    var = (jnp.sum(cen * cen, axis=-1, keepdims=True)
           - n_zero * (mean * mean)) * inv_n
    normed = cen * lax.rsqrt(var + eps)

    # gamma/beta are zero-padded -> padded output lanes store exact zeros.
    o_ref[...] = normed * g_ref[...] + beta_ref[...]


# ------------------------------------------------------- parameter folding ---

def fold_params(params):
    """Pre-compose the projection into both residual branches; lane-pad to 384."""
    w1, b1, w2, b2, ws, bs, wp, bp, gamma, beta = params   # weights are (in, out)
    input_size, hidden = w1.shape
    n_true = wp.shape[1]
    n_pad = ((n_true + 127) // 128) * 128                  # 273 -> 384
    pad = n_pad - n_true

    w2p = w2 @ wp                                          # (H, n_true)   f32
    wsp = ws @ wp                                          # (IN, n_true)  f32
    b_fold = (b2 + bs) @ wp + bp                           # (n_true,)     f32

    w2p = jnp.pad(w2p, ((0, 0), (0, pad)))
    wsp = jnp.pad(wsp, ((0, 0), (0, pad)))
    b_fold = jnp.pad(b_fold, (0, pad))
    gamma_p = jnp.pad(gamma, (0, pad)).reshape(1, -1).astype(jnp.float32)
    beta_p = jnp.pad(beta, (0, pad)).reshape(1, -1).astype(jnp.float32)

    wcat = jnp.concatenate([w1, wsp], axis=1).astype(jnp.bfloat16)   # (IN, H+NP)
    bcat = jnp.concatenate([b1, b_fold]).reshape(1, -1).astype(jnp.float32)
    w2p = w2p.astype(jnp.bfloat16)                                   # (H, NP)

    return dict(wcat=wcat, bcat=bcat, w2p=w2p, gamma=gamma_p, beta=beta_p,
                input_size=input_size, hidden=hidden,
                n_true=n_true, n_pad=n_pad)


# ----------------------------------------------------------------- wrapper ---

def _resident_spec(shape):
    """BlockSpec for a grid-invariant (VMEM-resident) operand, single-buffered."""
    idx = lambda i: (0,) * len(shape)
    try:
        return pl.BlockSpec(shape, idx, pipeline_mode=pl.Buffered(1))
    except (AttributeError, TypeError):   # older jax: no pipeline_mode kwarg
        return pl.BlockSpec(shape, idx)


def _choose_block_rows(B):
    """Batch-tile rows: big for DMA efficiency, but >= 2 grid steps if B >= 16."""
    b8 = max(8, ((B + 7) // 8) * 8)            # sublane-padded batch
    bt = min(512, b8)                          # VMEM / roofline ceiling
    if b8 >= 16:
        half = (((b8 + 1) // 2 + 7) // 8) * 8  # roughly-balanced 2-way split
        bt = min(bt, half)
    return bt


def landmark_decoder_forward(folded, audio_feature, landmark_feature,
                             llfs_feature=None, *, eps=1e-5):
    """Fused forward pass of LandmarkDecoder. Features: (B, T, C)."""
    assert audio_feature.shape == landmark_feature.shape, \
        "audio_feature and landmark_feature must have the same shape"
    B = audio_feature.shape[0]
    has_llfs = llfs_feature is not None

    IN = folded["input_size"]
    H = folded["hidden"]
    NP = folded["n_pad"]
    HC = H + NP
    n_true = folded["n_true"]

    # Keep caller dtype (bf16 inputs are DMA'd as bf16; upcast happens in-kernel).
    a = audio_feature.reshape(B, -1)
    l = landmark_feature.reshape(B, -1)
    feats = [a, l]
    if has_llfs:
        feats.append(llfs_feature.reshape(B, -1))

    BT = _choose_block_rows(B)
    B_pad = ((B + BT - 1) // BT) * BT
    if B_pad != B:
        feats = [jnp.pad(x, ((0, B_pad - B), (0, 0))) for x in feats]
    grid = (B_pad // BT,)

    weights = (folded["wcat"], folded["bcat"], folded["w2p"],
               folded["gamma"], folded["beta"])
    ins = tuple(feats) + weights

    feat_specs = [pl.BlockSpec((BT, IN), lambda i: (i, 0)) for _ in feats]
    weight_specs = [_resident_spec((IN, HC)),   # Wcat  (resident, 1-buffered)
                    _resident_spec((1, HC)),    # bcat
                    _resident_spec((H, NP)),    # W2p
                    _resident_spec((1, NP)),    # gamma
                    _resident_spec((1, NP))]    # beta

    # VMEM budget: double-buffered activation/output streams + single-buffered
    # resident weights + the live (BT, HC) f32 intermediate; 1.5x margin,
    # clamped to [32 MiB, 64 MiB] (64 MiB = v7x physical ceiling).
    act_step = BT * IN * sum(x.dtype.itemsize for x in feats)
    wt_bytes = sum(int(w.size) * w.dtype.itemsize for w in weights)
    out_step = BT * NP * 4
    scratch = BT * HC * 4 + BT * NP * 4
    need = 2 * act_step + wt_bytes + 2 * out_step + scratch
    vmem_limit = int(min(max(int(need * 1.5), 32 << 20), 64 << 20))

    flops = 2 * B_pad * (IN * HC + H * NP) + 10 * B_pad * NP
    bytes_accessed = (sum(int(x.size) * x.dtype.itemsize for x in ins)
                      + B_pad * NP * 4)

    out = pl.pallas_call(
        functools.partial(_decoder_kernel, hidden=H, n_true=n_true,
                          n_pad=NP, eps=eps, has_llfs=has_llfs),
        out_shape=jax.ShapeDtypeStruct((B_pad, NP), jnp.float32),
        grid_spec=pltpu.PrefetchScalarGridSpec(
            num_scalar_prefetch=0,
            grid=grid,
            in_specs=feat_specs + weight_specs,
            out_specs=pl.BlockSpec((BT, NP), lambda i: (i, 0)),
        ),
        compiler_params=pltpu.CompilerParams(
            dimension_semantics=("parallel",),
            vmem_limit_bytes=vmem_limit),
        cost_estimate=pl.CostEstimate(flops=flops, transcendentals=B_pad,
                                      bytes_accessed=bytes_accessed),
    )(*ins)

    return out[:B, :n_true]


# ---------------------------------------------------------- reference/init ---

def init_params(key, input_size, hidden_dim, proj_out):
    """Deterministic synthetic parameters (weights stored as (in, out))."""
    ks = jax.random.split(key, 8)
    scale = 0.02
    w1 = scale * jax.random.normal(ks[0], (input_size, hidden_dim), jnp.float32)
    b1 = scale * jax.random.normal(ks[1], (hidden_dim,), jnp.float32)
    w2 = scale * jax.random.normal(ks[2], (hidden_dim, hidden_dim), jnp.float32)
    b2 = scale * jax.random.normal(ks[3], (hidden_dim,), jnp.float32)
    ws = scale * jax.random.normal(ks[4], (input_size, hidden_dim), jnp.float32)
    bs = scale * jax.random.normal(ks[5], (hidden_dim,), jnp.float32)
    wp = scale * jax.random.normal(ks[6], (hidden_dim, proj_out), jnp.float32)
    bp = scale * jax.random.normal(ks[7], (proj_out,), jnp.float32)
    gamma = jnp.ones((proj_out,), jnp.float32)   # nn.LayerNorm default init
    beta = jnp.zeros((proj_out,), jnp.float32)
    return (w1, b1, w2, b2, ws, bs, wp, bp, gamma, beta)


def reference_forward(params, audio, landmark, llfs=None, eps=1e-5):
    """Pure-JAX f32 reference replicating the PyTorch module semantics."""
    w1, b1, w2, b2, ws, bs, wp, bp, gamma, beta = params
    c = audio + landmark
    if llfs is not None:
        c = c + llfs
    c = c.reshape(c.shape[0], -1).astype(jnp.float32)
    x = jnp.maximum(c @ w1 + b1, 0.0)
    x = x @ w2 + b2
    sc = c @ ws + bs
    out = (x + sc) @ wp + bp
    mean = jnp.mean(out, axis=-1, keepdims=True)
    var = jnp.mean((out - mean) ** 2, axis=-1, keepdims=True)
    return (out - mean) / jnp.sqrt(var + eps) * gamma + beta


# -------------------------------------------------------------------- main ---

if __name__ == "__main__":
    # Module defaults: input_dim=(5, 256), hidden_dim=512,
    #                  output_dim=(131, 2), emo_dim=11  -> proj_out = 273
    input_dim = (5, 256)
    hidden_dim = 512
    output_dim = (131, 2)
    emo_dim = 11
    input_size = input_dim[0] * input_dim[1]              # 1280
    proj_out = output_dim[0] * output_dim[1] + emo_dim    # 273

    key = jax.random.PRNGKey(0)
    kp, ka, kl, kf = jax.random.split(key, 4)

    params = init_params(kp, input_size, hidden_dim, proj_out)
    folded = fold_params(params)                          # one-time, at load

    # --- case 1: B=2 with llfs (3-input kernel variant, single grid step) ---
    B = 2
    audio = jax.random.normal(ka, (B,) + input_dim, jnp.float32)
    landmark = jax.random.normal(kl, (B,) + input_dim, jnp.float32)
    llfs = jax.random.normal(kf, (B,) + input_dim, jnp.float32)

    out = jax.block_until_ready(
        landmark_decoder_forward(folded, audio, landmark, llfs))
    ref = reference_forward(params, audio, landmark, llfs)
    assert out.shape == (B, proj_out), out.shape
    assert jnp.allclose(out, ref, atol=5e-2, rtol=5e-2), \
        float(jnp.max(jnp.abs(out - ref)))

    # --- case 2: B=20 without llfs (2-input variant, >=2 grid steps) ---
    B2 = 20
    ka2, kl2 = jax.random.split(ka)
    audio2 = jax.random.normal(ka2, (B2,) + input_dim, jnp.float32)
    landmark2 = jax.random.normal(kl2, (B2,) + input_dim, jnp.float32)

    out2 = jax.block_until_ready(
        landmark_decoder_forward(folded, audio2, landmark2, None))
    ref2 = reference_forward(params, audio2, landmark2, None)
    assert out2.shape == (B2, proj_out), out2.shape
    assert jnp.allclose(out2, ref2, atol=5e-2, rtol=5e-2), \
        float(jnp.max(jnp.abs(out2 - ref2)))

    print("KERNEL_OK")
</pallas_src>

<mosaic_0001>
module attributes {stable_mosaic.version = 11 : i64} {
  func.func @_decoder_kernel(%arg0: i32, %arg1: memref<8x1280xf32, #tpu.memory_space<vmem>>, %arg2: memref<8x1280xf32, #tpu.memory_space<vmem>>, %arg3: memref<8x1280xf32, #tpu.memory_space<vmem>>, %arg4: memref<1280x896xbf16, #tpu.memory_space<vmem>>, %arg5: memref<1x896xf32, #tpu.memory_space<vmem>>, %arg6: memref<512x384xbf16, #tpu.memory_space<vmem>>, %arg7: memref<1x384xf32, #tpu.memory_space<vmem>>, %arg8: memref<1x384xf32, #tpu.memory_space<vmem>>, %arg9: memref<8x384xf32, #tpu.memory_space<vmem>>) attributes {dimension_semantics = [#tpu.dimension_semantics<parallel>], iteration_bounds = array<i64: 1>, scalar_prefetch = 0 : i64, scratch_operands = 0 : i64, tpu.core_type = #tpu.core_type<tc>, window_params = [{transform_indices = @transform_0, window_bounds = array<i64: 8, 1280>}, {transform_indices = @transform_1, window_bounds = array<i64: 8, 1280>}, {transform_indices = @transform_2, window_bounds = array<i64: 8, 1280>}, {pipeline_mode = #tpu.pipeline_mode<synchronous>, transform_indices = @transform_3, window_bounds = array<i64: 1280, 896>}, {pipeline_mode = #tpu.pipeline_mode<synchronous>, transform_indices = @transform_4, window_bounds = array<i64: 1, 896>}, {pipeline_mode = #tpu.pipeline_mode<synchronous>, transform_indices = @transform_5, window_bounds = array<i64: 512, 384>}, {pipeline_mode = #tpu.pipeline_mode<synchronous>, transform_indices = @transform_6, window_bounds = array<i64: 1, 384>}, {pipeline_mode = #tpu.pipeline_mode<synchronous>, transform_indices = @transform_7, window_bounds = array<i64: 1, 384>}, {transform_indices = @transform_8, window_bounds = array<i64: 8, 384>}]} {
    %c0 = arith.constant 0 : index
    %c0_0 = arith.constant 0 : index
    %0 = vector.load %arg1[%c0, %c0_0] : memref<8x1280xf32, #tpu.memory_space<vmem>>, vector<8x1280xf32>
    %c0_1 = arith.constant 0 : index
    %c0_2 = arith.constant 0 : index
    %1 = vector.load %arg2[%c0_1, %c0_2] : memref<8x1280xf32, #tpu.memory_space<vmem>>, vector<8x1280xf32>
    %2 = arith.addf %0, %1 : vector<8x1280xf32>
    %c0_3 = arith.constant 0 : index
    %c0_4 = arith.constant 0 : index
    %3 = vector.load %arg3[%c0_3, %c0_4] : memref<8x1280xf32, #tpu.memory_space<vmem>>, vector<8x1280xf32>
    %4 = arith.addf %2, %3 : vector<8x1280xf32>
    %5 = arith.truncf %4 : vector<8x1280xf32> to vector<8x1280xbf16>
    %c0_5 = arith.constant 0 : index
    %c0_6 = arith.constant 0 : index
    %6 = vector.load %arg4[%c0_5, %c0_6] : memref<1280x896xbf16, #tpu.memory_space<vmem>>, vector<1280x896xbf16>
    %cst = arith.constant dense<0.000000e+00> : vector<8x896xf32>
    %7 = tpu.matmul %5, %6, %cst {dimension_numbers = #tpu.dot_dimension_numbers<[1], [0], [0], [1], [0, 0, 1, 1], [], []>} : vector<8x1280xbf16>, vector<1280x896xbf16>, vector<8x896xf32> -> vector<8x896xf32>
    %c0_7 = arith.constant 0 : index
    %c0_8 = arith.constant 0 : index
    %8 = vector.load %arg5[%c0_7, %c0_8] : memref<1x896xf32, #tpu.memory_space<vmem>>, vector<1x896xf32>
    %9 = vector.broadcast %8 : vector<1x896xf32> to vector<8x896xf32>
    %10 = arith.addf %7, %9 : vector<8x896xf32>
    %11 = vector.extract_strided_slice %10 {offsets = [0, 0], sizes = [8, 512], strides = [1, 1]} : vector<8x896xf32> to vector<8x512xf32>
    %cst_9 = arith.constant 0.000000e+00 : f32
    %12 = vector.broadcast %cst_9 : f32 to vector<8x512xf32>
    %13 = arith.maximumf %11, %12 : vector<8x512xf32>
    %14 = arith.truncf %13 : vector<8x512xf32> to vector<8x512xbf16>
    %c0_10 = arith.constant 0 : index
    %c0_11 = arith.constant 0 : index
    %15 = vector.load %arg6[%c0_10, %c0_11] : memref<512x384xbf16, #tpu.memory_space<vmem>>, vector<512x384xbf16>
    %cst_12 = arith.constant dense<0.000000e+00> : vector<8x384xf32>
    %16 = tpu.matmul %14, %15, %cst_12 {dimension_numbers = #tpu.dot_dimension_numbers<[1], [0], [0], [1], [0, 0, 1, 1], [], []>} : vector<8x512xbf16>, vector<512x384xbf16>, vector<8x384xf32> -> vector<8x384xf32>
    %17 = vector.extract_strided_slice %10 {offsets = [0, 512], sizes = [8, 384], strides = [1, 1]} : vector<8x896xf32> to vector<8x384xf32>
    %18 = arith.addf %16, %17 : vector<8x384xf32>
    %cst_13 = arith.constant dense<0.000000e+00> : vector<8xf32>
    %19 = vector.multi_reduction <add>, %18, %cst_13 [1] : vector<8x384xf32> to vector<8xf32>
    %20 = vector.shape_cast %19 : vector<8xf32> to vector<8x1xf32>
    %cst_14 = arith.constant 0.00366300368 : f32
    %21 = vector.broadcast %cst_14 : f32 to vector<8x1xf32>
    %22 = arith.mulf %20, %21 : vector<8x1xf32>
    %23 = vector.broadcast %22 : vector<8x1xf32> to vector<8x384xf32>
    %24 = arith.subf %18, %23 : vector<8x384xf32>
    %25 = arith.mulf %24, %24 : vector<8x384xf32>
    %cst_15 = arith.constant dense<0.000000e+00> : vector<8xf32>
    %26 = vector.multi_reduction <add>, %25, %cst_15 [1] : vector<8x384xf32> to vector<8xf32>
    %27 = vector.shape_cast %26 : vector<8xf32> to vector<8x1xf32>
    %28 = arith.mulf %22, %22 : vector<8x1xf32>
    %cst_16 = arith.constant 1.110000e+02 : f32
    %29 = vector.broadcast %cst_16 : f32 to vector<8x1xf32>
    %30 = arith.mulf %29, %28 : vector<8x1xf32>
    %31 = arith.subf %27, %30 : vector<8x1xf32>
    %cst_17 = arith.constant 0.00366300368 : f32
    %32 = vector.broadcast %cst_17 : f32 to vector<8x1xf32>
    %33 = arith.mulf %31, %32 : vector<8x1xf32>
    %cst_18 = arith.constant 9.99999974E-6 : f32
    %34 = vector.broadcast %cst_18 : f32 to vector<8x1xf32>
    %35 = arith.addf %33, %34 : vector<8x1xf32>
    %36 = math.rsqrt %35 : vector<8x1xf32>
    %37 = vector.broadcast %36 : vector<8x1xf32> to vector<8x384xf32>
    %38 = arith.mulf %24, %37 : vector<8x384xf32>
    %c0_19 = arith.constant 0 : index
    %c0_20 = arith.constant 0 : index
    %39 = vector.load %arg7[%c0_19, %c0_20] : memref<1x384xf32, #tpu.memory_space<vmem>>, vector<1x384xf32>
    %40 = vector.broadcast %39 : vector<1x384xf32> to vector<8x384xf32>
    %41 = arith.mulf %38, %40 : vector<8x384xf32>
    %c0_21 = arith.constant 0 : index
    %c0_22 = arith.constant 0 : index
    %42 = vector.load %arg8[%c0_21, %c0_22] : memref<1x384xf32, #tpu.memory_space<vmem>>, vector<1x384xf32>
    %43 = vector.broadcast %42 : vector<1x384xf32> to vector<8x384xf32>
    %44 = arith.addf %41, %43 : vector<8x384xf32>
    %c0_23 = arith.constant 0 : index
    %c0_24 = arith.constant 0 : index
    %45 = vector.load %arg9[%c0_23, %c0_24] : memref<8x384xf32, #tpu.memory_space<vmem>>, vector<8x384xf32>
    tpu.vector_store %arg9[%c0_23, %c0_24], %44 {strides = array<i32>} : memref<8x384xf32, #tpu.memory_space<vmem>>, vector<8x384xf32>,
    return
  }
  func.func @transform_0(%arg0: i32) -> (i32, i32) {
    %c0_i32 = arith.constant 0 : i32
    %c0_i32_0 = arith.constant 0 : i32
    return %arg0, %c0_i32 : i32, i32
  }
  func.func @transform_1(%arg0: i32) -> (i32, i32) {
    %c0_i32 = arith.constant 0 : i32
    %c0_i32_0 = arith.constant 0 : i32
    return %arg0, %c0_i32 : i32, i32
  }
  func.func @transform_2(%arg0: i32) -> (i32, i32) {
    %c0_i32 = arith.constant 0 : i32
    %c0_i32_0 = arith.constant 0 : i32
    return %arg0, %c0_i32 : i32, i32
  }
  func.func @transform_3(%arg0: i32) -> (i32, i32) {
    %c0_i32 = arith.constant 0 : i32
    %c0_i32_0 = arith.constant 0 : i32
    %c0_i32_1 = arith.constant 0 : i32
    return %c0_i32, %c0_i32_0 : i32, i32
  }
  func.func @transform_4(%arg0: i32) -> (i32, i32) {
    %c0_i32 = arith.constant 0 : i32
    %c0_i32_0 = arith.constant 0 : i32
    %c0_i32_1 = arith.constant 0 : i32
    return %c0_i32, %c0_i32_0 : i32, i32
  }
  func.func @transform_5(%arg0: i32) -> (i32, i32) {
    %c0_i32 = arith.constant 0 : i32
    %c0_i32_0 = arith.constant 0 : i32
    %c0_i32_1 = arith.constant 0 : i32
    return %c0_i32, %c0_i32_0 : i32, i32
  }
  func.func @transform_6(%arg0: i32) -> (i32, i32) {
    %c0_i32 = arith.constant 0 : i32
    %c0_i32_0 = arith.constant 0 : i32
    %c0_i32_1 = arith.constant 0 : i32
    return %c0_i32, %c0_i32_0 : i32, i32
  }
  func.func @transform_7(%arg0: i32) -> (i32, i32) {
    %c0_i32 = arith.constant 0 : i32
    %c0_i32_0 = arith.constant 0 : i32
    %c0_i32_1 = arith.constant 0 : i32
    return %c0_i32, %c0_i32_0 : i32, i32
  }
  func.func @transform_8(%arg0: i32) -> (i32, i32) {
    %c0_i32 = arith.constant 0 : i32
    %c0_i32_0 = arith.constant 0 : i32
    return %arg0, %c0_i32 : i32, i32
  }
}

</mosaic_0001>

<llo_original>
// kernel: tpu_custom_call.1
$region0: #{tpu_custom_call.1}
  #allocation0 [shape = 'u32[]', space=smem, size = 0x4, offset = 0x4, fixed_abs, tag = 'smem constant byte address 0x4 - core index']
  #allocation1 [shape = 'u32[72,128]{1,0:T(1,128)}', space=vmem, size = 0x9000, scoped, tag = 'internal scratch']
  %s0 = inlined_call_operand.hbm [shape: f32[8,1280], index: 0, kind: input, shape index: {}]
  %s1 = inlined_call_operand.hbm [shape: f32[8,1280], index: 1, kind: input, shape index: {}]
  %s2 = inlined_call_operand.hbm [shape: f32[8,1280], index: 2, kind: input, shape index: {}]
  %s3 = inlined_call_operand.hbm [shape: bf16[1280,896], index: 3, kind: input, shape index: {}]
  %s4 = inlined_call_operand.hbm [shape: f32[1,896], index: 4, kind: input, shape index: {}]
  %s5 = inlined_call_operand.hbm [shape: bf16[512,384], index: 5, kind: input, shape index: {}]
  %s6 = inlined_call_operand.hbm [shape: f32[1,384], index: 6, kind: input, shape index: {}]
  %s7 = inlined_call_operand.hbm [shape: f32[1,384], index: 7, kind: input, shape index: {}]
  %s8 = inlined_call_operand.hbm [shape: f32[8,384], index: 8, kind: output, shape index: {}]
  %s9 = sld [smem:[#allocation0]]
  $region74: #{tpu_custom_call.1} parent=0
    _
  %s11 = ssub.s32 1, %s9
  %s12 = scalar_select 0, %s11, %s9
  $region1: #{tpu_custom_call.1} parent=0
    #allocation2 [shape = 'u8[40960]{0}', space=vmem, size = 0xa000, scoped, tag = 'input window, operand 0, single buffered']
    #allocation3 [shape = 's32[1]{0}', space=sflag, size = 0x4, scoped, tag = 'scoped memory for tpu_custom_call.1']
    #allocation4 [shape = 's32[1]{0}', space=sflag, size = 0x4, scoped, tag = 'scoped memory for tpu_custom_call.1']
    #allocation5 [shape = 'u8[40960]{0}', space=vmem, size = 0xa000, scoped, tag = 'input window, operand 1, single buffered']
    #allocation6 [shape = 's32[1]{0}', space=sflag, size = 0x4, scoped, tag = 'scoped memory for tpu_custom_call.1']
    #allocation7 [shape = 'u8[40960]{0}', space=vmem, size = 0xa000, scoped, tag = 'input window, operand 2, single buffered']
    #allocation8 [shape = 'u8[2293760]{0}', space=vmem, size = 0x230000, scoped, tag = 'input window, operand 3, single buffered']
    #allocation9 [shape = 's32[1]{0}', space=sflag, size = 0x4, scoped, tag = 'scoped memory for tpu_custom_call.1']
    #allocation10 [shape = 'u8[3584]{0}', space=vmem, size = 0x1000, scoped, tag = 'input window, operand 4, single buffered']
    #allocation11 [shape = 'u8[393216]{0}', space=vmem, size = 0x60000, scoped, tag = 'input window, operand 5, single buffered']
    #allocation12 [shape = 's32[1]{0}', space=sflag, size = 0x4, scoped, tag = 'scoped memory for tpu_custom_call.1']
    #allocation13 [shape = 'u8[1536]{0}', space=vmem, size = 0x800, scoped, tag = 'input window, operand 6, single buffered']
    #allocation14 [shape = 'u8[1536]{0}', space=vmem, size = 0x800, scoped, tag = 'input window, operand 7, single buffered']
    #allocation15 [shape = 's32[1]{0}', space=sflag, size = 0x4, scoped, tag = 'scoped memory for tpu_custom_call.1']
    #allocation16 [shape = 'u8[12288]{0}', space=vmem, size = 0x3000, scoped, tag = 'output window, operand 0, single buffered']
    %13 = vsyncpa [#allocation3], 0
    %14 = vsyncpa [#allocation6], 0
    %15 = vsyncpa [#allocation9], 0
    %16 = vsyncpa [#allocation12], 0
    %17 = vsyncpa [#allocation15], 0
    %18 = vsyncpa [#allocation4], 0
    // Predicated region
    $region2: #{tpu_custom_call.1} parent=1 // pred_check
      _
    $region3: #{tpu_custom_call.1} parent=1 // pred_check_branch
      %20 = sbr.rel (0) target = $region5
    $region4: #{tpu_custom_call.1} parent=1 // pred_region
      %22 = vsyncadd [#allocation3], 0
      %s24 = sshll.u32 %s0, 4
      %s25 = int_to_ptr.hbm [resolvable:$true] %s24
      %s26 = sshll.u32 [#allocation2], 4
      %s27 = int_to_ptr.vmem [resolvable:$true] %s26
      %29 = dma.hbm_to_vmem [thread:$0]  %s25, 1280, %s27, [#allocation3]
    $region5: #{tpu_custom_call.1} parent=1 // pred_fallthru
      _
    // Predicated region
    $region6: #{tpu_custom_call.1} parent=1 // pred_check
      _
    $region7: #{tpu_custom_call.1} parent=1 // pred_check_branch
      %31 = sbr.rel (0) target = $region9
    $region8: #{tpu_custom_call.1} parent=1 // pred_region
      %33 = vsyncadd [#allocation6], 0
      %s35 = sshll.u32 %s1, 4
      %s36 = int_to_ptr.hbm [resolvable:$true] %s35
      %s37 = sshll.u32 [#allocation5], 4
      %s38 = int_to_ptr.vmem [resolvable:$true] %s37
      %40 = dma.hbm_to_vmem [thread:$0]  %s36, 1280, %s38, [#allocation6]
    $region9: #{tpu_custom_call.1} parent=1 // pred_fallthru
      _
    // Predicated region
    $region10: #{tpu_custom_call.1} parent=1 // pred_check
      _
    $region11: #{tpu_custom_call.1} parent=1 // pred_check_branch
      %42 = sbr.rel (0) target = $region13
    $region12: #{tpu_custom_call.1} parent=1 // pred_region
      %44 = vsyncadd [#allocation6], 0
      %s46 = sshll.u32 %s2, 4
      %s47 = int_to_ptr.hbm [resolvable:$true] %s46
      %s48 = sshll.u32 [#allocation7], 4
      %s49 = int_to_ptr.vmem [resolvable:$true] %s48
      %51 = dma.hbm_to_vmem [thread:$0]  %s47, 1280, %s49, [#allocation6]
    $region13: #{tpu_custom_call.1} parent=1 // pred_fallthru
      _
    // Predicated region
    $region14: #{tpu_custom_call.1} parent=1 // pred_check
      _
    $region15: #{tpu_custom_call.1} parent=1 // pred_check_branch
      %53 = sbr.rel (0) target = $region17
    $region16: #{tpu_custom_call.1} parent=1 // pred_region
      %55 = vsyncadd [#allocation9], 0
      %s56 = sshll.u32 %s3, 4
      %s57 = int_to_ptr.hbm [resolvable:$true] %s56
      %s58 = sshll.u32 [#allocation8], 4
      %s59 = int_to_ptr.vmem [resolvable:$true] %s58
      %64 = dma.hbm_to_vmem [thread:$0]  %s57, 71680, %s59, [#allocation9], 448, 448, 28
    $region17: #{tpu_custom_call.1} parent=1 // pred_fallthru
      _
    // Predicated region
    $region18: #{tpu_custom_call.1} parent=1 // pred_check
      _
    $region19: #{tpu_custom_call.1} parent=1 // pred_check_branch
      %66 = sbr.rel (0) target = $region21
    $region20: #{tpu_custom_call.1} parent=1 // pred_region
      %68 = vsyncadd [#allocation9], 0
      %s70 = sshll.u32 %s4, 4
      %s71 = int_to_ptr.hbm [resolvable:$true] %s70
      %s72 = sshll.u32 [#allocation10], 4
      %s73 = int_to_ptr.vmem [resolvable:$true] %s72
      %75 = dma.hbm_to_vmem [thread:$0]  %s71, 112, %s73, [#allocation9]
    $region21: #{tpu_custom_call.1} parent=1 // pred_fallthru
      _
    // Predicated region
    $region22: #{tpu_custom_call.1} parent=1 // pred_check
      _
    $region23: #{tpu_custom_call.1} parent=1 // pred_check_branch
      %77 = sbr.rel (0) target = $region25
    $region24: #{tpu_custom_call.1} parent=1 // pred_region
      %79 = vsyncadd [#allocation12], 0
      %s80 = sshll.u32 %s5, 4
      %s81 = int_to_ptr.hbm [resolvable:$true] %s80
      %s82 = sshll.u32 [#allocation11], 4
      %s83 = int_to_ptr.vmem [resolvable:$true] %s82
      %88 = dma.hbm_to_vmem [thread:$0]  %s81, 12288, %s83, [#allocation12], 192, 192, 12
    $region25: #{tpu_custom_call.1} parent=1 // pred_fallthru
      _
    // Predicated region
    $region26: #{tpu_custom_call.1} parent=1 // pred_check
      _
    $region27: #{tpu_custom_call.1} parent=1 // pred_check_branch
      %90 = sbr.rel (0) target = $region29
    $region28: #{tpu_custom_call.1} parent=1 // pred_region
      %92 = vsyncadd [#allocation12], 0
      %s94 = sshll.u32 %s6, 4
      %s95 = int_to_ptr.hbm [resolvable:$true] %s94
      %s96 = sshll.u32 [#allocation13], 4
      %s97 = int_to_ptr.vmem [resolvable:$true] %s96
      %99 = dma.hbm_to_vmem [thread:$0]  %s95, 48, %s97, [#allocation12]
    $region29: #{tpu_custom_call.1} parent=1 // pred_fallthru
      _
    // Predicated region
    $region30: #{tpu_custom_call.1} parent=1 // pred_check
      _
    $region31: #{tpu_custom_call.1} parent=1 // pred_check_branch
      %101 = sbr.rel (0) target = $region33
    $region32: #{tpu_custom_call.1} parent=1 // pred_region
      %103 = vsyncadd [#allocation15], 0
      %s105 = sshll.u32 %s7, 4
      %s106 = int_to_ptr.hbm [resolvable:$true] %s105
      %s107 = sshll.u32 [#allocation14], 4
      %s108 = int_to_ptr.vmem [resolvable:$true] %s107
      %110 = dma.hbm_to_vmem [thread:$0]  %s106, 48, %s108, [#allocation15]
    $region33: #{tpu_custom_call.1} parent=1 // pred_fallthru
      _
    // Predicated region
    $region34: #{tpu_custom_call.1} parent=1 // pred_check
      _
    $region35: #{tpu_custom_call.1} parent=1 // pred_check_branch
      %112 = sbr.rel (0) target = $region37
    $region36: #{tpu_custom_call.1} parent=1 // pred_region
      %114 = dma.done [#allocation3], 1280
    $region37: #{tpu_custom_call.1} parent=1 // pred_fallthru
      _
    // Predicated region
    $region38: #{tpu_custom_call.1} parent=1 // pred_check
      _
    $region39: #{tpu_custom_call.1} parent=1 // pred_check_branch
      %116 = sbr.rel (0) target = $region41
    $region40: #{tpu_custom_call.1} parent=1 // pred_region
      %118 = dma.done [#allocation6], 1280
    $region41: #{tpu_custom_call.1} parent=1 // pred_fallthru
      _
    // Predicated region
    $region42: #{tpu_custom_call.1} parent=1 // pred_check
      _
    $region43: #{tpu_custom_call.1} parent=1 // pred_check_branch
      %120 = sbr.rel (0) target = $region45
    $region44: #{tpu_custom_call.1} parent=1 // pred_region
      %122 = dma.done [#allocation6], 1280
    $region45: #{tpu_custom_call.1} parent=1 // pred_fallthru
      _
    // Predicated region
    $region46: #{tpu_custom_call.1} parent=1 // pred_check
      _
    $region47: #{tpu_custom_call.1} parent=1 // pred_check_branch
      %124 = sbr.rel (0) target = $region49
    $region48: #{tpu_custom_call.1} parent=1 // pred_region
      %126 = dma.done [#allocation9], 71680
    $region49: #{tpu_custom_call.1} parent=1 // pred_fallthru
      _
    // Predicated region
    $region50: #{tpu_custom_call.1} parent=1 // pred_check
      _
    $region51: #{tpu_custom_call.1} parent=1 // pred_check_branch
      %128 = sbr.rel (0) target = $region53
    $region52: #{tpu_custom_call.1} parent=1 // pred_region
      %130 = dma.done [#allocation9], 112
    $region53: #{tpu_custom_call.1} parent=1 // pred_fallthru
      _
    // Predicated region
    $region54: #{tpu_custom_call.1} parent=1 // pred_check
      _
    $region55: #{tpu_custom_call.1} parent=1 // pred_check_branch
      %132 = sbr.rel (0) target = $region57
    $region56: #{tpu_custom_call.1} parent=1 // pred_region
      %134 = dma.done [#allocation12], 12288
    $region57: #{tpu_custom_call.1} parent=1 // pred_fallthru
      _
    // Predicated region
    $region58: #{tpu_custom_call.1} parent=1 // pred_check
      _
    $region59: #{tpu_custom_call.1} parent=1 // pred_check_branch
      %136 = sbr.rel (0) target = $region61
    $region60: #{tpu_custom_call.1} parent=1 // pred_region
      %138 = dma.done [#allocation12], 48
    $region61: #{tpu_custom_call.1} parent=1 // pred_fallthru
      _
    // Predicated region
    $region62: #{tpu_custom_call.1} parent=1 // pred_check
      _
    $region63: #{tpu_custom_call.1} parent=1 // pred_check_branch
      %140 = sbr.rel (0) target = $region65
    $region64: #{tpu_custom_call.1} parent=1 // pred_region
      %142 = dma.done [#allocation15], 48
    $region65: #{tpu_custom_call.1} parent=1 // pred_fallthru
      _
    %v143 = vld [vmem:[#allocation2] sm:$0xff]
    %v144 = vld [vmem:[#allocation2 + $0x8] sm:$0xff]
    %v145 = vld [vmem:[#allocation2 + $0x10] sm:$0xff]
    %v146 = vld [vmem:[#allocation2 + $0x18] sm:$0xff]
    %v147 = vld [vmem:[#allocation2 + $0x20] sm:$0xff]
    %v148 = vld [vmem:[#allocation2 + $0x28] sm:$0xff]
    %v149 = vld [vmem:[#allocation2 + $0x30] sm:$0xff]
    %v150 = vld [vmem:[#allocation2 + $0x38] sm:$0xff]
    %v151 = vld [vmem:[#allocation2 + $0x40] sm:$0xff]
    %v152 = vld [vmem:[#allocation2 + $0x48] sm:$0xff]
    %v153 = vld [vmem:[#allocation5] sm:$0xff]
    %v154 = vld [vmem:[#allocation5 + $0x8] sm:$0xff]
    %v155 = vld [vmem:[#allocation5 + $0x10] sm:$0xff]
    %v156 = vld [vmem:[#allocation5 + $0x18] sm:$0xff]
    %v157 = vld [vmem:[#allocation5 + $0x20] sm:$0xff]
    %v158 = vld [vmem:[#allocation5 + $0x28] sm:$0xff]
    %v159 = vld [vmem:[#allocation5 + $0x30] sm:$0xff]
    %v160 = vld [vmem:[#allocation5 + $0x38] sm:$0xff]
    %v161 = vld [vmem:[#allocation5 + $0x40] sm:$0xff]
    %v162 = vld [vmem:[#allocation5 + $0x48] sm:$0xff]
    %v163 = vadd.f32 %v143, %v153
    %v164 = vadd.f32 %v144, %v154
    %v165 = vadd.f32 %v145, %v155
    %v166 = vadd.f32 %v146, %v156
    %v167 = vadd.f32 %v147, %v157
    %v168 = vadd.f32 %v148, %v158
    %v169 = vadd.f32 %v149, %v159
    %v170 = vadd.f32 %v150, %v160
    %v171 = vadd.f32 %v151, %v161
    %v172 = vadd.f32 %v152, %v162
    %v173 = vld [vmem:[#allocation7] sm:$0xff]
    %v174 = vld [vmem:[#allocation7 + $0x8] sm:$0xff]
    %v175 = vld [vmem:[#allocation7 + $0x10] sm:$0xff]
    %v176 = vld [vmem:[#allocation7 + $0x18] sm:$0xff]
    %v177 = vld [vmem:[#allocation7 + $0x20] sm:$0xff]
    %v178 = vld [vmem:[#allocation7 + $0x28] sm:$0xff]
    %v179 = vld [vmem:[#allocation7 + $0x30] sm:$0xff]
    %v180 = vld [vmem:[#allocation7 + $0x38] sm:$0xff]
    %v181 = vld [vmem:[#allocation7 + $0x40] sm:$0xff]
    %v182 = vld [vmem:[#allocation7 + $0x48] sm:$0xff]
    %v183 = vadd.f32 %v163, %v173
    %v184 = vadd.f32 %v164, %v174
    %v185 = vadd.f32 %v165, %v175
    %v186 = vadd.f32 %v166, %v176
    %v187 = vadd.f32 %v167, %v177
    %v188 = vadd.f32 %v168, %v178
    %v189 = vadd.f32 %v169, %v179
    %v190 = vadd.f32 %v170, %v180
    %v191 = vadd.f32 %v171, %v181
    %v192 = vadd.f32 %v172, %v182
    %v193 = vpack.c.bf16 %v183, %v183
    %v194 = vpack.c.bf16 %v184, %v184
    %v195 = vpack.c.bf16 %v185, %v185
    %v196 = vpack.c.bf16 %v186, %v186
    %v197 = vpack.c.bf16 %v187, %v187
    %v198 = vpack.c.bf16 %v188, %v188
    %v199 = vpack.c.bf16 %v189, %v189
    %v200 = vpack.c.bf16 %v190, %v190
    %v201 = vpack.c.bf16 %v191, %v191
    %v202 = vpack.c.bf16 %v192, %v192
    %v203 = vld [vmem:[#allocation8] sm:$0xff]
    %v204 = vld [vmem:[#allocation8 + $0x8] sm:$0xff]
    %v205 = vld [vmem:[#allocation8 + $0x10] sm:$0xff]
    %v206 = vld [vmem:[#allocation8 + $0x18] sm:$0xf]
    %v207 = vld [vmem:[#allocation8 + $0x1c] sm:$0xff]
    %v208 = vld [vmem:[#allocation8 + $0x24] sm:$0xff]
    %v209 = vld [vmem:[#allocation8 + $0x2c] sm:$0xff]
    %v210 = vld [vmem:[#allocation8 + $0x34] sm:$0xf]
    %v211 = vld [vmem:[#allocation8 + $0x38] sm:$0xff]
    %v212 = vld [vmem:[#allocation8 + $0x40] sm:$0xff]
    %v213 = vld [vmem:[#allocation8 + $0x48] sm:$0xff]
    %v214 = vld [vmem:[#allocation8 + $0x50] sm:$0xf]
    %v215 = vld [vmem:[#allocation8 + $0x54] sm:$0xff]
    %v216 = vld [vmem:[#allocation8 + $0x5c] sm:$0xff]
    %v217 = vld [vmem:[#allocation8 + $0x64] sm:$0xff]
    %v218 = vld [vmem:[#allocation8 + $0x6c] sm:$0xf]
    %v219 = vld [vmem:[#allocation8 + $0x70] sm:$0xff]
    %v220 = vld [vmem:[#allocation8 + $0x78] sm:$0xff]
    %v221 = vld [vmem:[#allocation8 + $0x80] sm:$0xff]
    %v222 = vld [vmem:[#allocation8 + $0x88] sm:$0xf]
    %v223 = vld [vmem:[#allocation8 + $0x8c] sm:$0xff]
    %v224 = vld [vmem:[#allocation8 + $0x94] sm:$0xff]
    %v225 = vld [vmem:[#allocation8 + $0x9c] sm:$0xff]
    %v226 = vld [vmem:[#allocation8 + $0xa4] sm:$0xf]
    %v227 = vld [vmem:[#allocation8 + $0xa8] sm:$0xff]
    %v228 = vld [vmem:[#allocation8 + $0xb0] sm:$0xff]
    %v229 = vld [vmem:[#allocation8 + $0xb8] sm:$0xff]
    %v230 = vld [vmem:[#allocation8 + $0xc0] sm:$0xf]
    %v231 = vld [vmem:[#allocation8 + $0xc4] sm:$0xff]
    %v232 = vld [vmem:[#allocation8 + $0xcc] sm:$0xff]
    %v233 = vld [vmem:[#allocation8 + $0xd4] sm:$0xff]
    %v234 = vld [vmem:[#allocation8 + $0xdc] sm:$0xf]
    %v235 = vld [vmem:[#allocation8 + $0xe0] sm:$0xff]
    %v236 = vld [vmem:[#allocation8 + $0xe8] sm:$0xff]
    %v237 = vld [vmem:[#allocation8 + $0xf0] sm:$0xff]
    %v238 = vld [vmem:[#allocation8 + $0xf8] sm:$0xf]
    %v239 = vld [vmem:[#allocation8 + $0xfc] sm:$0xff]
    %v240 = vld [vmem:[#allocation8 + $0x104] sm:$0xff]
    %v241 = vld [vmem:[#allocation8 + $0x10c] sm:$0xff]
    %v242 = vld [vmem:[#allocation8 + $0x114] sm:$0xf]
    %v243 = vld [vmem:[#allocation8 + $0x118] sm:$0xff]
    %v244 = vld [vmem:[#allocation8 + $0x120] sm:$0xff]
    %v245 = vld [vmem:[#allocation8 + $0x128] sm:$0xff]
    %v246 = vld [vmem:[#allocation8 + $0x130] sm:$0xf]
    %v247 = vld [vmem:[#allocation8 + $0x134] sm:$0xff]
    %v248 = vld [vmem:[#allocation8 + $0x13c] sm:$0xff]
    %v249 = vld [vmem:[#allocation8 + $0x144] sm:$0xff]
    %v250 = vld [vmem:[#allocation8 + $0x14c] sm:$0xf]
    %v251 = vld [vmem:[#allocation8 + $0x150] sm:$0xff]
    %v252 = vld [vmem:[#allocation8 + $0x158] sm:$0xff]
    %v253 = vld [vmem:[#allocation8 + $0x160] sm:$0xff]
    %v254 = vld [vmem:[#allocation8 + $0x168] sm:$0xf]
    %v255 = vld [vmem:[#allocation8 + $0x16c] sm:$0xff]
    %v256 = vld [vmem:[#allocation8 + $0x174] sm:$0xff]
    %v257 = vld [vmem:[#allocation8 + $0x17c] sm:$0xff]
    %v258 = vld [vmem:[#allocation8 + $0x184] sm:$0xf]
    %v259 = vld [vmem:[#allocation8 + $0x188] sm:$0xff]
    %v260 = vld [vmem:[#allocation8 + $0x190] sm:$0xff]
    %v261 = vld [vmem:[#allocation8 + $0x198] sm:$0xff]
    %v262 = vld [vmem:[#allocation8 + $0x1a0] sm:$0xf]
    %v263 = vld [vmem:[#allocation8 + $0x1a4] sm:$0xff]
    %v264 = vld [vmem:[#allocation8 + $0x1ac] sm:$0xff]
    %v265 = vld [vmem:[#allocation8 + $0x1b4] sm:$0xff]
    %v266 = vld [vmem:[#allocation8 + $0x1bc] sm:$0xf]
    %v267 = vld [vmem:[#allocation8 + $0x1c0] sm:$0xff]
    %v268 = vld [vmem:[#allocation8 + $0x1c8] sm:$0xff]
    %v269 = vld [vmem:[#allocation8 + $0x1d0] sm:$0xff]
    %v270 = vld [vmem:[#allocation8 + $0x1d8] sm:$0xf]
    %v271 = vld [vmem:[#allocation8 + $0x1dc] sm:$0xff]
    %v272 = vld [vmem:[#allocation8 + $0x1e4] sm:$0xff]
    %v273 = vld [vmem:[#allocation8 + $0x1ec] sm:$0xff]
    %v274 = vld [vmem:[#allocation8 + $0x1f4] sm:$0xf]
    %v275 = vld [vmem:[#allocation8 + $0x1f8] sm:$0xff]
    %v276 = vld [vmem:[#allocation8 + $0x200] sm:$0xff]
    %v277 = vld [vmem:[#allocation8 + $0x208] sm:$0xff]
    %v278 = vld [vmem:[#allocation8 + $0x210] sm:$0xf]
    %v279 = vld [vmem:[#allocation8 + $0x214] sm:$0xff]
    %v280 = vld [vmem:[#allocation8 + $0x21c] sm:$0xff]
    %v281 = vld [vmem:[#allocation8 + $0x224] sm:$0xff]
    %v282 = vld [vmem:[#allocation8 + $0x22c] sm:$0xf]
    %v283 = vld [vmem:[#allocation8 + $0x230] sm:$0xff]
    %v284 = vld [vmem:[#allocation8 + $0x238] sm:$0xff]
    %v285 = vld [vmem:[#allocation8 + $0x240] sm:$0xff]
    %v286 = vld [vmem:[#allocation8 + $0x248] sm:$0xf]
    %v287 = vld [vmem:[#allocation8 + $0x24c] sm:$0xff]
    %v288 = vld [vmem:[#allocation8 + $0x254] sm:$0xff]
    %v289 = vld [vmem:[#allocation8 + $0x25c] sm:$0xff]
    %v290 = vld [vmem:[#allocation8 + $0x264] sm:$0xf]
    %v291 = vld [vmem:[#allocation8 + $0x268] sm:$0xff]
    %v292 = vld [vmem:[#allocation8 + $0x270] sm:$0xff]
    %v293 = vld [vmem:[#allocation8 + $0x278] sm:$0xff]
    %v294 = vld [vmem:[#allocation8 + $0x280] sm:$0xf]
    %v295 = vld [vmem:[#allocation8 + $0x284] sm:$0xff]
    %v296 = vld [vmem:[#allocation8 + $0x28c] sm:$0xff]
    %v297 = vld [vmem:[#allocation8 + $0x294] sm:$0xff]
    %v298 = vld [vmem:[#allocation8 + $0x29c] sm:$0xf]
    %v299 = vld [vmem:[#allocation8 + $0x2a0] sm:$0xff]
    %v300 = vld [vmem:[#allocation8 + $0x2a8] sm:$0xff]
    %v301 = vld [vmem:[#allocation8 + $0x2b0] sm:$0xff]
    %v302 = vld [vmem:[#allocation8 + $0x2b8] sm:$0xf]
    %v303 = vld [vmem:[#allocation8 + $0x2bc] sm:$0xff]
    %v304 = vld [vmem:[#allocation8 + $0x2c4] sm:$0xff]
    %v305 = vld [vmem:[#allocation8 + $0x2cc] sm:$0xff]
    %v306 = vld [vmem:[#allocation8 + $0x2d4] sm:$0xf]
    %v307 = vld [vmem:[#allocation8 + $0x2d8] sm:$0xff]
    %v308 = vld [vmem:[#allocation8 + $0x2e0] sm:$0xff]
    %v309 = vld [vmem:[#allocation8 + $0x2e8] sm:$0xff]
    %v310 = vld [vmem:[#allocation8 + $0x2f0] sm:$0xf]
    %v311 = vld [vmem:[#allocation8 + $0x2f4] sm:$0xff]
    %v312 = vld [vmem:[#allocation8 + $0x2fc] sm:$0xff]
    %v313 = vld [vmem:[#allocation8 + $0x304] sm:$0xff]
    %v314 = vld [vmem:[#allocation8 + $0x30c] sm:$0xf]
    %v315 = vld [vmem:[#allocation8 + $0x310] sm:$0xff]
    %v316 = vld [vmem:[#allocation8 + $0x318] sm:$0xff]
    %v317 = vld [vmem:[#allocation8 + $0x320] sm:$0xff]
    %v318 = vld [vmem:[#allocation8 + $0x328] sm:$0xf]
    %v319 = vld [vmem:[#allocation8 + $0x32c] sm:$0xff]
    %v320 = vld [vmem:[#allocation8 + $0x334] sm:$0xff]
    %v321 = vld [vmem:[#allocation8 + $0x33c] sm:$0xff]
    %v322 = vld [vmem:[#allocation8 + $0x344] sm:$0xf]
    %v323 = vld [vmem:[#allocation8 + $0x348] sm:$0xff]
    %v324 = vld [vmem:[#allocation8 + $0x350] sm:$0xff]
    %v325 = vld [vmem:[#allocation8 + $0x358] sm:$0xff]
    %v326 = vld [vmem:[#allocation8 + $0x360] sm:$0xf]
    %v327 = vld [vmem:[#allocation8 + $0x364] sm:$0xff]
    %v328 = vld [vmem:[#allocation8 + $0x36c] sm:$0xff]
    %v329 = vld [vmem:[#allocation8 + $0x374] sm:$0xff]
    %v330 = vld [vmem:[#allocation8 + $0x37c] sm:$0xf]
    %v331 = vld [vmem:[#allocation8 + $0x380] sm:$0xff]
    %v332 = vld [vmem:[#allocation8 + $0x388] sm:$0xff]
    %v333 = vld [vmem:[#allocation8 + $0x390] sm:$0xff]
    %v334 = vld [vmem:[#allocation8 + $0x398] sm:$0xf]
    %v335 = vld [vmem:[#allocation8 + $0x39c] sm:$0xff]
    %v336 = vld [vmem:[#allocation8 + $0x3a4] sm:$0xff]
    %v337 = vld [vmem:[#allocation8 + $0x3ac] sm:$0xff]
    %v338 = vld [vmem:[#allocation8 + $0x3b4] sm:$0xf]
    %v339 = vld [vmem:[#allocation8 + $0x3b8] sm:$0xff]
    %v340 = vld [vmem:[#allocation8 + $0x3c0] sm:$0xff]
    %v341 = vld [vmem:[#allocation8 + $0x3c8] sm:$0xff]
    %v342 = vld [vmem:[#allocation8 + $0x3d0] sm:$0xf]
    %v343 = vld [vmem:[#allocation8 + $0x3d4] sm:$0xff]
    %v344 = vld [vmem:[#allocation8 + $0x3dc] sm:$0xff]
    %v345 = vld [vmem:[#allocation8 + $0x3e4] sm:$0xff]
    %v346 = vld [vmem:[#allocation8 + $0x3ec] sm:$0xf]
    %v347 = vld [vmem:[#allocation8 + $0x3f0] sm:$0xff]
    %v348 = vld [vmem:[#allocation8 + $0x3f8] sm:$0xff]
    %v349 = vld [vmem:[#allocation8 + $0x400] sm:$0xff]
    %v350 = vld [vmem:[#allocation8 + $0x408] sm:$0xf]
    %v351 = vld [vmem:[#allocation8 + $0x40c] sm:$0xff]
    %v352 = vld [vmem:[#allocation8 + $0x414] sm:$0xff]
    %v353 = vld [vmem:[#allocation8 + $0x41c] sm:$0xff]
    %v354 = vld [vmem:[#allocation8 + $0x424] sm:$0xf]
    %v355 = vld [vmem:[#allocation8 + $0x428] sm:$0xff]
    %v356 = vld [vmem:[#allocation8 + $0x430] sm:$0xff]
    %v357 = vld [vmem:[#allocation8 + $0x438] sm:$0xff]
    %v358 = vld [vmem:[#allocation8 + $0x440] sm:$0xf]
    %v359 = vld [vmem:[#allocation8 + $0x444] sm:$0xff]
    %v360 = vld [vmem:[#allocation8 + $0x44c] sm:$0xff]
    %v361 = vld [vmem:[#allocation8 + $0x454] sm:$0xff]
    %v362 = vld [vmem:[#allocation8 + $0x45c] sm:$0xf]
    %v363 = vld [vmem:[#allocation8 + $0x460] sm:$0xff]
    %v364 = vld [vmem:[#allocation8 + $0x468] sm:$0xff]
    %v365 = vld [vmem:[#allocation8 + $0x470] sm:$0xff]
    %v366 = vld [vmem:[#allocation8 + $0x478] sm:$0xf]
    %v367 = vld [vmem:[#allocation8 + $0x47c] sm:$0xff]
    %v368 = vld [vmem:[#allocation8 + $0x484] sm:$0xff]
    %v369 = vld [vmem:[#allocation8 + $0x48c] sm:$0xff]
    %v370 = vld [vmem:[#allocation8 + $0x494] sm:$0xf]
    %v371 = vld [vmem:[#allocation8 + $0x498] sm:$0xff]
    %v372 = vld [vmem:[#allocation8 + $0x4a0] sm:$0xff]
    %v373 = vld [vmem:[#allocation8 + $0x4a8] sm:$0xff]
    %v374 = vld [vmem:[#allocation8 + $0x4b0] sm:$0xf]
    %v375 = vld [vmem:[#allocation8 + $0x4b4] sm:$0xff]
    %v376 = vld [vmem:[#allocation8 + $0x4bc] sm:$0xff]
    %v377 = vld [vmem:[#allocation8 + $0x4c4] sm:$0xff]
    %v378 = vld [vmem:[#allocation8 + $0x4cc] sm:$0xf]
    %v379 = vld [vmem:[#allocation8 + $0x4d0] sm:$0xff]
    %v380 = vld [vmem:[#allocation8 + $0x4d8] sm:$0xff]
    %v381 = vld [vmem:[#allocation8 + $0x4e0] sm:$0xff]
    %v382 = vld [vmem:[#allocation8 + $0x4e8] sm:$0xf]
    %v383 = vld [vmem:[#allocation8 + $0x4ec] sm:$0xff]
    %v384 = vld [vmem:[#allocation8 + $0x4f4] sm:$0xff]
    %v385 = vld [vmem:[#allocation8 + $0x4fc] sm:$0xff]
    %v386 = vld [vmem:[#allocation8 + $0x504] sm:$0xf]
    %v387 = vld [vmem:[#allocation8 + $0x508] sm:$0xff]
    %v388 = vld [vmem:[#allocation8 + $0x510] sm:$0xff]
    %v389 = vld [vmem:[#allocation8 + $0x518] sm:$0xff]
    %v390 = vld [vmem:[#allocation8 + $0x520] sm:$0xf]
    %v391 = vld [vmem:[#allocation8 + $0x524] sm:$0xff]
    %v392 = vld [vmem:[#allocation8 + $0x52c] sm:$0xff]
    %v393 = vld [vmem:[#allocation8 + $0x534] sm:$0xff]
    %v394 = vld [vmem:[#allocation8 + $0x53c] sm:$0xf]
    %v395 = vld [vmem:[#allocation8 + $0x540] sm:$0xff]
    %v396 = vld [vmem:[#allocation8 + $0x548] sm:$0xff]
    %v397 = vld [vmem:[#allocation8 + $0x550] sm:$0xff]
    %v398 = vld [vmem:[#allocation8 + $0x558] sm:$0xf]
    %v399 = vld [vmem:[#allocation8 + $0x55c] sm:$0xff]
    %v400 = vld [vmem:[#allocation8 + $0x564] sm:$0xff]
    %v401 = vld [vmem:[#allocation8 + $0x56c] sm:$0xff]
    %v402 = vld [vmem:[#allocation8 + $0x574] sm:$0xf]
    %v403 = vld [vmem:[#allocation8 + $0x578] sm:$0xff]
    %v404 = vld [vmem:[#allocation8 + $0x580] sm:$0xff]
    %v405 = vld [vmem:[#allocation8 + $0x588] sm:$0xff]
    %v406 = vld [vmem:[#allocation8 + $0x590] sm:$0xf]
    %v407 = vld [vmem:[#allocation8 + $0x594] sm:$0xff]
    %v408 = vld [vmem:[#allocation8 + $0x59c] sm:$0xff]
    %v409 = vld [vmem:[#allocation8 + $0x5a4] sm:$0xff]
    %v410 = vld [vmem:[#allocation8 + $0x5ac] sm:$0xf]
    %v411 = vld [vmem:[#allocation8 + $0x5b0] sm:$0xff]
    %v412 = vld [vmem:[#allocation8 + $0x5b8] sm:$0xff]
    %v413 = vld [vmem:[#allocation8 + $0x5c0] sm:$0xff]
    %v414 = vld [vmem:[#allocation8 + $0x5c8] sm:$0xf]
    %v415 = vld [vmem:[#allocation8 + $0x5cc] sm:$0xff]
    %v416 = vld [vmem:[#allocation8 + $0x5d4] sm:$0xff]
    %v417 = vld [vmem:[#allocation8 + $0x5dc] sm:$0xff]
    %v418 = vld [vmem:[#allocation8 + $0x5e4] sm:$0xf]
    %v419 = vld [vmem:[#allocation8 + $0x5e8] sm:$0xff]
    %v420 = vld [vmem:[#allocation8 + $0x5f0] sm:$0xff]
    %v421 = vld [vmem:[#allocation8 + $0x5f8] sm:$0xff]
    %v422 = vld [vmem:[#allocation8 + $0x600] sm:$0xf]
    %v423 = vld [vmem:[#allocation8 + $0x604] sm:$0xff]
    %v424 = vld [vmem:[#allocation8 + $0x60c] sm:$0xff]
    %v425 = vld [vmem:[#allocation8 + $0x614] sm:$0xff]
    %v426 = vld [vmem:[#allocation8 + $0x61c] sm:$0xf]
    %v427 = vld [vmem:[#allocation8 + $0x620] sm:$0xff]
    %v428 = vld [vmem:[#allocation8 + $0x628] sm:$0xff]
    %v429 = vld [vmem:[#allocation8 + $0x630] sm:$0xff]
    %v430 = vld [vmem:[#allocation8 + $0x638] sm:$0xf]
    %v431 = vld [vmem:[#allocation8 + $0x63c] sm:$0xff]
    %v432 = vld [vmem:[#allocation8 + $0x644] sm:$0xff]
    %v433 = vld [vmem:[#allocation8 + $0x64c] sm:$0xff]
    %v434 = vld [vmem:[#allocation8 + $0x654] sm:$0xf]
    %v435 = vld [vmem:[#allocation8 + $0x658] sm:$0xff]
    %v436 = vld [vmem:[#allocation8 + $0x660] sm:$0xff]
    %v437 = vld [vmem:[#allocation8 + $0x668] sm:$0xff]
    %v438 = vld [vmem:[#allocation8 + $0x670] sm:$0xf]
    %v439 = vld [vmem:[#allocation8 + $0x674] sm:$0xff]
    %v440 = vld [vmem:[#allocation8 + $0x67c] sm:$0xff]
    %v441 = vld [vmem:[#allocation8 + $0x684] sm:$0xff]
    %v442 = vld [vmem:[#allocation8 + $0x68c] sm:$0xf]
    %v443 = vld [vmem:[#allocation8 + $0x690] sm:$0xff]
    %v444 = vld [vmem:[#allocation8 + $0x698] sm:$0xff]
    %v445 = vld [vmem:[#allocation8 + $0x6a0] sm:$0xff]
    %v446 = vld [vmem:[#allocation8 + $0x6a8] sm:$0xf]
    %v447 = vld [vmem:[#allocation8 + $0x6ac] sm:$0xff]
    %v448 = vld [vmem:[#allocation8 + $0x6b4] sm:$0xff]
    %v449 = vld [vmem:[#allocation8 + $0x6bc] sm:$0xff]
    %v450 = vld [vmem:[#allocation8 + $0x6c4] sm:$0xf]
    %v451 = vld [vmem:[#allocation8 + $0x6c8] sm:$0xff]
    %v452 = vld [vmem:[#allocation8 + $0x6d0] sm:$0xff]
    %v453 = vld [vmem:[#allocation8 + $0x6d8] sm:$0xff]
    %v454 = vld [vmem:[#allocation8 + $0x6e0] sm:$0xf]
    %v455 = vld [vmem:[#allocation8 + $0x6e4] sm:$0xff]
    %v456 = vld [vmem:[#allocation8 + $0x6ec] sm:$0xff]
    %v457 = vld [vmem:[#allocation8 + $0x6f4] sm:$0xff]
    %v458 = vld [vmem:[#allocation8 + $0x6fc] sm:$0xf]
    %v459 = vld [vmem:[#allocation8 + $0x700] sm:$0xff]
    %v460 = vld [vmem:[#allocation8 + $0x708] sm:$0xff]
    %v461 = vld [vmem:[#allocation8 + $0x710] sm:$0xff]
    %v462 = vld [vmem:[#allocation8 + $0x718] sm:$0xf]
    %v463 = vld [vmem:[#allocation8 + $0x71c] sm:$0xff]
    %v464 = vld [vmem:[#allocation8 + $0x724] sm:$0xff]
    %v465 = vld [vmem:[#allocation8 + $0x72c] sm:$0xff]
    %v466 = vld [vmem:[#allocation8 + $0x734] sm:$0xf]
    %v467 = vld [vmem:[#allocation8 + $0x738] sm:$0xff]
    %v468 = vld [vmem:[#allocation8 + $0x740] sm:$0xff]
    %v469 = vld [vmem:[#allocation8 + $0x748] sm:$0xff]
    %v470 = vld [vmem:[#allocation8 + $0x750] sm:$0xf]
    %v471 = vld [vmem:[#allocation8 + $0x754] sm:$0xff]
    %v472 = vld [vmem:[#allocation8 + $0x75c] sm:$0xff]
    %v473 = vld [vmem:[#allocation8 + $0x764] sm:$0xff]
    %v474 = vld [vmem:[#allocation8 + $0x76c] sm:$0xf]
    %v475 = vld [vmem:[#allocation8 + $0x770] sm:$0xff]
    %v476 = vld [vmem:[#allocation8 + $0x778] sm:$0xff]
    %v477 = vld [vmem:[#allocation8 + $0x780] sm:$0xff]
    %v478 = vld [vmem:[#allocation8 + $0x788] sm:$0xf]
    %v479 = vld [vmem:[#allocation8 + $0x78c] sm:$0xff]
    %v480 = vld [vmem:[#allocation8 + $0x794] sm:$0xff]
    %v481 = vld [vmem:[#allocation8 + $0x79c] sm:$0xff]
    %v482 = vld [vmem:[#allocation8 + $0x7a4] sm:$0xf]
    %v483 = vld [vmem:[#allocation8 + $0x7a8] sm:$0xff]
    %v484 = vld [vmem:[#allocation8 + $0x7b0] sm:$0xff]
    %v485 = vld [vmem:[#allocation8 + $0x7b8] sm:$0xff]
    %v486 = vld [vmem:[#allocation8 + $0x7c0] sm:$0xf]
    %v487 = vld [vmem:[#allocation8 + $0x7c4] sm:$0xff]
    %v488 = vld [vmem:[#allocation8 + $0x7cc] sm:$0xff]
    %v489 = vld [vmem:[#allocation8 + $0x7d4] sm:$0xff]
    %v490 = vld [vmem:[#allocation8 + $0x7dc] sm:$0xf]
    %v491 = vld [vmem:[#allocation8 + $0x7e0] sm:$0xff]
    %v492 = vld [vmem:[#allocation8 + $0x7e8] sm:$0xff]
    %v493 = vld [vmem:[#allocation8 + $0x7f0] sm:$0xff]
    %v494 = vld [vmem:[#allocation8 + $0x7f8] sm:$0xf]
    %v495 = vld [vmem:[#allocation8 + $0x7fc] sm:$0xff]
    %v496 = vld [vmem:[#allocation8 + $0x804] sm:$0xff]
    %v497 = vld [vmem:[#allocation8 + $0x80c] sm:$0xff]
    %v498 = vld [vmem:[#allocation8 + $0x814] sm:$0xf]
    %v499 = vld [vmem:[#allocation8 + $0x818] sm:$0xff]
    %v500 = vld [vmem:[#allocation8 + $0x820] sm:$0xff]
    %v501 = vld [vmem:[#allocation8 + $0x828] sm:$0xff]
    %v502 = vld [vmem:[#allocation8 + $0x830] sm:$0xf]
    %v503 = vld [vmem:[#allocation8 + $0x834] sm:$0xff]
    %v504 = vld [vmem:[#allocation8 + $0x83c] sm:$0xff]
    %v505 = vld [vmem:[#allocation8 + $0x844] sm:$0xff]
    %v506 = vld [vmem:[#allocation8 + $0x84c] sm:$0xf]
    %v507 = vld [vmem:[#allocation8 + $0x850] sm:$0xff]
    %v508 = vld [vmem:[#allocation8 + $0x858] sm:$0xff]
    %v509 = vld [vmem:[#allocation8 + $0x860] sm:$0xff]
    %v510 = vld [vmem:[#allocation8 + $0x868] sm:$0xf]
    %v511 = vld [vmem:[#allocation8 + $0x86c] sm:$0xff]
    %v512 = vld [vmem:[#allocation8 + $0x874] sm:$0xff]
    %v513 = vld [vmem:[#allocation8 + $0x87c] sm:$0xff]
    %v514 = vld [vmem:[#allocation8 + $0x884] sm:$0xf]
    %v515 = vld [vmem:[#allocation8 + $0x888] sm:$0xff]
    %v516 = vld [vmem:[#allocation8 + $0x890] sm:$0xff]
    %v517 = vld [vmem:[#allocation8 + $0x898] sm:$0xff]
    %v518 = vld [vmem:[#allocation8 + $0x8a0] sm:$0xf]
    %v519 = vld [vmem:[#allocation8 + $0x8a4] sm:$0xff]
    %v520 = vld [vmem:[#allocation8 + $0x8ac] sm:$0xff]
    %v521 = vld [vmem:[#allocation8 + $0x8b4] sm:$0xff]
    %v522 = vld [vmem:[#allocation8 + $0x8bc] sm:$0xf]
    %v523 = vld [vmem:[#allocation8 + $0x8c0] sm:$0xff]
    %v524 = vld [vmem:[#allocation8 + $0x8c8] sm:$0xff]
    %v525 = vld [vmem:[#allocation8 + $0x8d0] sm:$0xff]
    %v526 = vld [vmem:[#allocation8 + $0x8d8] sm:$0xf]
    %v527 = vld [vmem:[#allocation8 + $0x8dc] sm:$0xff]
    %v528 = vld [vmem:[#allocation8 + $0x8e4] sm:$0xff]
    %v529 = vld [vmem:[#allocation8 + $0x8ec] sm:$0xff]
    %v530 = vld [vmem:[#allocation8 + $0x8f4] sm:$0xf]
    %v531 = vld [vmem:[#allocation8 + $0x8f8] sm:$0xff]
    %v532 = vld [vmem:[#allocation8 + $0x900] sm:$0xff]
    %v533 = vld [vmem:[#allocation8 + $0x908] sm:$0xff]
    %v534 = vld [vmem:[#allocation8 + $0x910] sm:$0xf]
    %v535 = vld [vmem:[#allocation8 + $0x914] sm:$0xff]
    %v536 = vld [vmem:[#allocation8 + $0x91c] sm:$0xff]
    %v537 = vld [vmem:[#allocation8 + $0x924] sm:$0xff]
    %v538 = vld [vmem:[#allocation8 + $0x92c] sm:$0xf]
    %v539 = vld [vmem:[#allocation8 + $0x930] sm:$0xff]
    %v540 = vld [vmem:[#allocation8 + $0x938] sm:$0xff]
    %v541 = vld [vmem:[#allocation8 + $0x940] sm:$0xff]
    %v542 = vld [vmem:[#allocation8 + $0x948] sm:$0xf]
    %v543 = vld [vmem:[#allocation8 + $0x94c] sm:$0xff]
    %v544 = vld [vmem:[#allocation8 + $0x954] sm:$0xff]
    %v545 = vld [vmem:[#allocation8 + $0x95c] sm:$0xff]
    %v546 = vld [vmem:[#allocation8 + $0x964] sm:$0xf]
    %v547 = vld [vmem:[#allocation8 + $0x968] sm:$0xff]
    %v548 = vld [vmem:[#allocation8 + $0x970] sm:$0xff]
    %v549 = vld [vmem:[#allocation8 + $0x978] sm:$0xff]
    %v550 = vld [vmem:[#allocation8 + $0x980] sm:$0xf]
    %v551 = vld [vmem:[#allocation8 + $0x984] sm:$0xff]
    %v552 = vld [vmem:[#allocation8 + $0x98c] sm:$0xff]
    %v553 = vld [vmem:[#allocation8 + $0x994] sm:$0xff]
    %v554 = vld [vmem:[#allocation8 + $0x99c] sm:$0xf]
    %v555 = vld [vmem:[#allocation8 + $0x9a0] sm:$0xff]
    %v556 = vld [vmem:[#allocation8 + $0x9a8] sm:$0xff]
    %v557 = vld [vmem:[#allocation8 + $0x9b0] sm:$0xff]
    %v558 = vld [vmem:[#allocation8 + $0x9b8] sm:$0xf]
    %v559 = vld [vmem:[#allocation8 + $0x9bc] sm:$0xff]
    %v560 = vld [vmem:[#allocation8 + $0x9c4] sm:$0xff]
    %v561 = vld [vmem:[#allocation8 + $0x9cc] sm:$0xff]
    %v562 = vld [vmem:[#allocation8 + $0x9d4] sm:$0xf]
    %v563 = vld [vmem:[#allocation8 + $0x9d8] sm:$0xff]
    %v564 = vld [vmem:[#allocation8 + $0x9e0] sm:$0xff]
    %v565 = vld [vmem:[#allocation8 + $0x9e8] sm:$0xff]
    %v566 = vld [vmem:[#allocation8 + $0x9f0] sm:$0xf]
    %v567 = vld [vmem:[#allocation8 + $0x9f4] sm:$0xff]
    %v568 = vld [vmem:[#allocation8 + $0x9fc] sm:$0xff]
    %v569 = vld [vmem:[#allocation8 + $0xa04] sm:$0xff]
    %v570 = vld [vmem:[#allocation8 + $0xa0c] sm:$0xf]
    %v571 = vld [vmem:[#allocation8 + $0xa10] sm:$0xff]
    %v572 = vld [vmem:[#allocation8 + $0xa18] sm:$0xff]
    %v573 = vld [vmem:[#allocation8 + $0xa20] sm:$0xff]
    %v574 = vld [vmem:[#allocation8 + $0xa28] sm:$0xf]
    %v575 = vld [vmem:[#allocation8 + $0xa2c] sm:$0xff]
    %v576 = vld [vmem:[#allocation8 + $0xa34] sm:$0xff]
    %v577 = vld [vmem:[#allocation8 + $0xa3c] sm:$0xff]
    %v578 = vld [vmem:[#allocation8 + $0xa44] sm:$0xf]
    %v579 = vld [vmem:[#allocation8 + $0xa48] sm:$0xff]
    %v580 = vld [vmem:[#allocation8 + $0xa50] sm:$0xff]
    %v581 = vld [vmem:[#allocation8 + $0xa58] sm:$0xff]
    %v582 = vld [vmem:[#allocation8 + $0xa60] sm:$0xf]
    %v583 = vld [vmem:[#allocation8 + $0xa64] sm:$0xff]
    %v584 = vld [vmem:[#allocation8 + $0xa6c] sm:$0xff]
    %v585 = vld [vmem:[#allocation8 + $0xa74] sm:$0xff]
    %v586 = vld [vmem:[#allocation8 + $0xa7c] sm:$0xf]
    %v587 = vld [vmem:[#allocation8 + $0xa80] sm:$0xff]
    %v588 = vld [vmem:[#allocation8 + $0xa88] sm:$0xff]
    %v589 = vld [vmem:[#allocation8 + $0xa90] sm:$0xff]
    %v590 = vld [vmem:[#allocation8 + $0xa98] sm:$0xf]
    %v591 = vld [vmem:[#allocation8 + $0xa9c] sm:$0xff]
    %v592 = vld [vmem:[#allocation8 + $0xaa4] sm:$0xff]
    %v593 = vld [vmem:[#allocation8 + $0xaac] sm:$0xff]
    %v594 = vld [vmem:[#allocation8 + $0xab4] sm:$0xf]
    %v595 = vld [vmem:[#allocation8 + $0xab8] sm:$0xff]
    %v596 = vld [vmem:[#allocation8 + $0xac0] sm:$0xff]
    %v597 = vld [vmem:[#allocation8 + $0xac8] sm:$0xff]
    %v598 = vld [vmem:[#allocation8 + $0xad0] sm:$0xf]
    %v599 = vld [vmem:[#allocation8 + $0xad4] sm:$0xff]
    %v600 = vld [vmem:[#allocation8 + $0xadc] sm:$0xff]
    %v601 = vld [vmem:[#allocation8 + $0xae4] sm:$0xff]
    %v602 = vld [vmem:[#allocation8 + $0xaec] sm:$0xf]
    %v603 = vld [vmem:[#allocation8 + $0xaf0] sm:$0xff]
    %v604 = vld [vmem:[#allocation8 + $0xaf8] sm:$0xff]
    %v605 = vld [vmem:[#allocation8 + $0xb00] sm:$0xff]
    %v606 = vld [vmem:[#allocation8 + $0xb08] sm:$0xf]
    %v607 = vld [vmem:[#allocation8 + $0xb0c] sm:$0xff]
    %v608 = vld [vmem:[#allocation8 + $0xb14] sm:$0xff]
    %v609 = vld [vmem:[#allocation8 + $0xb1c] sm:$0xff]
    %v610 = vld [vmem:[#allocation8 + $0xb24] sm:$0xf]
    %v611 = vld [vmem:[#allocation8 + $0xb28] sm:$0xff]
    %v612 = vld [vmem:[#allocation8 + $0xb30] sm:$0xff]
    %v613 = vld [vmem:[#allocation8 + $0xb38] sm:$0xff]
    %v614 = vld [vmem:[#allocation8 + $0xb40] sm:$0xf]
    %v615 = vld [vmem:[#allocation8 + $0xb44] sm:$0xff]
    %v616 = vld [vmem:[#allocation8 + $0xb4c] sm:$0xff]
    %v617 = vld [vmem:[#allocation8 + $0xb54] sm:$0xff]
    %v618 = vld [vmem:[#allocation8 + $0xb5c] sm:$0xf]
    %v619 = vld [vmem:[#allocation8 + $0xb60] sm:$0xff]
    %v620 = vld [vmem:[#allocation8 + $0xb68] sm:$0xff]
    %v621 = vld [vmem:[#allocation8 + $0xb70] sm:$0xff]
    %v622 = vld [vmem:[#allocation8 + $0xb78] sm:$0xf]
    %v623 = vld [vmem:[#allocation8 + $0xb7c] sm:$0xff]
    %v624 = vld [vmem:[#allocation8 + $0xb84] sm:$0xff]
    %v625 = vld [vmem:[#allocation8 + $0xb8c] sm:$0xff]
    %v626 = vld [vmem:[#allocation8 + $0xb94] sm:$0xf]
    %v627 = vld [vmem:[#allocation8 + $0xb98] sm:$0xff]
    %v628 = vld [vmem:[#allocation8 + $0xba0] sm:$0xff]
    %v629 = vld [vmem:[#allocation8 + $0xba8] sm:$0xff]
    %v630 = vld [vmem:[#allocation8 + $0xbb0] sm:$0xf]
    %v631 = vld [vmem:[#allocation8 + $0xbb4] sm:$0xff]
    %v632 = vld [vmem:[#allocation8 + $0xbbc] sm:$0xff]
    %v633 = vld [vmem:[#allocation8 + $0xbc4] sm:$0xff]
    %v634 = vld [vmem:[#allocation8 + $0xbcc] sm:$0xf]
    %v635 = vld [vmem:[#allocation8 + $0xbd0] sm:$0xff]
    %v636 = vld [vmem:[#allocation8 + $0xbd8] sm:$0xff]
    %v637 = vld [vmem:[#allocation8 + $0xbe0] sm:$0xff]
    %v638 = vld [vmem:[#allocation8 + $0xbe8] sm:$0xf]
    %v639 = vld [vmem:[#allocation8 + $0xbec] sm:$0xff]
    %v640 = vld [vmem:[#allocation8 + $0xbf4] sm:$0xff]
    %v641 = vld [vmem:[#allocation8 + $0xbfc] sm:$0xff]
    %v642 = vld [vmem:[#allocation8 + $0xc04] sm:$0xf]
    %v643 = vld [vmem:[#allocation8 + $0xc08] sm:$0xff]
    %v644 = vld [vmem:[#allocation8 + $0xc10] sm:$0xff]
    %v645 = vld [vmem:[#allocation8 + $0xc18] sm:$0xff]
    %v646 = vld [vmem:[#allocation8 + $0xc20] sm:$0xf]
    %v647 = vld [vmem:[#allocation8 + $0xc24] sm:$0xff]
    %v648 = vld [vmem:[#allocation8 + $0xc2c] sm:$0xff]
    %v649 = vld [vmem:[#allocation8 + $0xc34] sm:$0xff]
    %v650 = vld [vmem:[#allocation8 + $0xc3c] sm:$0xf]
    %v651 = vld [vmem:[#allocation8 + $0xc40] sm:$0xff]
    %v652 = vld [vmem:[#allocation8 + $0xc48] sm:$0xff]
    %v653 = vld [vmem:[#allocation8 + $0xc50] sm:$0xff]
    %v654 = vld [vmem:[#allocation8 + $0xc58] sm:$0xf]
    %v655 = vld [vmem:[#allocation8 + $0xc5c] sm:$0xff]
    %v656 = vld [vmem:[#allocation8 + $0xc64] sm:$0xff]
    %v657 = vld [vmem:[#allocation8 + $0xc6c] sm:$0xff]
    %v658 = vld [vmem:[#allocation8 + $0xc74] sm:$0xf]
    %v659 = vld [vmem:[#allocation8 + $0xc78] sm:$0xff]
    %v660 = vld [vmem:[#allocation8 + $0xc80] sm:$0xff]
    %v661 = vld [vmem:[#allocation8 + $0xc88] sm:$0xff]
    %v662 = vld [vmem:[#allocation8 + $0xc90] sm:$0xf]
    %v663 = vld [vmem:[#allocation8 + $0xc94] sm:$0xff]
    %v664 = vld [vmem:[#allocation8 + $0xc9c] sm:$0xff]
    %v665 = vld [vmem:[#allocation8 + $0xca4] sm:$0xff]
    %v666 = vld [vmem:[#allocation8 + $0xcac] sm:$0xf]
    %v667 = vld [vmem:[#allocation8 + $0xcb0] sm:$0xff]
    %v668 = vld [vmem:[#allocation8 + $0xcb8] sm:$0xff]
    %v669 = vld [vmem:[#allocation8 + $0xcc0] sm:$0xff]
    %v670 = vld [vmem:[#allocation8 + $0xcc8] sm:$0xf]
    %v671 = vld [vmem:[#allocation8 + $0xccc] sm:$0xff]
    %v672 = vld [vmem:[#allocation8 + $0xcd4] sm:$0xff]
    %v673 = vld [vmem:[#allocation8 + $0xcdc] sm:$0xff]
    %v674 = vld [vmem:[#allocation8 + $0xce4] sm:$0xf]
    %v675 = vld [vmem:[#allocation8 + $0xce8] sm:$0xff]
    %v676 = vld [vmem:[#allocation8 + $0xcf0] sm:$0xff]
    %v677 = vld [vmem:[#allocation8 + $0xcf8] sm:$0xff]
    %v678 = vld [vmem:[#allocation8 + $0xd00] sm:$0xf]
    %v679 = vld [vmem:[#allocation8 + $0xd04] sm:$0xff]
    %v680 = vld [vmem:[#allocation8 + $0xd0c] sm:$0xff]
    %v681 = vld [vmem:[#allocation8 + $0xd14] sm:$0xff]
    %v682 = vld [vmem:[#allocation8 + $0xd1c] sm:$0xf]
    %v683 = vld [vmem:[#allocation8 + $0xd20] sm:$0xff]
    %v684 = vld [vmem:[#allocation8 + $0xd28] sm:$0xff]
    %v685 = vld [vmem:[#allocation8 + $0xd30] sm:$0xff]
    %v686 = vld [vmem:[#allocation8 + $0xd38] sm:$0xf]
    %v687 = vld [vmem:[#allocation8 + $0xd3c] sm:$0xff]
    %v688 = vld [vmem:[#allocation8 + $0xd44] sm:$0xff]
    %v689 = vld [vmem:[#allocation8 + $0xd4c] sm:$0xff]
    %v690 = vld [vmem:[#allocation8 + $0xd54] sm:$0xf]
    %v691 = vld [vmem:[#allocation8 + $0xd58] sm:$0xff]
    %v692 = vld [vmem:[#allocation8 + $0xd60] sm:$0xff]
    %v693 = vld [vmem:[#allocation8 + $0xd68] sm:$0xff]
    %v694 = vld [vmem:[#allocation8 + $0xd70] sm:$0xf]
    %v695 = vld [vmem:[#allocation8 + $0xd74] sm:$0xff]
    %v696 = vld [vmem:[#allocation8 + $0xd7c] sm:$0xff]
    %v697 = vld [vmem:[#allocation8 + $0xd84] sm:$0xff]
    %v698 = vld [vmem:[#allocation8 + $0xd8c] sm:$0xf]
    %v699 = vld [vmem:[#allocation8 + $0xd90] sm:$0xff]
    %v700 = vld [vmem:[#allocation8 + $0xd98] sm:$0xff]
    %v701 = vld [vmem:[#allocation8 + $0xda0] sm:$0xff]
    %v702 = vld [vmem:[#allocation8 + $0xda8] sm:$0xf]
    %v703 = vld [vmem:[#allocation8 + $0xdac] sm:$0xff]
    %v704 = vld [vmem:[#allocation8 + $0xdb4] sm:$0xff]
    %v705 = vld [vmem:[#allocation8 + $0xdbc] sm:$0xff]
    %v706 = vld [vmem:[#allocation8 + $0xdc4] sm:$0xf]
    %v707 = vld [vmem:[#allocation8 + $0xdc8] sm:$0xff]
    %v708 = vld [vmem:[#allocation8 + $0xdd0] sm:$0xff]
    %v709 = vld [vmem:[#allocation8 + $0xdd8] sm:$0xff]
    %v710 = vld [vmem:[#allocation8 + $0xde0] sm:$0xf]
    %v711 = vld [vmem:[#allocation8 + $0xde4] sm:$0xff]
    %v712 = vld [vmem:[#allocation8 + $0xdec] sm:$0xff]
    %v713 = vld [vmem:[#allocation8 + $0xdf4] sm:$0xff]
    %v714 = vld [vmem:[#allocation8 + $0xdfc] sm:$0xf]
    %v715 = vld [vmem:[#allocation8 + $0xe00] sm:$0xff]
    %v716 = vld [vmem:[#allocation8 + $0xe08] sm:$0xff]
    %v717 = vld [vmem:[#allocation8 + $0xe10] sm:$0xff]
    %v718 = vld [vmem:[#allocation8 + $0xe18] sm:$0xf]
    %v719 = vld [vmem:[#allocation8 + $0xe1c] sm:$0xff]
    %v720 = vld [vmem:[#allocation8 + $0xe24] sm:$0xff]
    %v721 = vld [vmem:[#allocation8 + $0xe2c] sm:$0xff]
    %v722 = vld [vmem:[#allocation8 + $0xe34] sm:$0xf]
    %v723 = vld [vmem:[#allocation8 + $0xe38] sm:$0xff]
    %v724 = vld [vmem:[#allocation8 + $0xe40] sm:$0xff]
    %v725 = vld [vmem:[#allocation8 + $0xe48] sm:$0xff]
    %v726 = vld [vmem:[#allocation8 + $0xe50] sm:$0xf]
    %v727 = vld [vmem:[#allocation8 + $0xe54] sm:$0xff]
    %v728 = vld [vmem:[#allocation8 + $0xe5c] sm:$0xff]
    %v729 = vld [vmem:[#allocation8 + $0xe64] sm:$0xff]
    %v730 = vld [vmem:[#allocation8 + $0xe6c] sm:$0xf]
    %v731 = vld [vmem:[#allocation8 + $0xe70] sm:$0xff]
    %v732 = vld [vmem:[#allocation8 + $0xe78] sm:$0xff]
    %v733 = vld [vmem:[#allocation8 + $0xe80] sm:$0xff]
    %v734 = vld [vmem:[#allocation8 + $0xe88] sm:$0xf]
    %v735 = vld [vmem:[#allocation8 + $0xe8c] sm:$0xff]
    %v736 = vld [vmem:[#allocation8 + $0xe94] sm:$0xff]
    %v737 = vld [vmem:[#allocation8 + $0xe9c] sm:$0xff]
    %v738 = vld [vmem:[#allocation8 + $0xea4] sm:$0xf]
    %v739 = vld [vmem:[#allocation8 + $0xea8] sm:$0xff]
    %v740 = vld [vmem:[#allocation8 + $0xeb0] sm:$0xff]
    %v741 = vld [vmem:[#allocation8 + $0xeb8] sm:$0xff]
    %v742 = vld [vmem:[#allocation8 + $0xec0] sm:$0xf]
    %v743 = vld [vmem:[#allocation8 + $0xec4] sm:$0xff]
    %v744 = vld [vmem:[#allocation8 + $0xecc] sm:$0xff]
    %v745 = vld [vmem:[#allocation8 + $0xed4] sm:$0xff]
    %v746 = vld [vmem:[#allocation8 + $0xedc] sm:$0xf]
    %v747 = vld [vmem:[#allocation8 + $0xee0] sm:$0xff]
    %v748 = vld [vmem:[#allocation8 + $0xee8] sm:$0xff]
    %v749 = vld [vmem:[#allocation8 + $0xef0] sm:$0xff]
    %v750 = vld [vmem:[#allocation8 + $0xef8] sm:$0xf]
    %v751 = vld [vmem:[#allocation8 + $0xefc] sm:$0xff]
    %v752 = vld [vmem:[#allocation8 + $0xf04] sm:$0xff]
    %v753 = vld [vmem:[#allocation8 + $0xf0c] sm:$0xff]
    %v754 = vld [vmem:[#allocation8 + $0xf14] sm:$0xf]
    %v755 = vld [vmem:[#allocation8 + $0xf18] sm:$0xff]
    %v756 = vld [vmem:[#allocation8 + $0xf20] sm:$0xff]
    %v757 = vld [vmem:[#allocation8 + $0xf28] sm:$0xff]
    %v758 = vld [vmem:[#allocation8 + $0xf30] sm:$0xf]
    %v759 = vld [vmem:[#allocation8 + $0xf34] sm:$0xff]
    %v760 = vld [vmem:[#allocation8 + $0xf3c] sm:$0xff]
    %v761 = vld [vmem:[#allocation8 + $0xf44] sm:$0xff]
    %v762 = vld [vmem:[#allocation8 + $0xf4c] sm:$0xf]
    %v763 = vld [vmem:[#allocation8 + $0xf50] sm:$0xff]
    %v764 = vld [vmem:[#allocation8 + $0xf58] sm:$0xff]
    %v765 = vld [vmem:[#allocation8 + $0xf60] sm:$0xff]
    %v766 = vld [vmem:[#allocation8 + $0xf68] sm:$0xf]
    %v767 = vld [vmem:[#allocation8 + $0xf6c] sm:$0xff]
    %v768 = vld [vmem:[#allocation8 + $0xf74] sm:$0xff]
    %v769 = vld [vmem:[#allocation8 + $0xf7c] sm:$0xff]
    %v770 = vld [vmem:[#allocation8 + $0xf84] sm:$0xf]
    %v771 = vld [vmem:[#allocation8 + $0xf88] sm:$0xff]
    %v772 = vld [vmem:[#allocation8 + $0xf90] sm:$0xff]
    %v773 = vld [vmem:[#allocation8 + $0xf98] sm:$0xff]
    %v774 = vld [vmem:[#allocation8 + $0xfa0] sm:$0xf]
    %v775 = vld [vmem:[#allocation8 + $0xfa4] sm:$0xff]
    %v776 = vld [vmem:[#allocation8 + $0xfac] sm:$0xff]
    %v777 = vld [vmem:[#allocation8 + $0xfb4] sm:$0xff]
    %v778 = vld [vmem:[#allocation8 + $0xfbc] sm:$0xf]
    %v779 = vld [vmem:[#allocation8 + $0xfc0] sm:$0xff]
    %v780 = vld [vmem:[#allocation8 + $0xfc8] sm:$0xff]
    %v781 = vld [vmem:[#allocation8 + $0xfd0] sm:$0xff]
    %v782 = vld [vmem:[#allocation8 + $0xfd8] sm:$0xf]
    %v783 = vld [vmem:[#allocation8 + $0xfdc] sm:$0xff]
    %v784 = vld [vmem:[#allocation8 + $0xfe4] sm:$0xff]
    %v785 = vld [vmem:[#allocation8 + $0xfec] sm:$0xff]
    %v786 = vld [vmem:[#allocation8 + $0xff4] sm:$0xf]
    %v787 = vld [vmem:[#allocation8 + $0xff8] sm:$0xff]
    %v788 = vld [vmem:[#allocation8 + $0x1000] sm:$0xff]
    %v789 = vld [vmem:[#allocation8 + $0x1008] sm:$0xff]
    %v790 = vld [vmem:[#allocation8 + $0x1010] sm:$0xf]
    %v791 = vld [vmem:[#allocation8 + $0x1014] sm:$0xff]
    %v792 = vld [vmem:[#allocation8 + $0x101c] sm:$0xff]
    %v793 = vld [vmem:[#allocation8 + $0x1024] sm:$0xff]
    %v794 = vld [vmem:[#allocation8 + $0x102c] sm:$0xf]
    %v795 = vld [vmem:[#allocation8 + $0x1030] sm:$0xff]
    %v796 = vld [vmem:[#allocation8 + $0x1038] sm:$0xff]
    %v797 = vld [vmem:[#allocation8 + $0x1040] sm:$0xff]
    %v798 = vld [vmem:[#allocation8 + $0x1048] sm:$0xf]
    %v799 = vld [vmem:[#allocation8 + $0x104c] sm:$0xff]
    %v800 = vld [vmem:[#allocation8 + $0x1054] sm:$0xff]
    %v801 = vld [vmem:[#allocation8 + $0x105c] sm:$0xff]
    %v802 = vld [vmem:[#allocation8 + $0x1064] sm:$0xf]
    %v803 = vld [vmem:[#allocation8 + $0x1068] sm:$0xff]
    %v804 = vld [vmem:[#allocation8 + $0x1070] sm:$0xff]
    %v805 = vld [vmem:[#allocation8 + $0x1078] sm:$0xff]
    %v806 = vld [vmem:[#allocation8 + $0x1080] sm:$0xf]
    %v807 = vld [vmem:[#allocation8 + $0x1084] sm:$0xff]
    %v808 = vld [vmem:[#allocation8 + $0x108c] sm:$0xff]
    %v809 = vld [vmem:[#allocation8 + $0x1094] sm:$0xff]
    %v810 = vld [vmem:[#allocation8 + $0x109c] sm:$0xf]
    %v811 = vld [vmem:[#allocation8 + $0x10a0] sm:$0xff]
    %v812 = vld [vmem:[#allocation8 + $0x10a8] sm:$0xff]
    %v813 = vld [vmem:[#allocation8 + $0x10b0] sm:$0xff]
    %v814 = vld [vmem:[#allocation8 + $0x10b8] sm:$0xf]
    %v815 = vld [vmem:[#allocation8 + $0x10bc] sm:$0xff]
    %v816 = vld [vmem:[#allocation8 + $0x10c4] sm:$0xff]
    %v817 = vld [vmem:[#allocation8 + $0x10cc] sm:$0xff]
    %v818 = vld [vmem:[#allocation8 + $0x10d4] sm:$0xf]
    %v819 = vld [vmem:[#allocation8 + $0x10d8] sm:$0xff]
    %v820 = vld [vmem:[#allocation8 + $0x10e0] sm:$0xff]
    %v821 = vld [vmem:[#allocation8 + $0x10e8] sm:$0xff]
    %v822 = vld [vmem:[#allocation8 + $0x10f0] sm:$0xf]
    %v823 = vld [vmem:[#allocation8 + $0x10f4] sm:$0xff]
    %v824 = vld [vmem:[#allocation8 + $0x10fc] sm:$0xff]
    %v825 = vld [vmem:[#allocation8 + $0x1104] sm:$0xff]
    %v826 = vld [vmem:[#allocation8 + $0x110c] sm:$0xf]
    %v827 = vld [vmem:[#allocation8 + $0x1110] sm:$0xff]
    %v828 = vld [vmem:[#allocation8 + $0x1118] sm:$0xff]
    %v829 = vld [vmem:[#allocation8 + $0x1120] sm:$0xff]
    %v830 = vld [vmem:[#allocation8 + $0x1128] sm:$0xf]
    %v831 = vld [vmem:[#allocation8 + $0x112c] sm:$0xff]
    %v832 = vld [vmem:[#allocation8 + $0x1134] sm:$0xff]
    %v833 = vld [vmem:[#allocation8 + $0x113c] sm:$0xff]
    %v834 = vld [vmem:[#allocation8 + $0x1144] sm:$0xf]
    %v835 = vld [vmem:[#allocation8 + $0x1148] sm:$0xff]
    %v836 = vld [vmem:[#allocation8 + $0x1150] sm:$0xff]
    %v837 = vld [vmem:[#allocation8 + $0x1158] sm:$0xff]
    %v838 = vld [vmem:[#allocation8 + $0x1160] sm:$0xf]
    %v839 = vld [vmem:[#allocation8 + $0x1164] sm:$0xff]
    %v840 = vld [vmem:[#allocation8 + $0x116c] sm:$0xff]
    %v841 = vld [vmem:[#allocation8 + $0x1174] sm:$0xff]
    %v842 = vld [vmem:[#allocation8 + $0x117c] sm:$0xf]
    %v843 = vld [vmem:[#allocation10] sm:$0xff]
    %v845 = vperm.slane %v843, 0
    %v846 = vperm.slane %v843, 1
    %v847 = vperm.slane %v843, 2
    %v848 = vperm.slane %v843, 3
    %v849 = vperm.slane %v843, 4
    %v850 = vperm.slane %v843, 5
    %v851 = vperm.slane %v843, 6
    %v1499 = vunpack.c.l.b16 %v203
    %v1500 = vunpack.c.h.b16 %v203
    %v1501 = vunpack.c.l.b16 %v204
    %v1502 = vunpack.c.h.b16 %v204
    %v1503 = vunpack.c.l.b16 %v205
    %v1504 = vunpack.c.h.b16 %v205
    %v1505 = vunpack.c.l.b16 %v206
    %v1506 = vunpack.c.l.b16 %v207
    %v1507 = vunpack.c.h.b16 %v207
    %v1508 = vunpack.c.l.b16 %v208
    %v1509 = vunpack.c.h.b16 %v208
    %v1510 = vunpack.c.l.b16 %v209
    %v1511 = vunpack.c.h.b16 %v209
    %v1512 = vunpack.c.l.b16 %v210
    %v1513 = vunpack.c.l.b16 %v211
    %v1514 = vunpack.c.h.b16 %v211
    %v1515 = vunpack.c.l.b16 %v212
    %v1516 = vunpack.c.h.b16 %v212
    %v1517 = vunpack.c.l.b16 %v213
    %v1518 = vunpack.c.h.b16 %v213
    %v1519 = vunpack.c.l.b16 %v214
    %v1520 = vunpack.c.l.b16 %v215
    %v1521 = vunpack.c.h.b16 %v215
    %v1522 = vunpack.c.l.b16 %v216
    %v1523 = vunpack.c.h.b16 %v216
    %v1524 = vunpack.c.l.b16 %v217
    %v1525 = vunpack.c.h.b16 %v217
    %v1526 = vunpack.c.l.b16 %v218
    %v1527 = vunpack.c.l.b16 %v219
    %v1528 = vunpack.c.h.b16 %v219
    %v1529 = vunpack.c.l.b16 %v220
    %v1530 = vunpack.c.h.b16 %v220
    %v1531 = vunpack.c.l.b16 %v221
    %v1532 = vunpack.c.h.b16 %v221
    %v1533 = vunpack.c.l.b16 %v222
    %v1534 = vunpack.c.l.b16 %v223
    %v1535 = vunpack.c.h.b16 %v223
    %v1536 = vunpack.c.l.b16 %v224
    %v1537 = vunpack.c.h.b16 %v224
    %v1538 = vunpack.c.l.b16 %v225
    %v1539 = vunpack.c.h.b16 %v225
    %v1540 = vunpack.c.l.b16 %v226
    %v1541 = vunpack.c.l.b16 %v227
    %v1542 = vunpack.c.h.b16 %v227
    %v1543 = vunpack.c.l.b16 %v228
    %v1544 = vunpack.c.h.b16 %v228
    %v1545 = vunpack.c.l.b16 %v229
    %v1546 = vunpack.c.h.b16 %v229
    %v1547 = vunpack.c.l.b16 %v230
    %v1548 = vunpack.c.l.b16 %v231
    %v1549 = vunpack.c.h.b16 %v231
    %v1550 = vunpack.c.l.b16 %v232
    %v1551 = vunpack.c.h.b16 %v232
    %v1552 = vunpack.c.l.b16 %v233
    %v1553 = vunpack.c.h.b16 %v233
    %v1554 = vunpack.c.l.b16 %v234
    %v1555 = vunpack.c.l.b16 %v235
    %v1556 = vunpack.c.h.b16 %v235
    %v1557 = vunpack.c.l.b16 %v236
    %v1558 = vunpack.c.h.b16 %v236
    %v1559 = vunpack.c.l.b16 %v237
    %v1560 = vunpack.c.h.b16 %v237
    %v1561 = vunpack.c.l.b16 %v238
    %v1562 = vunpack.c.l.b16 %v239
    %v1563 = vunpack.c.h.b16 %v239
    %v1564 = vunpack.c.l.b16 %v240
    %v1565 = vunpack.c.h.b16 %v240
    %v1566 = vunpack.c.l.b16 %v241
    %v1567 = vunpack.c.h.b16 %v241
    %v1568 = vunpack.c.l.b16 %v242
    %v1569 = vunpack.c.l.b16 %v243
    %v1570 = vunpack.c.h.b16 %v243
    %v1571 = vunpack.c.l.b16 %v244
    %v1572 = vunpack.c.h.b16 %v244
    %v1573 = vunpack.c.l.b16 %v245
    %v1574 = vunpack.c.h.b16 %v245
    %v1575 = vunpack.c.l.b16 %v246
    %v1576 = vunpack.c.l.b16 %v247
    %v1577 = vunpack.c.h.b16 %v247
    %v1578 = vunpack.c.l.b16 %v248
    %v1579 = vunpack.c.h.b16 %v248
    %v1580 = vunpack.c.l.b16 %v249
    %v1581 = vunpack.c.h.b16 %v249
    %v1582 = vunpack.c.l.b16 %v250
    %v1583 = vunpack.c.l.b16 %v251
    %v1584 = vunpack.c.h.b16 %v251
    %v1585 = vunpack.c.l.b16 %v252
    %v1586 = vunpack.c.h.b16 %v252
    %v1587 = vunpack.c.l.b16 %v253
    %v1588 = vunpack.c.h.b16 %v253
    %v1589 = vunpack.c.l.b16 %v254
    %v1590 = vunpack.c.l.b16 %v255
    %v1591 = vunpack.c.h.b16 %v255
    %v1592 = vunpack.c.l.b16 %v256
    %v1593 = vunpack.c.h.b16 %v256
    %v1594 = vunpack.c.l.b16 %v257
    %v1595 = vunpack.c.h.b16 %v257
    %v1596 = vunpack.c.l.b16 %v258
    %v1597 = vunpack.c.l.b16 %v259
    %v1598 = vunpack.c.h.b16 %v259
    %v1599 = vunpack.c.l.b16 %v260
    %v1600 = vunpack.c.h.b16 %v260
    %v1601 = vunpack.c.l.b16 %v261
    %v1602 = vunpack.c.h.b16 %v261
    %v1603 = vunpack.c.l.b16 %v262
    %v1604 = vunpack.c.l.b16 %v263
    %v1605 = vunpack.c.h.b16 %v263
    %v1606 = vunpack.c.l.b16 %v264
    %v1607 = vunpack.c.h.b16 %v264
    %v1608 = vunpack.c.l.b16 %v265
    %v1609 = vunpack.c.h.b16 %v265
    %v1610 = vunpack.c.l.b16 %v266
    %v1611 = vunpack.c.l.b16 %v267
    %v1612 = vunpack.c.h.b16 %v267
    %v1613 = vunpack.c.l.b16 %v268
    %v1614 = vunpack.c.h.b16 %v268
    %v1615 = vunpack.c.l.b16 %v269
    %v1616 = vunpack.c.h.b16 %v269
    %v1617 = vunpack.c.l.b16 %v270
    %v1618 = vunpack.c.l.b16 %v271
    %v1619 = vunpack.c.h.b16 %v271
    %v1620 = vunpack.c.l.b16 %v272
    %v1621 = vunpack.c.h.b16 %v272
    %v1622 = vunpack.c.l.b16 %v273
    %v1623 = vunpack.c.h.b16 %v273
    %v1624 = vunpack.c.l.b16 %v274
    %v1625 = vunpack.c.l.b16 %v275
    %v1626 = vunpack.c.h.b16 %v275
    %v1627 = vunpack.c.l.b16 %v276
    %v1628 = vunpack.c.h.b16 %v276
    %v1629 = vunpack.c.l.b16 %v277
    %v1630 = vunpack.c.h.b16 %v277
    %v1631 = vunpack.c.l.b16 %v278
    %v1632 = vunpack.c.l.b16 %v279
    %v1633 = vunpack.c.h.b16 %v279
    %v1634 = vunpack.c.l.b16 %v280
    %v1635 = vunpack.c.h.b16 %v280
    %v1636 = vunpack.c.l.b16 %v281
    %v1637 = vunpack.c.h.b16 %v281
    %v1638 = vunpack.c.l.b16 %v282
    %v1639 = vunpack.c.l.b16 %v283
    %v1640 = vunpack.c.h.b16 %v283
    %v1641 = vunpack.c.l.b16 %v284
    %v1642 = vunpack.c.h.b16 %v284
    %v1643 = vunpack.c.l.b16 %v285
    %v1644 = vunpack.c.h.b16 %v285
    %v1645 = vunpack.c.l.b16 %v286
    %v1646 = vunpack.c.l.b16 %v287
    %v1647 = vunpack.c.h.b16 %v287
    %v1648 = vunpack.c.l.b16 %v288
    %v1649 = vunpack.c.h.b16 %v288
    %v1650 = vunpack.c.l.b16 %v289
    %v1651 = vunpack.c.h.b16 %v289
    %v1652 = vunpack.c.l.b16 %v290
    %v1653 = vunpack.c.l.b16 %v291
    %v1654 = vunpack.c.h.b16 %v291
    %v1655 = vunpack.c.l.b16 %v292
    %v1656 = vunpack.c.h.b16 %v292
    %v1657 = vunpack.c.l.b16 %v293
    %v1658 = vunpack.c.h.b16 %v293
    %v1659 = vunpack.c.l.b16 %v294
    %v1660 = vunpack.c.l.b16 %v295
    %v1661 = vunpack.c.h.b16 %v295
    %v1662 = vunpack.c.l.b16 %v296
    %v1663 = vunpack.c.h.b16 %v296
    %v1664 = vunpack.c.l.b16 %v297
    %v1665 = vunpack.c.h.b16 %v297
    %v1666 = vunpack.c.l.b16 %v298
    %v1667 = vunpack.c.l.b16 %v299
    %v1668 = vunpack.c.h.b16 %v299
    %v1669 = vunpack.c.l.b16 %v300
    %v1670 = vunpack.c.h.b16 %v300
    %v1671 = vunpack.c.l.b16 %v301
    %v1672 = vunpack.c.h.b16 %v301
    %v1673 = vunpack.c.l.b16 %v302
    %v1674 = vunpack.c.l.b16 %v303
    %v1675 = vunpack.c.h.b16 %v303
    %v1676 = vunpack.c.l.b16 %v304
    %v1677 = vunpack.c.h.b16 %v304
    %v1678 = vunpack.c.l.b16 %v305
    %v1679 = vunpack.c.h.b16 %v305
    %v1680 = vunpack.c.l.b16 %v306
    %v1681 = vunpack.c.l.b16 %v307
    %v1682 = vunpack.c.h.b16 %v307
    %v1683 = vunpack.c.l.b16 %v308
    %v1684 = vunpack.c.h.b16 %v308
    %v1685 = vunpack.c.l.b16 %v309
    %v1686 = vunpack.c.h.b16 %v309
    %v1687 = vunpack.c.l.b16 %v310
    %v1688 = vunpack.c.l.b16 %v311
    %v1689 = vunpack.c.h.b16 %v311
    %v1690 = vunpack.c.l.b16 %v312
    %v1691 = vunpack.c.h.b16 %v312
    %v1692 = vunpack.c.l.b16 %v313
    %v1693 = vunpack.c.h.b16 %v313
    %v1694 = vunpack.c.l.b16 %v314
    %v1695 = vunpack.c.l.b16 %v315
    %v1696 = vunpack.c.h.b16 %v315
    %v1697 = vunpack.c.l.b16 %v316
    %v1698 = vunpack.c.h.b16 %v316
    %v1699 = vunpack.c.l.b16 %v317
    %v1700 = vunpack.c.h.b16 %v317
    %v1701 = vunpack.c.l.b16 %v318
    %v1702 = vunpack.c.l.b16 %v319
    %v1703 = vunpack.c.h.b16 %v319
    %v1704 = vunpack.c.l.b16 %v320
    %v1705 = vunpack.c.h.b16 %v320
    %v1706 = vunpack.c.l.b16 %v321
    %v1707 = vunpack.c.h.b16 %v321
    %v1708 = vunpack.c.l.b16 %v322
    %v1709 = vunpack.c.l.b16 %v323
    %v1710 = vunpack.c.h.b16 %v323
    %v1711 = vunpack.c.l.b16 %v324
    %v1712 = vunpack.c.h.b16 %v324
    %v1713 = vunpack.c.l.b16 %v325
    %v1714 = vunpack.c.h.b16 %v325
    %v1715 = vunpack.c.l.b16 %v326
    %v1716 = vunpack.c.l.b16 %v327
    %v1717 = vunpack.c.h.b16 %v327
    %v1718 = vunpack.c.l.b16 %v328
    %v1719 = vunpack.c.h.b16 %v328
    %v1720 = vunpack.c.l.b16 %v329
    %v1721 = vunpack.c.h.b16 %v329
    %v1722 = vunpack.c.l.b16 %v330
    %v1723 = vunpack.c.l.b16 %v331
    %v1724 = vunpack.c.h.b16 %v331
    %v1725 = vunpack.c.l.b16 %v332
    %v1726 = vunpack.c.h.b16 %v332
    %v1727 = vunpack.c.l.b16 %v333
    %v1728 = vunpack.c.h.b16 %v333
    %v1729 = vunpack.c.l.b16 %v334
    %v1730 = vunpack.c.l.b16 %v335
    %v1731 = vunpack.c.h.b16 %v335
    %v1732 = vunpack.c.l.b16 %v336
    %v1733 = vunpack.c.h.b16 %v336
    %v1734 = vunpack.c.l.b16 %v337
    %v1735 = vunpack.c.h.b16 %v337
    %v1736 = vunpack.c.l.b16 %v338
    %v1737 = vunpack.c.l.b16 %v339
    %v1738 = vunpack.c.h.b16 %v339
    %v1739 = vunpack.c.l.b16 %v340
    %v1740 = vunpack.c.h.b16 %v340
    %v1741 = vunpack.c.l.b16 %v341
    %v1742 = vunpack.c.h.b16 %v341
    %v1743 = vunpack.c.l.b16 %v342
    %v1744 = vunpack.c.l.b16 %v343
    %v1745 = vunpack.c.h.b16 %v343
    %v1746 = vunpack.c.l.b16 %v344
    %v1747 = vunpack.c.h.b16 %v344
    %v1748 = vunpack.c.l.b16 %v345
    %v1749 = vunpack.c.h.b16 %v345
    %v1750 = vunpack.c.l.b16 %v346
    %v1751 = vunpack.c.l.b16 %v347
    %v1752 = vunpack.c.h.b16 %v347
    %v1753 = vunpack.c.l.b16 %v348
    %v1754 = vunpack.c.h.b16 %v348
    %v1755 = vunpack.c.l.b16 %v349
    %v1756 = vunpack.c.h.b16 %v349
    %v1757 = vunpack.c.l.b16 %v350
    %v1758 = vunpack.c.l.b16 %v351
    %v1759 = vunpack.c.h.b16 %v351
    %v1760 = vunpack.c.l.b16 %v352
    %v1761 = vunpack.c.h.b16 %v352
    %v1762 = vunpack.c.l.b16 %v353
    %v1763 = vunpack.c.h.b16 %v353
    %v1764 = vunpack.c.l.b16 %v354
    %v1765 = vunpack.c.l.b16 %v355
    %v1766 = vunpack.c.h.b16 %v355
    %v1767 = vunpack.c.l.b16 %v356
    %v1768 = vunpack.c.h.b16 %v356
    %v1769 = vunpack.c.l.b16 %v357
    %v1770 = vunpack.c.h.b16 %v357
    %v1771 = vunpack.c.l.b16 %v358
    %v1772 = vunpack.c.l.b16 %v359
    %v1773 = vunpack.c.h.b16 %v359
    %v1774 = vunpack.c.l.b16 %v360
    %v1775 = vunpack.c.h.b16 %v360
    %v1776 = vunpack.c.l.b16 %v361
    %v1777 = vunpack.c.h.b16 %v361
    %v1778 = vunpack.c.l.b16 %v362
    %v1779 = vunpack.c.l.b16 %v363
    %v1780 = vunpack.c.h.b16 %v363
    %v1781 = vunpack.c.l.b16 %v364
    %v1782 = vunpack.c.h.b16 %v364
    %v1783 = vunpack.c.l.b16 %v365
    %v1784 = vunpack.c.h.b16 %v365
    %v1785 = vunpack.c.l.b16 %v366
    %v1786 = vunpack.c.l.b16 %v367
    %v1787 = vunpack.c.h.b16 %v367
    %v1788 = vunpack.c.l.b16 %v368
    %v1789 = vunpack.c.h.b16 %v368
    %v1790 = vunpack.c.l.b16 %v369
    %v1791 = vunpack.c.h.b16 %v369
    %v1792 = vunpack.c.l.b16 %v370
    %v1793 = vunpack.c.l.b16 %v371
    %v1794 = vunpack.c.h.b16 %v371
    %v1795 = vunpack.c.l.b16 %v372
    %v1796 = vunpack.c.h.b16 %v372
    %v1797 = vunpack.c.l.b16 %v373
    %v1798 = vunpack.c.h.b16 %v373
    %v1799 = vunpack.c.l.b16 %v374
    %v1800 = vunpack.c.l.b16 %v375
    %v1801 = vunpack.c.h.b16 %v375
    %v1802 = vunpack.c.l.b16 %v376
    %v1803 = vunpack.c.h.b16 %v376
    %v1804 = vunpack.c.l.b16 %v377
    %v1805 = vunpack.c.h.b16 %v377
    %v1806 = vunpack.c.l.b16 %v378
    %v1807 = vunpack.c.l.b16 %v379
    %v1808 = vunpack.c.h.b16 %v379
    %v1809 = vunpack.c.l.b16 %v380
    %v1810 = vunpack.c.h.b16 %v380
    %v1811 = vunpack.c.l.b16 %v381
    %v1812 = vunpack.c.h.b16 %v381
    %v1813 = vunpack.c.l.b16 %v382
    %v1814 = vunpack.c.l.b16 %v383
    %v1815 = vunpack.c.h.b16 %v383
    %v1816 = vunpack.c.l.b16 %v384
    %v1817 = vunpack.c.h.b16 %v384
    %v1818 = vunpack.c.l.b16 %v385
    %v1819 = vunpack.c.h.b16 %v385
    %v1820 = vunpack.c.l.b16 %v386
    %v1821 = vunpack.c.l.b16 %v387
    %v1822 = vunpack.c.h.b16 %v387
    %v1823 = vunpack.c.l.b16 %v388
    %v1824 = vunpack.c.h.b16 %v388
    %v1825 = vunpack.c.l.b16 %v389
    %v1826 = vunpack.c.h.b16 %v389
    %v1827 = vunpack.c.l.b16 %v390
    %v1828 = vunpack.c.l.b16 %v391
    %v1829 = vunpack.c.h.b16 %v391
    %v1830 = vunpack.c.l.b16 %v392
    %v1831 = vunpack.c.h.b16 %v392
    %v1832 = vunpack.c.l.b16 %v393
    %v1833 = vunpack.c.h.b16 %v393
    %v1834 = vunpack.c.l.b16 %v394
    %v1835 = vunpack.c.l.b16 %v395
    %v1836 = vunpack.c.h.b16 %v395
    %v1837 = vunpack.c.l.b16 %v396
    %v1838 = vunpack.c.h.b16 %v396
    %v1839 = vunpack.c.l.b16 %v397
    %v1840 = vunpack.c.h.b16 %v397
    %v1841 = vunpack.c.l.b16 %v398
    %v1842 = vunpack.c.l.b16 %v399
    %v1843 = vunpack.c.h.b16 %v399
    %v1844 = vunpack.c.l.b16 %v400
    %v1845 = vunpack.c.h.b16 %v400
    %v1846 = vunpack.c.l.b16 %v401
    %v1847 = vunpack.c.h.b16 %v401
    %v1848 = vunpack.c.l.b16 %v402
    %v1849 = vunpack.c.l.b16 %v403
    %v1850 = vunpack.c.h.b16 %v403
    %v1851 = vunpack.c.l.b16 %v404
    %v1852 = vunpack.c.h.b16 %v404
    %v1853 = vunpack.c.l.b16 %v405
    %v1854 = vunpack.c.h.b16 %v405
    %v1855 = vunpack.c.l.b16 %v406
    %v1856 = vunpack.c.l.b16 %v407
    %v1857 = vunpack.c.h.b16 %v407
    %v1858 = vunpack.c.l.b16 %v408
    %v1859 = vunpack.c.h.b16 %v408
    %v1860 = vunpack.c.l.b16 %v409
    %v1861 = vunpack.c.h.b16 %v409
    %v1862 = vunpack.c.l.b16 %v410
    %v1863 = vunpack.c.l.b16 %v411
    %v1864 = vunpack.c.h.b16 %v411
    %v1865 = vunpack.c.l.b16 %v412
    %v1866 = vunpack.c.h.b16 %v412
    %v1867 = vunpack.c.l.b16 %v413
    %v1868 = vunpack.c.h.b16 %v413
    %v1869 = vunpack.c.l.b16 %v414
    %v1870 = vunpack.c.l.b16 %v415
    %v1871 = vunpack.c.h.b16 %v415
    %v1872 = vunpack.c.l.b16 %v416
    %v1873 = vunpack.c.h.b16 %v416
    %v1874 = vunpack.c.l.b16 %v417
    %v1875 = vunpack.c.h.b16 %v417
    %v1876 = vunpack.c.l.b16 %v418
    %v1877 = vunpack.c.l.b16 %v419
    %v1878 = vunpack.c.h.b16 %v419
    %v1879 = vunpack.c.l.b16 %v420
    %v1880 = vunpack.c.h.b16 %v420
    %v1881 = vunpack.c.l.b16 %v421
    %v1882 = vunpack.c.h.b16 %v421
    %v1883 = vunpack.c.l.b16 %v422
    %v1884 = vunpack.c.l.b16 %v423
    %v1885 = vunpack.c.h.b16 %v423
    %v1886 = vunpack.c.l.b16 %v424
    %v1887 = vunpack.c.h.b16 %v424
    %v1888 = vunpack.c.l.b16 %v425
    %v1889 = vunpack.c.h.b16 %v425
    %v1890 = vunpack.c.l.b16 %v426
    %v1891 = vunpack.c.l.b16 %v427
    %v1892 = vunpack.c.h.b16 %v427
    %v1893 = vunpack.c.l.b16 %v428
    %v1894 = vunpack.c.h.b16 %v428
    %v1895 = vunpack.c.l.b16 %v429
    %v1896 = vunpack.c.h.b16 %v429
    %v1897 = vunpack.c.l.b16 %v430
    %v1898 = vunpack.c.l.b16 %v431
    %v1899 = vunpack.c.h.b16 %v431
    %v1900 = vunpack.c.l.b16 %v432
    %v1901 = vunpack.c.h.b16 %v432
    %v1902 = vunpack.c.l.b16 %v433
    %v1903 = vunpack.c.h.b16 %v433
    %v1904 = vunpack.c.l.b16 %v434
    %v1905 = vunpack.c.l.b16 %v435
    %v1906 = vunpack.c.h.b16 %v435
    %v1907 = vunpack.c.l.b16 %v436
    %v1908 = vunpack.c.h.b16 %v436
    %v1909 = vunpack.c.l.b16 %v437
    %v1910 = vunpack.c.h.b16 %v437
    %v1911 = vunpack.c.l.b16 %v438
    %v1912 = vunpack.c.l.b16 %v439
    %v1913 = vunpack.c.h.b16 %v439
    %v1914 = vunpack.c.l.b16 %v440
    %v1915 = vunpack.c.h.b16 %v440
    %v1916 = vunpack.c.l.b16 %v441
    %v1917 = vunpack.c.h.b16 %v441
    %v1918 = vunpack.c.l.b16 %v442
    %v1919 = vunpack.c.l.b16 %v443
    %v1920 = vunpack.c.h.b16 %v443
    %v1921 = vunpack.c.l.b16 %v444
    %v1922 = vunpack.c.h.b16 %v444
    %v1923 = vunpack.c.l.b16 %v445
    %v1924 = vunpack.c.h.b16 %v445
    %v1925 = vunpack.c.l.b16 %v446
    %v1926 = vunpack.c.l.b16 %v447
    %v1927 = vunpack.c.h.b16 %v447
    %v1928 = vunpack.c.l.b16 %v448
    %v1929 = vunpack.c.h.b16 %v448
    %v1930 = vunpack.c.l.b16 %v449
    %v1931 = vunpack.c.h.b16 %v449
    %v1932 = vunpack.c.l.b16 %v450
    %v1933 = vunpack.c.l.b16 %v451
    %v1934 = vunpack.c.h.b16 %v451
    %v1935 = vunpack.c.l.b16 %v452
    %v1936 = vunpack.c.h.b16 %v452
    %v1937 = vunpack.c.l.b16 %v453
    %v1938 = vunpack.c.h.b16 %v453
    %v1939 = vunpack.c.l.b16 %v454
    %v1940 = vunpack.c.l.b16 %v455
    %v1941 = vunpack.c.h.b16 %v455
    %v1942 = vunpack.c.l.b16 %v456
    %v1943 = vunpack.c.h.b16 %v456
    %v1944 = vunpack.c.l.b16 %v457
    %v1945 = vunpack.c.h.b16 %v457
    %v1946 = vunpack.c.l.b16 %v458
    %v1947 = vunpack.c.l.b16 %v459
    %v1948 = vunpack.c.h.b16 %v459
    %v1949 = vunpack.c.l.b16 %v460
    %v1950 = vunpack.c.h.b16 %v460
    %v1951 = vunpack.c.l.b16 %v461
    %v1952 = vunpack.c.h.b16 %v461
    %v1953 = vunpack.c.l.b16 %v462
    %v1954 = vunpack.c.l.b16 %v463
    %v1955 = vunpack.c.h.b16 %v463
    %v1956 = vunpack.c.l.b16 %v464
    %v1957 = vunpack.c.h.b16 %v464
    %v1958 = vunpack.c.l.b16 %v465
    %v1959 = vunpack.c.h.b16 %v465
    %v1960 = vunpack.c.l.b16 %v466
    %v1961 = vunpack.c.l.b16 %v467
    %v1962 = vunpack.c.h.b16 %v467
    %v1963 = vunpack.c.l.b16 %v468
    %v1964 = vunpack.c.h.b16 %v468
    %v1965 = vunpack.c.l.b16 %v469
    %v1966 = vunpack.c.h.b16 %v469
    %v1967 = vunpack.c.l.b16 %v470
    %v1968 = vunpack.c.l.b16 %v471
    %v1969 = vunpack.c.h.b16 %v471
    %v1970 = vunpack.c.l.b16 %v472
    %v1971 = vunpack.c.h.b16 %v472
    %v1972 = vunpack.c.l.b16 %v473
    %v1973 = vunpack.c.h.b16 %v473
    %v1974 = vunpack.c.l.b16 %v474
    %v1975 = vunpack.c.l.b16 %v475
    %v1976 = vunpack.c.h.b16 %v475
    %v1977 = vunpack.c.l.b16 %v476
    %v1978 = vunpack.c.h.b16 %v476
    %v1979 = vunpack.c.l.b16 %v477
    %v1980 = vunpack.c.h.b16 %v477
    %v1981 = vunpack.c.l.b16 %v478
    %v1982 = vunpack.c.l.b16 %v479
    %v1983 = vunpack.c.h.b16 %v479
    %v1984 = vunpack.c.l.b16 %v480
    %v1985 = vunpack.c.h.b16 %v480
    %v1986 = vunpack.c.l.b16 %v481
    %v1987 = vunpack.c.h.b16 %v481
    %v1988 = vunpack.c.l.b16 %v482
    %v1989 = vunpack.c.l.b16 %v483
    %v1990 = vunpack.c.h.b16 %v483
    %v1991 = vunpack.c.l.b16 %v484
    %v1992 = vunpack.c.h.b16 %v484
    %v1993 = vunpack.c.l.b16 %v485
    %v1994 = vunpack.c.h.b16 %v485
    %v1995 = vunpack.c.l.b16 %v486
    %v1996 = vunpack.c.l.b16 %v487
    %v1997 = vunpack.c.h.b16 %v487
    %v1998 = vunpack.c.l.b16 %v488
    %v1999 = vunpack.c.h.b16 %v488
    %v2000 = vunpack.c.l.b16 %v489
    %v2001 = vunpack.c.h.b16 %v489
    %v2002 = vunpack.c.l.b16 %v490
    %v2003 = vunpack.c.l.b16 %v491
    %v2004 = vunpack.c.h.b16 %v491
    %v2005 = vunpack.c.l.b16 %v492
    %v2006 = vunpack.c.h.b16 %v492
    %v2007 = vunpack.c.l.b16 %v493
    %v2008 = vunpack.c.h.b16 %v493
    %v2009 = vunpack.c.l.b16 %v494
    %v2010 = vunpack.c.l.b16 %v495
    %v2011 = vunpack.c.h.b16 %v495
    %v2012 = vunpack.c.l.b16 %v496
    %v2013 = vunpack.c.h.b16 %v496
    %v2014 = vunpack.c.l.b16 %v497
    %v2015 = vunpack.c.h.b16 %v497
    %v2016 = vunpack.c.l.b16 %v498
    %v2017 = vunpack.c.l.b16 %v499
    %v2018 = vunpack.c.h.b16 %v499
    %v2019 = vunpack.c.l.b16 %v500
    %v2020 = vunpack.c.h.b16 %v500
    %v2021 = vunpack.c.l.b16 %v501
    %v2022 = vunpack.c.h.b16 %v501
    %v2023 = vunpack.c.l.b16 %v502
    %v2024 = vunpack.c.l.b16 %v503
    %v2025 = vunpack.c.h.b16 %v503
    %v2026 = vunpack.c.l.b16 %v504
    %v2027 = vunpack.c.h.b16 %v504
    %v2028 = vunpack.c.l.b16 %v505
    %v2029 = vunpack.c.h.b16 %v505
    %v2030 = vunpack.c.l.b16 %v506
    %v2031 = vunpack.c.l.b16 %v507
    %v2032 = vunpack.c.h.b16 %v507
    %v2033 = vunpack.c.l.b16 %v508
    %v2034 = vunpack.c.h.b16 %v508
    %v2035 = vunpack.c.l.b16 %v509
    %v2036 = vunpack.c.h.b16 %v509
    %v2037 = vunpack.c.l.b16 %v510
    %v2038 = vunpack.c.l.b16 %v511
    %v2039 = vunpack.c.h.b16 %v511
    %v2040 = vunpack.c.l.b16 %v512
    %v2041 = vunpack.c.h.b16 %v512
    %v2042 = vunpack.c.l.b16 %v513
    %v2043 = vunpack.c.h.b16 %v513
    %v2044 = vunpack.c.l.b16 %v514
    %v2045 = vunpack.c.l.b16 %v515
    %v2046 = vunpack.c.h.b16 %v515
    %v2047 = vunpack.c.l.b16 %v516
    %v2048 = vunpack.c.h.b16 %v516
    %v2049 = vunpack.c.l.b16 %v517
    %v2050 = vunpack.c.h.b16 %v517
    %v2051 = vunpack.c.l.b16 %v518
    %v2052 = vunpack.c.l.b16 %v519
    %v2053 = vunpack.c.h.b16 %v519
    %v2054 = vunpack.c.l.b16 %v520
    %v2055 = vunpack.c.h.b16 %v520
    %v2056 = vunpack.c.l.b16 %v521
    %v2057 = vunpack.c.h.b16 %v521
    %v2058 = vunpack.c.l.b16 %v522
    %v2059 = vunpack.c.l.b16 %v523
    %v2060 = vunpack.c.h.b16 %v523
    %v2061 = vunpack.c.l.b16 %v524
    %v2062 = vunpack.c.h.b16 %v524
    %v2063 = vunpack.c.l.b16 %v525
    %v2064 = vunpack.c.h.b16 %v525
    %v2065 = vunpack.c.l.b16 %v526
    %v2066 = vunpack.c.l.b16 %v527
    %v2067 = vunpack.c.h.b16 %v527
    %v2068 = vunpack.c.l.b16 %v528
    %v2069 = vunpack.c.h.b16 %v528
    %v2070 = vunpack.c.l.b16 %v529
    %v2071 = vunpack.c.h.b16 %v529
    %v2072 = vunpack.c.l.b16 %v530
    %v2073 = vunpack.c.l.b16 %v531
    %v2074 = vunpack.c.h.b16 %v531
    %v2075 = vunpack.c.l.b16 %v532
    %v2076 = vunpack.c.h.b16 %v532
    %v2077 = vunpack.c.l.b16 %v533
    %v2078 = vunpack.c.h.b16 %v533
    %v2079 = vunpack.c.l.b16 %v534
    %v2080 = vunpack.c.l.b16 %v535
    %v2081 = vunpack.c.h.b16 %v535
    %v2082 = vunpack.c.l.b16 %v536
    %v2083 = vunpack.c.h.b16 %v536
    %v2084 = vunpack.c.l.b16 %v537
    %v2085 = vunpack.c.h.b16 %v537
    %v2086 = vunpack.c.l.b16 %v538
    %v2087 = vunpack.c.l.b16 %v539
    %v2088 = vunpack.c.h.b16 %v539
    %v2089 = vunpack.c.l.b16 %v540
    %v2090 = vunpack.c.h.b16 %v540
    %v2091 = vunpack.c.l.b16 %v541
    %v2092 = vunpack.c.h.b16 %v541
    %v2093 = vunpack.c.l.b16 %v542
    %v2094 = vunpack.c.l.b16 %v543
    %v2095 = vunpack.c.h.b16 %v543
    %v2096 = vunpack.c.l.b16 %v544
    %v2097 = vunpack.c.h.b16 %v544
    %v2098 = vunpack.c.l.b16 %v545
    %v2099 = vunpack.c.h.b16 %v545
    %v2100 = vunpack.c.l.b16 %v546
    %v2101 = vunpack.c.l.b16 %v547
    %v2102 = vunpack.c.h.b16 %v547
    %v2103 = vunpack.c.l.b16 %v548
    %v2104 = vunpack.c.h.b16 %v548
    %v2105 = vunpack.c.l.b16 %v549
    %v2106 = vunpack.c.h.b16 %v549
    %v2107 = vunpack.c.l.b16 %v550
    %v2108 = vunpack.c.l.b16 %v551
    %v2109 = vunpack.c.h.b16 %v551
    %v2110 = vunpack.c.l.b16 %v552
    %v2111 = vunpack.c.h.b16 %v552
    %v2112 = vunpack.c.l.b16 %v553
    %v2113 = vunpack.c.h.b16 %v553
    %v2114 = vunpack.c.l.b16 %v554
    %v2115 = vunpack.c.l.b16 %v555
    %v2116 = vunpack.c.h.b16 %v555
    %v2117 = vunpack.c.l.b16 %v556
    %v2118 = vunpack.c.h.b16 %v556
    %v2119 = vunpack.c.l.b16 %v557
    %v2120 = vunpack.c.h.b16 %v557
    %v2121 = vunpack.c.l.b16 %v558
    %v2122 = vunpack.c.l.b16 %v559
    %v2123 = vunpack.c.h.b16 %v559
    %v2124 = vunpack.c.l.b16 %v560
    %v2125 = vunpack.c.h.b16 %v560
    %v2126 = vunpack.c.l.b16 %v561
    %v2127 = vunpack.c.h.b16 %v561
    %v2128 = vunpack.c.l.b16 %v562
    %v2129 = vunpack.c.l.b16 %v563
    %v2130 = vunpack.c.h.b16 %v563
    %v2131 = vunpack.c.l.b16 %v564
    %v2132 = vunpack.c.h.b16 %v564
    %v2133 = vunpack.c.l.b16 %v565
    %v2134 = vunpack.c.h.b16 %v565
    %v2135 = vunpack.c.l.b16 %v566
    %v2136 = vunpack.c.l.b16 %v567
    %v2137 = vunpack.c.h.b16 %v567
    %v2138 = vunpack.c.l.b16 %v568
    %v2139 = vunpack.c.h.b16 %v568
    %v2140 = vunpack.c.l.b16 %v569
    %v2141 = vunpack.c.h.b16 %v569
    %v2142 = vunpack.c.l.b16 %v570
    %v2143 = vunpack.c.l.b16 %v571
    %v2144 = vunpack.c.h.b16 %v571
    %v2145 = vunpack.c.l.b16 %v572
    %v2146 = vunpack.c.h.b16 %v572
    %v2147 = vunpack.c.l.b16 %v573
    %v2148 = vunpack.c.h.b16 %v573
    %v2149 = vunpack.c.l.b16 %v574
    %v2150 = vunpack.c.l.b16 %v575
    %v2151 = vunpack.c.h.b16 %v575
    %v2152 = vunpack.c.l.b16 %v576
    %v2153 = vunpack.c.h.b16 %v576
    %v2154 = vunpack.c.l.b16 %v577
    %v2155 = vunpack.c.h.b16 %v577
    %v2156 = vunpack.c.l.b16 %v578
    %v2157 = vunpack.c.l.b16 %v579
    %v2158 = vunpack.c.h.b16 %v579
    %v2159 = vunpack.c.l.b16 %v580
    %v2160 = vunpack.c.h.b16 %v580
    %v2161 = vunpack.c.l.b16 %v581
    %v2162 = vunpack.c.h.b16 %v581
    %v2163 = vunpack.c.l.b16 %v582
    %v2164 = vunpack.c.l.b16 %v583
    %v2165 = vunpack.c.h.b16 %v583
    %v2166 = vunpack.c.l.b16 %v584
    %v2167 = vunpack.c.h.b16 %v584
    %v2168 = vunpack.c.l.b16 %v585
    %v2169 = vunpack.c.h.b16 %v585
    %v2170 = vunpack.c.l.b16 %v586
    %v2171 = vunpack.c.l.b16 %v587
    %v2172 = vunpack.c.h.b16 %v587
    %v2173 = vunpack.c.l.b16 %v588
    %v2174 = vunpack.c.h.b16 %v588
    %v2175 = vunpack.c.l.b16 %v589
    %v2176 = vunpack.c.h.b16 %v589
    %v2177 = vunpack.c.l.b16 %v590
    %v2178 = vunpack.c.l.b16 %v591
    %v2179 = vunpack.c.h.b16 %v591
    %v2180 = vunpack.c.l.b16 %v592
    %v2181 = vunpack.c.h.b16 %v592
    %v2182 = vunpack.c.l.b16 %v593
    %v2183 = vunpack.c.h.b16 %v593
    %v2184 = vunpack.c.l.b16 %v594
    %v2185 = vunpack.c.l.b16 %v595
    %v2186 = vunpack.c.h.b16 %v595
    %v2187 = vunpack.c.l.b16 %v596
    %v2188 = vunpack.c.h.b16 %v596
    %v2189 = vunpack.c.l.b16 %v597
    %v2190 = vunpack.c.h.b16 %v597
    %v2191 = vunpack.c.l.b16 %v598
    %v2192 = vunpack.c.l.b16 %v599
    %v2193 = vunpack.c.h.b16 %v599
    %v2194 = vunpack.c.l.b16 %v600
    %v2195 = vunpack.c.h.b16 %v600
    %v2196 = vunpack.c.l.b16 %v601
    %v2197 = vunpack.c.h.b16 %v601
    %v2198 = vunpack.c.l.b16 %v602
    %v2199 = vunpack.c.l.b16 %v603
    %v2200 = vunpack.c.h.b16 %v603
    %v2201 = vunpack.c.l.b16 %v604
    %v2202 = vunpack.c.h.b16 %v604
    %v2203 = vunpack.c.l.b16 %v605
    %v2204 = vunpack.c.h.b16 %v605
    %v2205 = vunpack.c.l.b16 %v606
    %v2206 = vunpack.c.l.b16 %v607
    %v2207 = vunpack.c.h.b16 %v607
    %v2208 = vunpack.c.l.b16 %v608
    %v2209 = vunpack.c.h.b16 %v608
    %v2210 = vunpack.c.l.b16 %v609
    %v2211 = vunpack.c.h.b16 %v609
    %v2212 = vunpack.c.l.b16 %v610
    %v2213 = vunpack.c.l.b16 %v611
    %v2214 = vunpack.c.h.b16 %v611
    %v2215 = vunpack.c.l.b16 %v612
    %v2216 = vunpack.c.h.b16 %v612
    %v2217 = vunpack.c.l.b16 %v613
    %v2218 = vunpack.c.h.b16 %v613
    %v2219 = vunpack.c.l.b16 %v614
    %v2220 = vunpack.c.l.b16 %v615
    %v2221 = vunpack.c.h.b16 %v615
    %v2222 = vunpack.c.l.b16 %v616
    %v2223 = vunpack.c.h.b16 %v616
    %v2224 = vunpack.c.l.b16 %v617
    %v2225 = vunpack.c.h.b16 %v617
    %v2226 = vunpack.c.l.b16 %v618
    %v2227 = vunpack.c.l.b16 %v619
    %v2228 = vunpack.c.h.b16 %v619
    %v2229 = vunpack.c.l.b16 %v620
    %v2230 = vunpack.c.h.b16 %v620
    %v2231 = vunpack.c.l.b16 %v621
    %v2232 = vunpack.c.h.b16 %v621
    %v2233 = vunpack.c.l.b16 %v622
    %v2234 = vunpack.c.l.b16 %v623
    %v2235 = vunpack.c.h.b16 %v623
    %v2236 = vunpack.c.l.b16 %v624
    %v2237 = vunpack.c.h.b16 %v624
    %v2238 = vunpack.c.l.b16 %v625
    %v2239 = vunpack.c.h.b16 %v625
    %v2240 = vunpack.c.l.b16 %v626
    %v2241 = vunpack.c.l.b16 %v627
    %v2242 = vunpack.c.h.b16 %v627
    %v2243 = vunpack.c.l.b16 %v628
    %v2244 = vunpack.c.h.b16 %v628
    %v2245 = vunpack.c.l.b16 %v629
    %v2246 = vunpack.c.h.b16 %v629
    %v2247 = vunpack.c.l.b16 %v630
    %v2248 = vunpack.c.l.b16 %v631
    %v2249 = vunpack.c.h.b16 %v631
    %v2250 = vunpack.c.l.b16 %v632
    %v2251 = vunpack.c.h.b16 %v632
    %v2252 = vunpack.c.l.b16 %v633
    %v2253 = vunpack.c.h.b16 %v633
    %v2254 = vunpack.c.l.b16 %v634
    %v2255 = vunpack.c.l.b16 %v635
    %v2256 = vunpack.c.h.b16 %v635
    %v2257 = vunpack.c.l.b16 %v636
    %v2258 = vunpack.c.h.b16 %v636
    %v2259 = vunpack.c.l.b16 %v637
    %v2260 = vunpack.c.h.b16 %v637
    %v2261 = vunpack.c.l.b16 %v638
    %v2262 = vunpack.c.l.b16 %v639
    %v2263 = vunpack.c.h.b16 %v639
    %v2264 = vunpack.c.l.b16 %v640
    %v2265 = vunpack.c.h.b16 %v640
    %v2266 = vunpack.c.l.b16 %v641
    %v2267 = vunpack.c.h.b16 %v641
    %v2268 = vunpack.c.l.b16 %v642
    %v2269 = vunpack.c.l.b16 %v643
    %v2270 = vunpack.c.h.b16 %v643
    %v2271 = vunpack.c.l.b16 %v644
    %v2272 = vunpack.c.h.b16 %v644
    %v2273 = vunpack.c.l.b16 %v645
    %v2274 = vunpack.c.h.b16 %v645
    %v2275 = vunpack.c.l.b16 %v646
    %v2276 = vunpack.c.l.b16 %v647
    %v2277 = vunpack.c.h.b16 %v647
    %v2278 = vunpack.c.l.b16 %v648
    %v2279 = vunpack.c.h.b16 %v648
    %v2280 = vunpack.c.l.b16 %v649
    %v2281 = vunpack.c.h.b16 %v649
    %v2282 = vunpack.c.l.b16 %v650
    %v2283 = vunpack.c.l.b16 %v651
    %v2284 = vunpack.c.h.b16 %v651
    %v2285 = vunpack.c.l.b16 %v652
    %v2286 = vunpack.c.h.b16 %v652
    %v2287 = vunpack.c.l.b16 %v653
    %v2288 = vunpack.c.h.b16 %v653
    %v2289 = vunpack.c.l.b16 %v654
    %v2290 = vunpack.c.l.b16 %v655
    %v2291 = vunpack.c.h.b16 %v655
    %v2292 = vunpack.c.l.b16 %v656
    %v2293 = vunpack.c.h.b16 %v656
    %v2294 = vunpack.c.l.b16 %v657
    %v2295 = vunpack.c.h.b16 %v657
    %v2296 = vunpack.c.l.b16 %v658
    %v2297 = vunpack.c.l.b16 %v659
    %v2298 = vunpack.c.h.b16 %v659
    %v2299 = vunpack.c.l.b16 %v660
    %v2300 = vunpack.c.h.b16 %v660
    %v2301 = vunpack.c.l.b16 %v661
    %v2302 = vunpack.c.h.b16 %v661
    %v2303 = vunpack.c.l.b16 %v662
    %v2304 = vunpack.c.l.b16 %v663
    %v2305 = vunpack.c.h.b16 %v663
    %v2306 = vunpack.c.l.b16 %v664
    %v2307 = vunpack.c.h.b16 %v664
    %v2308 = vunpack.c.l.b16 %v665
    %v2309 = vunpack.c.h.b16 %v665
    %v2310 = vunpack.c.l.b16 %v666
    %v2311 = vunpack.c.l.b16 %v667
    %v2312 = vunpack.c.h.b16 %v667
    %v2313 = vunpack.c.l.b16 %v668
    %v2314 = vunpack.c.h.b16 %v668
    %v2315 = vunpack.c.l.b16 %v669
    %v2316 = vunpack.c.h.b16 %v669
    %v2317 = vunpack.c.l.b16 %v670
    %v2318 = vunpack.c.l.b16 %v671
    %v2319 = vunpack.c.h.b16 %v671
    %v2320 = vunpack.c.l.b16 %v672
    %v2321 = vunpack.c.h.b16 %v672
    %v2322 = vunpack.c.l.b16 %v673
    %v2323 = vunpack.c.h.b16 %v673
    %v2324 = vunpack.c.l.b16 %v674
    %v2325 = vunpack.c.l.b16 %v675
    %v2326 = vunpack.c.h.b16 %v675
    %v2327 = vunpack.c.l.b16 %v676
    %v2328 = vunpack.c.h.b16 %v676
    %v2329 = vunpack.c.l.b16 %v677
    %v2330 = vunpack.c.h.b16 %v677
    %v2331 = vunpack.c.l.b16 %v678
    %v2332 = vunpack.c.l.b16 %v679
    %v2333 = vunpack.c.h.b16 %v679
    %v2334 = vunpack.c.l.b16 %v680
    %v2335 = vunpack.c.h.b16 %v680
    %v2336 = vunpack.c.l.b16 %v681
    %v2337 = vunpack.c.h.b16 %v681
    %v2338 = vunpack.c.l.b16 %v682
    %v2339 = vunpack.c.l.b16 %v683
    %v2340 = vunpack.c.h.b16 %v683
    %v2341 = vunpack.c.l.b16 %v684
    %v2342 = vunpack.c.h.b16 %v684
    %v2343 = vunpack.c.l.b16 %v685
    %v2344 = vunpack.c.h.b16 %v685
    %v2345 = vunpack.c.l.b16 %v686
    %v2346 = vunpack.c.l.b16 %v687
    %v2347 = vunpack.c.h.b16 %v687
    %v2348 = vunpack.c.l.b16 %v688
    %v2349 = vunpack.c.h.b16 %v688
    %v2350 = vunpack.c.l.b16 %v689
    %v2351 = vunpack.c.h.b16 %v689
    %v2352 = vunpack.c.l.b16 %v690
    %v2353 = vunpack.c.l.b16 %v691
    %v2354 = vunpack.c.h.b16 %v691
    %v2355 = vunpack.c.l.b16 %v692
    %v2356 = vunpack.c.h.b16 %v692
    %v2357 = vunpack.c.l.b16 %v693
    %v2358 = vunpack.c.h.b16 %v693
    %v2359 = vunpack.c.l.b16 %v694
    %v2360 = vunpack.c.l.b16 %v695
    %v2361 = vunpack.c.h.b16 %v695
    %v2362 = vunpack.c.l.b16 %v696
    %v2363 = vunpack.c.h.b16 %v696
    %v2364 = vunpack.c.l.b16 %v697
    %v2365 = vunpack.c.h.b16 %v697
    %v2366 = vunpack.c.l.b16 %v698
    %v2367 = vunpack.c.l.b16 %v699
    %v2368 = vunpack.c.h.b16 %v699
    %v2369 = vunpack.c.l.b16 %v700
    %v2370 = vunpack.c.h.b16 %v700
    %v2371 = vunpack.c.l.b16 %v701
    %v2372 = vunpack.c.h.b16 %v701
    %v2373 = vunpack.c.l.b16 %v702
    %v2374 = vunpack.c.l.b16 %v703
    %v2375 = vunpack.c.h.b16 %v703
    %v2376 = vunpack.c.l.b16 %v704
    %v2377 = vunpack.c.h.b16 %v704
    %v2378 = vunpack.c.l.b16 %v705
    %v2379 = vunpack.c.h.b16 %v705
    %v2380 = vunpack.c.l.b16 %v706
    %v2381 = vunpack.c.l.b16 %v707
    %v2382 = vunpack.c.h.b16 %v707
    %v2383 = vunpack.c.l.b16 %v708
    %v2384 = vunpack.c.h.b16 %v708
    %v2385 = vunpack.c.l.b16 %v709
    %v2386 = vunpack.c.h.b16 %v709
    %v2387 = vunpack.c.l.b16 %v710
    %v2388 = vunpack.c.l.b16 %v711
    %v2389 = vunpack.c.h.b16 %v711
    %v2390 = vunpack.c.l.b16 %v712
    %v2391 = vunpack.c.h.b16 %v712
    %v2392 = vunpack.c.l.b16 %v713
    %v2393 = vunpack.c.h.b16 %v713
    %v2394 = vunpack.c.l.b16 %v714
    %v2395 = vunpack.c.l.b16 %v715
    %v2396 = vunpack.c.h.b16 %v715
    %v2397 = vunpack.c.l.b16 %v716
    %v2398 = vunpack.c.h.b16 %v716
    %v2399 = vunpack.c.l.b16 %v717
    %v2400 = vunpack.c.h.b16 %v717
    %v2401 = vunpack.c.l.b16 %v718
    %v2402 = vunpack.c.l.b16 %v719
    %v2403 = vunpack.c.h.b16 %v719
    %v2404 = vunpack.c.l.b16 %v720
    %v2405 = vunpack.c.h.b16 %v720
    %v2406 = vunpack.c.l.b16 %v721
    %v2407 = vunpack.c.h.b16 %v721
    %v2408 = vunpack.c.l.b16 %v722
    %v2409 = vunpack.c.l.b16 %v723
    %v2410 = vunpack.c.h.b16 %v723
    %v2411 = vunpack.c.l.b16 %v724
    %v2412 = vunpack.c.h.b16 %v724
    %v2413 = vunpack.c.l.b16 %v725
    %v2414 = vunpack.c.h.b16 %v725
    %v2415 = vunpack.c.l.b16 %v726
    %v2416 = vunpack.c.l.b16 %v727
    %v2417 = vunpack.c.h.b16 %v727
    %v2418 = vunpack.c.l.b16 %v728
    %v2419 = vunpack.c.h.b16 %v728
    %v2420 = vunpack.c.l.b16 %v729
    %v2421 = vunpack.c.h.b16 %v729
    %v2422 = vunpack.c.l.b16 %v730
    %v2423 = vunpack.c.l.b16 %v731
    %v2424 = vunpack.c.h.b16 %v731
    %v2425 = vunpack.c.l.b16 %v732
    %v2426 = vunpack.c.h.b16 %v732
    %v2427 = vunpack.c.l.b16 %v733
    %v2428 = vunpack.c.h.b16 %v733
    %v2429 = vunpack.c.l.b16 %v734
    %v2430 = vunpack.c.l.b16 %v735
    %v2431 = vunpack.c.h.b16 %v735
    %v2432 = vunpack.c.l.b16 %v736
    %v2433 = vunpack.c.h.b16 %v736
    %v2434 = vunpack.c.l.b16 %v737
    %v2435 = vunpack.c.h.b16 %v737
    %v2436 = vunpack.c.l.b16 %v738
    %v2437 = vunpack.c.l.b16 %v739
    %v2438 = vunpack.c.h.b16 %v739
    %v2439 = vunpack.c.l.b16 %v740
    %v2440 = vunpack.c.h.b16 %v740
    %v2441 = vunpack.c.l.b16 %v741
    %v2442 = vunpack.c.h.b16 %v741
    %v2443 = vunpack.c.l.b16 %v742
    %v2444 = vunpack.c.l.b16 %v743
    %v2445 = vunpack.c.h.b16 %v743
    %v2446 = vunpack.c.l.b16 %v744
    %v2447 = vunpack.c.h.b16 %v744
    %v2448 = vunpack.c.l.b16 %v745
    %v2449 = vunpack.c.h.b16 %v745
    %v2450 = vunpack.c.l.b16 %v746
    %v2451 = vunpack.c.l.b16 %v747
    %v2452 = vunpack.c.h.b16 %v747
    %v2453 = vunpack.c.l.b16 %v748
    %v2454 = vunpack.c.h.b16 %v748
    %v2455 = vunpack.c.l.b16 %v749
    %v2456 = vunpack.c.h.b16 %v749
    %v2457 = vunpack.c.l.b16 %v750
    %v2458 = vunpack.c.l.b16 %v751
    %v2459 = vunpack.c.h.b16 %v751
    %v2460 = vunpack.c.l.b16 %v752
    %v2461 = vunpack.c.h.b16 %v752
    %v2462 = vunpack.c.l.b16 %v753
    %v2463 = vunpack.c.h.b16 %v753
    %v2464 = vunpack.c.l.b16 %v754
    %v2465 = vunpack.c.l.b16 %v755
    %v2466 = vunpack.c.h.b16 %v755
    %v2467 = vunpack.c.l.b16 %v756
    %v2468 = vunpack.c.h.b16 %v756
    %v2469 = vunpack.c.l.b16 %v757
    %v2470 = vunpack.c.h.b16 %v757
    %v2471 = vunpack.c.l.b16 %v758
    %v2472 = vunpack.c.l.b16 %v759
    %v2473 = vunpack.c.h.b16 %v759
    %v2474 = vunpack.c.l.b16 %v760
    %v2475 = vunpack.c.h.b16 %v760
    %v2476 = vunpack.c.l.b16 %v761
    %v2477 = vunpack.c.h.b16 %v761
    %v2478 = vunpack.c.l.b16 %v762
    %v2479 = vunpack.c.l.b16 %v763
    %v2480 = vunpack.c.h.b16 %v763
    %v2481 = vunpack.c.l.b16 %v764
    %v2482 = vunpack.c.h.b16 %v764
    %v2483 = vunpack.c.l.b16 %v765
    %v2484 = vunpack.c.h.b16 %v765
    %v2485 = vunpack.c.l.b16 %v766
    %v2486 = vunpack.c.l.b16 %v767
    %v2487 = vunpack.c.h.b16 %v767
    %v2488 = vunpack.c.l.b16 %v768
    %v2489 = vunpack.c.h.b16 %v768
    %v2490 = vunpack.c.l.b16 %v769
    %v2491 = vunpack.c.h.b16 %v769
    %v2492 = vunpack.c.l.b16 %v770
    %v2493 = vunpack.c.l.b16 %v771
    %v2494 = vunpack.c.h.b16 %v771
    %v2495 = vunpack.c.l.b16 %v772
    %v2496 = vunpack.c.h.b16 %v772
    %v2497 = vunpack.c.l.b16 %v773
    %v2498 = vunpack.c.h.b16 %v773
    %v2499 = vunpack.c.l.b16 %v774
    %v2500 = vunpack.c.l.b16 %v775
    %v2501 = vunpack.c.h.b16 %v775
    %v2502 = vunpack.c.l.b16 %v776
    %v2503 = vunpack.c.h.b16 %v776
    %v2504 = vunpack.c.l.b16 %v777
    %v2505 = vunpack.c.h.b16 %v777
    %v2506 = vunpack.c.l.b16 %v778
    %v2507 = vunpack.c.l.b16 %v779
    %v2508 = vunpack.c.h.b16 %v779
    %v2509 = vunpack.c.l.b16 %v780
    %v2510 = vunpack.c.h.b16 %v780
    %v2511 = vunpack.c.l.b16 %v781
    %v2512 = vunpack.c.h.b16 %v781
    %v2513 = vunpack.c.l.b16 %v782
    %v2514 = vunpack.c.l.b16 %v783
    %v2515 = vunpack.c.h.b16 %v783
    %v2516 = vunpack.c.l.b16 %v784
    %v2517 = vunpack.c.h.b16 %v784
    %v2518 = vunpack.c.l.b16 %v785
    %v2519 = vunpack.c.h.b16 %v785
    %v2520 = vunpack.c.l.b16 %v786
    %v2521 = vunpack.c.l.b16 %v787
    %v2522 = vunpack.c.h.b16 %v787
    %v2523 = vunpack.c.l.b16 %v788
    %v2524 = vunpack.c.h.b16 %v788
    %v2525 = vunpack.c.l.b16 %v789
    %v2526 = vunpack.c.h.b16 %v789
    %v2527 = vunpack.c.l.b16 %v790
    %v2528 = vunpack.c.l.b16 %v791
    %v2529 = vunpack.c.h.b16 %v791
    %v2530 = vunpack.c.l.b16 %v792
    %v2531 = vunpack.c.h.b16 %v792
    %v2532 = vunpack.c.l.b16 %v793
    %v2533 = vunpack.c.h.b16 %v793
    %v2534 = vunpack.c.l.b16 %v794
    %v2535 = vunpack.c.l.b16 %v795
    %v2536 = vunpack.c.h.b16 %v795
    %v2537 = vunpack.c.l.b16 %v796
    %v2538 = vunpack.c.h.b16 %v796
    %v2539 = vunpack.c.l.b16 %v797
    %v2540 = vunpack.c.h.b16 %v797
    %v2541 = vunpack.c.l.b16 %v798
    %v2542 = vunpack.c.l.b16 %v799
    %v2543 = vunpack.c.h.b16 %v799
    %v2544 = vunpack.c.l.b16 %v800
    %v2545 = vunpack.c.h.b16 %v800
    %v2546 = vunpack.c.l.b16 %v801
    %v2547 = vunpack.c.h.b16 %v801
    %v2548 = vunpack.c.l.b16 %v802
    %v2549 = vunpack.c.l.b16 %v803
    %v2550 = vunpack.c.h.b16 %v803
    %v2551 = vunpack.c.l.b16 %v804
    %v2552 = vunpack.c.h.b16 %v804
    %v2553 = vunpack.c.l.b16 %v805
    %v2554 = vunpack.c.h.b16 %v805
    %v2555 = vunpack.c.l.b16 %v806
    %v2556 = vunpack.c.l.b16 %v807
    %v2557 = vunpack.c.h.b16 %v807
    %v2558 = vunpack.c.l.b16 %v808
    %v2559 = vunpack.c.h.b16 %v808
    %v2560 = vunpack.c.l.b16 %v809
    %v2561 = vunpack.c.h.b16 %v809
    %v2562 = vunpack.c.l.b16 %v810
    %v2563 = vunpack.c.l.b16 %v811
    %v2564 = vunpack.c.h.b16 %v811
    %v2565 = vunpack.c.l.b16 %v812
    %v2566 = vunpack.c.h.b16 %v812
    %v2567 = vunpack.c.l.b16 %v813
    %v2568 = vunpack.c.h.b16 %v813
    %v2569 = vunpack.c.l.b16 %v814
    %v2570 = vunpack.c.l.b16 %v815
    %v2571 = vunpack.c.h.b16 %v815
    %v2572 = vunpack.c.l.b16 %v816
    %v2573 = vunpack.c.h.b16 %v816
    %v2574 = vunpack.c.l.b16 %v817
    %v2575 = vunpack.c.h.b16 %v817
    %v2576 = vunpack.c.l.b16 %v818
    %v2577 = vunpack.c.l.b16 %v819
    %v2578 = vunpack.c.h.b16 %v819
    %v2579 = vunpack.c.l.b16 %v820
    %v2580 = vunpack.c.h.b16 %v820
    %v2581 = vunpack.c.l.b16 %v821
    %v2582 = vunpack.c.h.b16 %v821
    %v2583 = vunpack.c.l.b16 %v822
    %v2584 = vunpack.c.l.b16 %v823
    %v2585 = vunpack.c.h.b16 %v823
    %v2586 = vunpack.c.l.b16 %v824
    %v2587 = vunpack.c.h.b16 %v824
    %v2588 = vunpack.c.l.b16 %v825
    %v2589 = vunpack.c.h.b16 %v825
    %v2590 = vunpack.c.l.b16 %v826
    %v2591 = vunpack.c.l.b16 %v827
    %v2592 = vunpack.c.h.b16 %v827
    %v2593 = vunpack.c.l.b16 %v828
    %v2594 = vunpack.c.h.b16 %v828
    %v2595 = vunpack.c.l.b16 %v829
    %v2596 = vunpack.c.h.b16 %v829
    %v2597 = vunpack.c.l.b16 %v830
    %v2598 = vunpack.c.l.b16 %v831
    %v2599 = vunpack.c.h.b16 %v831
    %v2600 = vunpack.c.l.b16 %v832
    %v2601 = vunpack.c.h.b16 %v832
    %v2602 = vunpack.c.l.b16 %v833
    %v2603 = vunpack.c.h.b16 %v833
    %v2604 = vunpack.c.l.b16 %v834
    %v2605 = vunpack.c.l.b16 %v835
    %v2606 = vunpack.c.h.b16 %v835
    %v2607 = vunpack.c.l.b16 %v836
    %v2608 = vunpack.c.h.b16 %v836
    %v2609 = vunpack.c.l.b16 %v837
    %v2610 = vunpack.c.h.b16 %v837
    %v2611 = vunpack.c.l.b16 %v838
    %v2612 = vunpack.c.l.b16 %v839
    %v2613 = vunpack.c.h.b16 %v839
    %v2614 = vunpack.c.l.b16 %v840
    %v2615 = vunpack.c.h.b16 %v840
    %v2616 = vunpack.c.l.b16 %v841
    %v2617 = vunpack.c.h.b16 %v841
    %v2618 = vunpack.c.l.b16 %v842
    %v2619 = vpack.c.b16 %v1506, %v1499
    %v2620 = vpack.c.b16 %v1507, %v1500
    %v2621 = vpack.c.b16 %v1508, %v1501
    %v2622 = vpack.c.b16 %v1509, %v1502
    %v2623 = vpack.c.b16 %v1510, %v1503
    %v2624 = vpack.c.b16 %v1511, %v1504
    %v2625 = vpack.c.b16 %v1512, %v1505
    %v2626 = vpack.c.b16 %v1520, %v1513
    %v2627 = vpack.c.b16 %v1521, %v1514
    %v2628 = vpack.c.b16 %v1522, %v1515
    %v2629 = vpack.c.b16 %v1523, %v1516
    %v2630 = vpack.c.b16 %v1524, %v1517
    %v2631 = vpack.c.b16 %v1525, %v1518
    %v2632 = vpack.c.b16 %v1526, %v1519
    %v2633 = vpack.c.b16 %v1534, %v1527
    %v2634 = vpack.c.b16 %v1535, %v1528
    %v2635 = vpack.c.b16 %v1536, %v1529
    %v2636 = vpack.c.b16 %v1537, %v1530
    %v2637 = vpack.c.b16 %v1538, %v1531
    %v2638 = vpack.c.b16 %v1539, %v1532
    %v2639 = vpack.c.b16 %v1540, %v1533
    %v2640 = vpack.c.b16 %v1548, %v1541
    %v2641 = vpack.c.b16 %v1549, %v1542
    %v2642 = vpack.c.b16 %v1550, %v1543
    %v2643 = vpack.c.b16 %v1551, %v1544
    %v2644 = vpack.c.b16 %v1552, %v1545
    %v2645 = vpack.c.b16 %v1553, %v1546
    %v2646 = vpack.c.b16 %v1554, %v1547
    %v2647 = vpack.c.b16 %v1562, %v1555
    %v2648 = vpack.c.b16 %v1563, %v1556
    %v2649 = vpack.c.b16 %v1564, %v1557
    %v2650 = vpack.c.b16 %v1565, %v1558
    %v2651 = vpack.c.b16 %v1566, %v1559
    %v2652 = vpack.c.b16 %v1567, %v1560
    %v2653 = vpack.c.b16 %v1568, %v1561
    %v2654 = vpack.c.b16 %v1576, %v1569
    %v2655 = vpack.c.b16 %v1577, %v1570
    %v2656 = vpack.c.b16 %v1578, %v1571
    %v2657 = vpack.c.b16 %v1579, %v1572
    %v2658 = vpack.c.b16 %v1580, %v1573
    %v2659 = vpack.c.b16 %v1581, %v1574
    %v2660 = vpack.c.b16 %v1582, %v1575
    %v2661 = vpack.c.b16 %v1590, %v1583
    %v2662 = vpack.c.b16 %v1591, %v1584
    %v2663 = vpack.c.b16 %v1592, %v1585
    %v2664 = vpack.c.b16 %v1593, %v1586
    %v2665 = vpack.c.b16 %v1594, %v1587
    %v2666 = vpack.c.b16 %v1595, %v1588
    %v2667 = vpack.c.b16 %v1596, %v1589
    %v2668 = vpack.c.b16 %v1604, %v1597
    %v2669 = vpack.c.b16 %v1605, %v1598
    %v2670 = vpack.c.b16 %v1606, %v1599
    %v2671 = vpack.c.b16 %v1607, %v1600
    %v2672 = vpack.c.b16 %v1608, %v1601
    %v2673 = vpack.c.b16 %v1609, %v1602
    %v2674 = vpack.c.b16 %v1610, %v1603
    %v2675 = vpack.c.b16 %v1618, %v1611
    %v2676 = vpack.c.b16 %v1619, %v1612
    %v2677 = vpack.c.b16 %v1620, %v1613
    %v2678 = vpack.c.b16 %v1621, %v1614
    %v2679 = vpack.c.b16 %v1622, %v1615
    %v2680 = vpack.c.b16 %v1623, %v1616
    %v2681 = vpack.c.b16 %v1624, %v1617
    %v2682 = vpack.c.b16 %v1632, %v1625
    %v2683 = vpack.c.b16 %v1633, %v1626
    %v2684 = vpack.c.b16 %v1634, %v1627
    %v2685 = vpack.c.b16 %v1635, %v1628
    %v2686 = vpack.c.b16 %v1636, %v1629
    %v2687 = vpack.c.b16 %v1637, %v1630
    %v2688 = vpack.c.b16 %v1638, %v1631
    %v2689 = vpack.c.b16 %v1646, %v1639
    %v2690 = vpack.c.b16 %v1647, %v1640
    %v2691 = vpack.c.b16 %v1648, %v1641
    %v2692 = vpack.c.b16 %v1649, %v1642
    %v2693 = vpack.c.b16 %v1650, %v1643
    %v2694 = vpack.c.b16 %v1651, %v1644
    %v2695 = vpack.c.b16 %v1652, %v1645
    %v2696 = vpack.c.b16 %v1660, %v1653
    %v2697 = vpack.c.b16 %v1661, %v1654
    %v2698 = vpack.c.b16 %v1662, %v1655
    %v2699 = vpack.c.b16 %v1663, %v1656
    %v2700 = vpack.c.b16 %v1664, %v1657
    %v2701 = vpack.c.b16 %v1665, %v1658
    %v2702 = vpack.c.b16 %v1666, %v1659
    %v2703 = vpack.c.b16 %v1674, %v1667
    %v2704 = vpack.c.b16 %v1675, %v1668
    %v2705 = vpack.c.b16 %v1676, %v1669
    %v2706 = vpack.c.b16 %v1677, %v1670
    %v2707 = vpack.c.b16 %v1678, %v1671
    %v2708 = vpack.c.b16 %v1679, %v1672
    %v2709 = vpack.c.b16 %v1680, %v1673
    %v2710 = vpack.c.b16 %v1688, %v1681
    %v2711 = vpack.c.b16 %v1689, %v1682
    %v2712 = vpack.c.b16 %v1690, %v1683
    %v2713 = vpack.c.b16 %v1691, %v1684
    %v2714 = vpack.c.b16 %v1692, %v1685
    %v2715 = vpack.c.b16 %v1693, %v1686
    %v2716 = vpack.c.b16 %v1694, %v1687
    %v2717 = vpack.c.b16 %v1702, %v1695
    %v2718 = vpack.c.b16 %v1703, %v1696
    %v2719 = vpack.c.b16 %v1704, %v1697
    %v2720 = vpack.c.b16 %v1705, %v1698
    %v2721 = vpack.c.b16 %v1706, %v1699
    %v2722 = vpack.c.b16 %v1707, %v1700
    %v2723 = vpack.c.b16 %v1708, %v1701
    %v2724 = vpack.c.b16 %v1716, %v1709
    %v2725 = vpack.c.b16 %v1717, %v1710
    %v2726 = vpack.c.b16 %v1718, %v1711
    %v2727 = vpack.c.b16 %v1719, %v1712
    %v2728 = vpack.c.b16 %v1720, %v1713
    %v2729 = vpack.c.b16 %v1721, %v1714
    %v2730 = vpack.c.b16 %v1722, %v1715
    %v2731 = vpack.c.b16 %v1730, %v1723
    %v2732 = vpack.c.b16 %v1731, %v1724
    %v2733 = vpack.c.b16 %v1732, %v1725
    %v2734 = vpack.c.b16 %v1733, %v1726
    %v2735 = vpack.c.b16 %v1734, %v1727
    %v2736 = vpack.c.b16 %v1735, %v1728
    %v2737 = vpack.c.b16 %v1736, %v1729
    %v2738 = vpack.c.b16 %v1744, %v1737
    %v2739 = vpack.c.b16 %v1745, %v1738
    %v2740 = vpack.c.b16 %v1746, %v1739
    %v2741 = vpack.c.b16 %v1747, %v1740
    %v2742 = vpack.c.b16 %v1748, %v1741
    %v2743 = vpack.c.b16 %v1749, %v1742
    %v2744 = vpack.c.b16 %v1750, %v1743
    %v2745 = vpack.c.b16 %v1758, %v1751
    %v2746 = vpack.c.b16 %v1759, %v1752
    %v2747 = vpack.c.b16 %v1760, %v1753
    %v2748 = vpack.c.b16 %v1761, %v1754
    %v2749 = vpack.c.b16 %v1762, %v1755
    %v2750 = vpack.c.b16 %v1763, %v1756
    %v2751 = vpack.c.b16 %v1764, %v1757
    %v2752 = vpack.c.b16 %v1772, %v1765
    %v2753 = vpack.c.b16 %v1773, %v1766
    %v2754 = vpack.c.b16 %v1774, %v1767
    %v2755 = vpack.c.b16 %v1775, %v1768
    %v2756 = vpack.c.b16 %v1776, %v1769
    %v2757 = vpack.c.b16 %v1777, %v1770
    %v2758 = vpack.c.b16 %v1778, %v1771
    %v2759 = vpack.c.b16 %v1786, %v1779
    %v2760 = vpack.c.b16 %v1787, %v1780
    %v2761 = vpack.c.b16 %v1788, %v1781
    %v2762 = vpack.c.b16 %v1789, %v1782
    %v2763 = vpack.c.b16 %v1790, %v1783
    %v2764 = vpack.c.b16 %v1791, %v1784
    %v2765 = vpack.c.b16 %v1792, %v1785
    %v2766 = vpack.c.b16 %v1800, %v1793
    %v2767 = vpack.c.b16 %v1801, %v1794
    %v2768 = vpack.c.b16 %v1802, %v1795
    %v2769 = vpack.c.b16 %v1803, %v1796
    %v2770 = vpack.c.b16 %v1804, %v1797
    %v2771 = vpack.c.b16 %v1805, %v1798
    %v2772 = vpack.c.b16 %v1806, %v1799
    %v2773 = vpack.c.b16 %v1814, %v1807
    %v2774 = vpack.c.b16 %v1815, %v1808
    %v2775 = vpack.c.b16 %v1816, %v1809
    %v2776 = vpack.c.b16 %v1817, %v1810
    %v2777 = vpack.c.b16 %v1818, %v1811
    %v2778 = vpack.c.b16 %v1819, %v1812
    %v2779 = vpack.c.b16 %v1820, %v1813
    %v2780 = vpack.c.b16 %v1828, %v1821
    %v2781 = vpack.c.b16 %v1829, %v1822
    %v2782 = vpack.c.b16 %v1830, %v1823
    %v2783 = vpack.c.b16 %v1831, %v1824
    %v2784 = vpack.c.b16 %v1832, %v1825
    %v2785 = vpack.c.b16 %v1833, %v1826
    %v2786 = vpack.c.b16 %v1834, %v1827
    %v2787 = vpack.c.b16 %v1842, %v1835
    %v2788 = vpack.c.b16 %v1843, %v1836
    %v2789 = vpack.c.b16 %v1844, %v1837
    %v2790 = vpack.c.b16 %v1845, %v1838
    %v2791 = vpack.c.b16 %v1846, %v1839
    %v2792 = vpack.c.b16 %v1847, %v1840
    %v2793 = vpack.c.b16 %v1848, %v1841
    %v2794 = vpack.c.b16 %v1856, %v1849
    %v2795 = vpack.c.b16 %v1857, %v1850
    %v2796 = vpack.c.b16 %v1858, %v1851
    %v2797 = vpack.c.b16 %v1859, %v1852
    %v2798 = vpack.c.b16 %v1860, %v1853
    %v2799 = vpack.c.b16 %v1861, %v1854
    %v2800 = vpack.c.b16 %v1862, %v1855
    %v2801 = vpack.c.b16 %v1870, %v1863
    %v2802 = vpack.c.b16 %v1871, %v1864
    %v2803 = vpack.c.b16 %v1872, %v1865
    %v2804 = vpack.c.b16 %v1873, %v1866
    %v2805 = vpack.c.b16 %v1874, %v1867
    %v2806 = vpack.c.b16 %v1875, %v1868
    %v2807 = vpack.c.b16 %v1876, %v1869
    %v2808 = vpack.c.b16 %v1884, %v1877
    %v2809 = vpack.c.b16 %v1885, %v1878
    %v2810 = vpack.c.b16 %v1886, %v1879
    %v2811 = vpack.c.b16 %v1887, %v1880
    %v2812 = vpack.c.b16 %v1888, %v1881
    %v2813 = vpack.c.b16 %v1889, %v1882
    %v2814 = vpack.c.b16 %v1890, %v1883
    %v2815 = vpack.c.b16 %v1898, %v1891
    %v2816 = vpack.c.b16 %v1899, %v1892
    %v2817 = vpack.c.b16 %v1900, %v1893
    %v2818 = vpack.c.b16 %v1901, %v1894
    %v2819 = vpack.c.b16 %v1902, %v1895
    %v2820 = vpack.c.b16 %v1903, %v1896
    %v2821 = vpack.c.b16 %v1904, %v1897
    %v2822 = vpack.c.b16 %v1912, %v1905
    %v2823 = vpack.c.b16 %v1913, %v1906
    %v2824 = vpack.c.b16 %v1914, %v1907
    %v2825 = vpack.c.b16 %v1915, %v1908
    %v2826 = vpack.c.b16 %v1916, %v1909
    %v2827 = vpack.c.b16 %v1917, %v1910
    %v2828 = vpack.c.b16 %v1918, %v1911
    %v2829 = vpack.c.b16 %v1926, %v1919
    %v2830 = vpack.c.b16 %v1927, %v1920
    %v2831 = vpack.c.b16 %v1928, %v1921
    %v2832 = vpack.c.b16 %v1929, %v1922
    %v2833 = vpack.c.b16 %v1930, %v1923
    %v2834 = vpack.c.b16 %v1931, %v1924
    %v2835 = vpack.c.b16 %v1932, %v1925
    %v2836 = vpack.c.b16 %v1940, %v1933
    %v2837 = vpack.c.b16 %v1941, %v1934
    %v2838 = vpack.c.b16 %v1942, %v1935
    %v2839 = vpack.c.b16 %v1943, %v1936
    %v2840 = vpack.c.b16 %v1944, %v1937
    %v2841 = vpack.c.b16 %v1945, %v1938
    %v2842 = vpack.c.b16 %v1946, %v1939
    %v2843 = vpack.c.b16 %v1954, %v1947
    %v2844 = vpack.c.b16 %v1955, %v1948
    %v2845 = vpack.c.b16 %v1956, %v1949
    %v2846 = vpack.c.b16 %v1957, %v1950
    %v2847 = vpack.c.b16 %v1958, %v1951
    %v2848 = vpack.c.b16 %v1959, %v1952
    %v2849 = vpack.c.b16 %v1960, %v1953
    %v2850 = vpack.c.b16 %v1968, %v1961
    %v2851 = vpack.c.b16 %v1969, %v1962
    %v2852 = vpack.c.b16 %v1970, %v1963
    %v2853 = vpack.c.b16 %v1971, %v1964
    %v2854 = vpack.c.b16 %v1972, %v1965
    %v2855 = vpack.c.b16 %v1973, %v1966
    %v2856 = vpack.c.b16 %v1974, %v1967
    %v2857 = vpack.c.b16 %v1982, %v1975
    %v2858 = vpack.c.b16 %v1983, %v1976
    %v2859 = vpack.c.b16 %v1984, %v1977
    %v2860 = vpack.c.b16 %v1985, %v1978
    %v2861 = vpack.c.b16 %v1986, %v1979
    %v2862 = vpack.c.b16 %v1987, %v1980
    %v2863 = vpack.c.b16 %v1988, %v1981
    %v2864 = vpack.c.b16 %v1996, %v1989
    %v2865 = vpack.c.b16 %v1997, %v1990
    %v2866 = vpack.c.b16 %v1998, %v1991
    %v2867 = vpack.c.b16 %v1999, %v1992
    %v2868 = vpack.c.b16 %v2000, %v1993
    %v2869 = vpack.c.b16 %v2001, %v1994
    %v2870 = vpack.c.b16 %v2002, %v1995
    %v2871 = vpack.c.b16 %v2010, %v2003
    %v2872 = vpack.c.b16 %v2011, %v2004
    %v2873 = vpack.c.b16 %v2012, %v2005
    %v2874 = vpack.c.b16 %v2013, %v2006
    %v2875 = vpack.c.b16 %v2014, %v2007
    %v2876 = vpack.c.b16 %v2015, %v2008
    %v2877 = vpack.c.b16 %v2016, %v2009
    %v2878 = vpack.c.b16 %v2024, %v2017
    %v2879 = vpack.c.b16 %v2025, %v2018
    %v2880 = vpack.c.b16 %v2026, %v2019
    %v2881 = vpack.c.b16 %v2027, %v2020
    %v2882 = vpack.c.b16 %v2028, %v2021
    %v2883 = vpack.c.b16 %v2029, %v2022
    %v2884 = vpack.c.b16 %v2030, %v2023
    %v2885 = vpack.c.b16 %v2038, %v2031
    %v2886 = vpack.c.b16 %v2039, %v2032
    %v2887 = vpack.c.b16 %v2040, %v2033
    %v2888 = vpack.c.b16 %v2041, %v2034
    %v2889 = vpack.c.b16 %v2042, %v2035
    %v2890 = vpack.c.b16 %v2043, %v2036
    %v2891 = vpack.c.b16 %v2044, %v2037
    %v2892 = vpack.c.b16 %v2052, %v2045
    %v2893 = vpack.c.b16 %v2053, %v2046
    %v2894 = vpack.c.b16 %v2054, %v2047
    %v2895 = vpack.c.b16 %v2055, %v2048
    %v2896 = vpack.c.b16 %v2056, %v2049
    %v2897 = vpack.c.b16 %v2057, %v2050
    %v2898 = vpack.c.b16 %v2058, %v2051
    %v2899 = vpack.c.b16 %v2066, %v2059
    %v2900 = vpack.c.b16 %v2067, %v2060
    %v2901 = vpack.c.b16 %v2068, %v2061
    %v2902 = vpack.c.b16 %v2069, %v2062
    %v2903 = vpack.c.b16 %v2070, %v2063
    %v2904 = vpack.c.b16 %v2071, %v2064
    %v2905 = vpack.c.b16 %v2072, %v2065
    %v2906 = vpack.c.b16 %v2080, %v2073
    %v2907 = vpack.c.b16 %v2081, %v2074
    %v2908 = vpack.c.b16 %v2082, %v2075
    %v2909 = vpack.c.b16 %v2083, %v2076
    %v2910 = vpack.c.b16 %v2084, %v2077
    %v2911 = vpack.c.b16 %v2085, %v2078
    %v2912 = vpack.c.b16 %v2086, %v2079
    %v2913 = vpack.c.b16 %v2094, %v2087
    %v2914 = vpack.c.b16 %v2095, %v2088
    %v2915 = vpack.c.b16 %v2096, %v2089
    %v2916 = vpack.c.b16 %v2097, %v2090
    %v2917 = vpack.c.b16 %v2098, %v2091
    %v2918 = vpack.c.b16 %v2099, %v2092
    %v2919 = vpack.c.b16 %v2100, %v2093
    %v2920 = vpack.c.b16 %v2108, %v2101
    %v2921 = vpack.c.b16 %v2109, %v2102
    %v2922 = vpack.c.b16 %v2110, %v2103
    %v2923 = vpack.c.b16 %v2111, %v2104
    %v2924 = vpack.c.b16 %v2112, %v2105
    %v2925 = vpack.c.b16 %v2113, %v2106
    %v2926 = vpack.c.b16 %v2114, %v2107
    %v2927 = vpack.c.b16 %v2122, %v2115
    %v2928 = vpack.c.b16 %v2123, %v2116
    %v2929 = vpack.c.b16 %v2124, %v2117
    %v2930 = vpack.c.b16 %v2125, %v2118
    %v2931 = vpack.c.b16 %v2126, %v2119
    %v2932 = vpack.c.b16 %v2127, %v2120
    %v2933 = vpack.c.b16 %v2128, %v2121
    %v2934 = vpack.c.b16 %v2136, %v2129
    %v2935 = vpack.c.b16 %v2137, %v2130
    %v2936 = vpack.c.b16 %v2138, %v2131
    %v2937 = vpack.c.b16 %v2139, %v2132
    %v2938 = vpack.c.b16 %v2140, %v2133
    %v2939 = vpack.c.b16 %v2141, %v2134
    %v2940 = vpack.c.b16 %v2142, %v2135
    %v2941 = vpack.c.b16 %v2150, %v2143
    %v2942 = vpack.c.b16 %v2151, %v2144
    %v2943 = vpack.c.b16 %v2152, %v2145
    %v2944 = vpack.c.b16 %v2153, %v2146
    %v2945 = vpack.c.b16 %v2154, %v2147
    %v2946 = vpack.c.b16 %v2155, %v2148
    %v2947 = vpack.c.b16 %v2156, %v2149
    %v2948 = vpack.c.b16 %v2164, %v2157
    %v2949 = vpack.c.b16 %v2165, %v2158
    %v2950 = vpack.c.b16 %v2166, %v2159
    %v2951 = vpack.c.b16 %v2167, %v2160
    %v2952 = vpack.c.b16 %v2168, %v2161
    %v2953 = vpack.c.b16 %v2169, %v2162
    %v2954 = vpack.c.b16 %v2170, %v2163
    %v2955 = vpack.c.b16 %v2178, %v2171
    %v2956 = vpack.c.b16 %v2179, %v2172
    %v2957 = vpack.c.b16 %v2180, %v2173
    %v2958 = vpack.c.b16 %v2181, %v2174
    %v2959 = vpack.c.b16 %v2182, %v2175
    %v2960 = vpack.c.b16 %v2183, %v2176
    %v2961 = vpack.c.b16 %v2184, %v2177
    %v2962 = vpack.c.b16 %v2192, %v2185
    %v2963 = vpack.c.b16 %v2193, %v2186
    %v2964 = vpack.c.b16 %v2194, %v2187
    %v2965 = vpack.c.b16 %v2195, %v2188
    %v2966 = vpack.c.b16 %v2196, %v2189
    %v2967 = vpack.c.b16 %v2197, %v2190
    %v2968 = vpack.c.b16 %v2198, %v2191
    %v2969 = vpack.c.b16 %v2206, %v2199
    %v2970 = vpack.c.b16 %v2207, %v2200
    %v2971 = vpack.c.b16 %v2208, %v2201
    %v2972 = vpack.c.b16 %v2209, %v2202
    %v2973 = vpack.c.b16 %v2210, %v2203
    %v2974 = vpack.c.b16 %v2211, %v2204
    %v2975 = vpack.c.b16 %v2212, %v2205
    %v2976 = vpack.c.b16 %v2220, %v2213
    %v2977 = vpack.c.b16 %v2221, %v2214
    %v2978 = vpack.c.b16 %v2222, %v2215
    %v2979 = vpack.c.b16 %v2223, %v2216
    %v2980 = vpack.c.b16 %v2224, %v2217
    %v2981 = vpack.c.b16 %v2225, %v2218
    %v2982 = vpack.c.b16 %v2226, %v2219
    %v2983 = vpack.c.b16 %v2234, %v2227
    %v2984 = vpack.c.b16 %v2235, %v2228
    %v2985 = vpack.c.b16 %v2236, %v2229
    %v2986 = vpack.c.b16 %v2237, %v2230
    %v2987 = vpack.c.b16 %v2238, %v2231
    %v2988 = vpack.c.b16 %v2239, %v2232
    %v2989 = vpack.c.b16 %v2240, %v2233
    %v2990 = vpack.c.b16 %v2248, %v2241
    %v2991 = vpack.c.b16 %v2249, %v2242
    %v2992 = vpack.c.b16 %v2250, %v2243
    %v2993 = vpack.c.b16 %v2251, %v2244
    %v2994 = vpack.c.b16 %v2252, %v2245
    %v2995 = vpack.c.b16 %v2253, %v2246
    %v2996 = vpack.c.b16 %v2254, %v2247
    %v2997 = vpack.c.b16 %v2262, %v2255
    %v2998 = vpack.c.b16 %v2263, %v2256
    %v2999 = vpack.c.b16 %v2264, %v2257
    %v3000 = vpack.c.b16 %v2265, %v2258
    %v3001 = vpack.c.b16 %v2266, %v2259
    %v3002 = vpack.c.b16 %v2267, %v2260
    %v3003 = vpack.c.b16 %v2268, %v2261
    %v3004 = vpack.c.b16 %v2276, %v2269
    %v3005 = vpack.c.b16 %v2277, %v2270
    %v3006 = vpack.c.b16 %v2278, %v2271
    %v3007 = vpack.c.b16 %v2279, %v2272
    %v3008 = vpack.c.b16 %v2280, %v2273
    %v3009 = vpack.c.b16 %v2281, %v2274
    %v3010 = vpack.c.b16 %v2282, %v2275
    %v3011 = vpack.c.b16 %v2290, %v2283
    %v3012 = vpack.c.b16 %v2291, %v2284
    %v3013 = vpack.c.b16 %v2292, %v2285
    %v3014 = vpack.c.b16 %v2293, %v2286
    %v3015 = vpack.c.b16 %v2294, %v2287
    %v3016 = vpack.c.b16 %v2295, %v2288
    %v3017 = vpack.c.b16 %v2296, %v2289
    %v3018 = vpack.c.b16 %v2304, %v2297
    %v3019 = vpack.c.b16 %v2305, %v2298
    %v3020 = vpack.c.b16 %v2306, %v2299
    %v3021 = vpack.c.b16 %v2307, %v2300
    %v3022 = vpack.c.b16 %v2308, %v2301
    %v3023 = vpack.c.b16 %v2309, %v2302
    %v3024 = vpack.c.b16 %v2310, %v2303
    %v3025 = vpack.c.b16 %v2318, %v2311
    %v3026 = vpack.c.b16 %v2319, %v2312
    %v3027 = vpack.c.b16 %v2320, %v2313
    %v3028 = vpack.c.b16 %v2321, %v2314
    %v3029 = vpack.c.b16 %v2322, %v2315
    %v3030 = vpack.c.b16 %v2323, %v2316
    %v3031 = vpack.c.b16 %v2324, %v2317
    %v3032 = vpack.c.b16 %v2332, %v2325
    %v3033 = vpack.c.b16 %v2333, %v2326
    %v3034 = vpack.c.b16 %v2334, %v2327
    %v3035 = vpack.c.b16 %v2335, %v2328
    %v3036 = vpack.c.b16 %v2336, %v2329
    %v3037 = vpack.c.b16 %v2337, %v2330
    %v3038 = vpack.c.b16 %v2338, %v2331
    %v3039 = vpack.c.b16 %v2346, %v2339
    %v3040 = vpack.c.b16 %v2347, %v2340
    %v3041 = vpack.c.b16 %v2348, %v2341
    %v3042 = vpack.c.b16 %v2349, %v2342
    %v3043 = vpack.c.b16 %v2350, %v2343
    %v3044 = vpack.c.b16 %v2351, %v2344
    %v3045 = vpack.c.b16 %v2352, %v2345
    %v3046 = vpack.c.b16 %v2360, %v2353
    %v3047 = vpack.c.b16 %v2361, %v2354
    %v3048 = vpack.c.b16 %v2362, %v2355
    %v3049 = vpack.c.b16 %v2363, %v2356
    %v3050 = vpack.c.b16 %v2364, %v2357
    %v3051 = vpack.c.b16 %v2365, %v2358
    %v3052 = vpack.c.b16 %v2366, %v2359
    %v3053 = vpack.c.b16 %v2374, %v2367
    %v3054 = vpack.c.b16 %v2375, %v2368
    %v3055 = vpack.c.b16 %v2376, %v2369
    %v3056 = vpack.c.b16 %v2377, %v2370
    %v3057 = vpack.c.b16 %v2378, %v2371
    %v3058 = vpack.c.b16 %v2379, %v2372
    %v3059 = vpack.c.b16 %v2380, %v2373
    %v3060 = vpack.c.b16 %v2388, %v2381
    %v3061 = vpack.c.b16 %v2389, %v2382
    %v3062 = vpack.c.b16 %v2390, %v2383
    %v3063 = vpack.c.b16 %v2391, %v2384
    %v3064 = vpack.c.b16 %v2392, %v2385
    %v3065 = vpack.c.b16 %v2393, %v2386
    %v3066 = vpack.c.b16 %v2394, %v2387
    %v3067 = vpack.c.b16 %v2402, %v2395
    %v3068 = vpack.c.b16 %v2403, %v2396
    %v3069 = vpack.c.b16 %v2404, %v2397
    %v3070 = vpack.c.b16 %v2405, %v2398
    %v3071 = vpack.c.b16 %v2406, %v2399
    %v3072 = vpack.c.b16 %v2407, %v2400
    %v3073 = vpack.c.b16 %v2408, %v2401
    %v3074 = vpack.c.b16 %v2416, %v2409
    %v3075 = vpack.c.b16 %v2417, %v2410
    %v3076 = vpack.c.b16 %v2418, %v2411
    %v3077 = vpack.c.b16 %v2419, %v2412
    %v3078 = vpack.c.b16 %v2420, %v2413
    %v3079 = vpack.c.b16 %v2421, %v2414
    %v3080 = vpack.c.b16 %v2422, %v2415
    %v3081 = vpack.c.b16 %v2430, %v2423
    %v3082 = vpack.c.b16 %v2431, %v2424
    %v3083 = vpack.c.b16 %v2432, %v2425
    %v3084 = vpack.c.b16 %v2433, %v2426
    %v3085 = vpack.c.b16 %v2434, %v2427
    %v3086 = vpack.c.b16 %v2435, %v2428
    %v3087 = vpack.c.b16 %v2436, %v2429
    %v3088 = vpack.c.b16 %v2444, %v2437
    %v3089 = vpack.c.b16 %v2445, %v2438
    %v3090 = vpack.c.b16 %v2446, %v2439
    %v3091 = vpack.c.b16 %v2447, %v2440
    %v3092 = vpack.c.b16 %v2448, %v2441
    %v3093 = vpack.c.b16 %v2449, %v2442
    %v3094 = vpack.c.b16 %v2450, %v2443
    %v3095 = vpack.c.b16 %v2458, %v2451
    %v3096 = vpack.c.b16 %v2459, %v2452
    %v3097 = vpack.c.b16 %v2460, %v2453
    %v3098 = vpack.c.b16 %v2461, %v2454
    %v3099 = vpack.c.b16 %v2462, %v2455
    %v3100 = vpack.c.b16 %v2463, %v2456
    %v3101 = vpack.c.b16 %v2464, %v2457
    %v3102 = vpack.c.b16 %v2472, %v2465
    %v3103 = vpack.c.b16 %v2473, %v2466
    %v3104 = vpack.c.b16 %v2474, %v2467
    %v3105 = vpack.c.b16 %v2475, %v2468
    %v3106 = vpack.c.b16 %v2476, %v2469
    %v3107 = vpack.c.b16 %v2477, %v2470
    %v3108 = vpack.c.b16 %v2478, %v2471
    %v3109 = vpack.c.b16 %v2486, %v2479
    %v3110 = vpack.c.b16 %v2487, %v2480
    %v3111 = vpack.c.b16 %v2488, %v2481
    %v3112 = vpack.c.b16 %v2489, %v2482
    %v3113 = vpack.c.b16 %v2490, %v2483
    %v3114 = vpack.c.b16 %v2491, %v2484
    %v3115 = vpack.c.b16 %v2492, %v2485
    %v3116 = vpack.c.b16 %v2500, %v2493
    %v3117 = vpack.c.b16 %v2501, %v2494
    %v3118 = vpack.c.b16 %v2502, %v2495
    %v3119 = vpack.c.b16 %v2503, %v2496
    %v3120 = vpack.c.b16 %v2504, %v2497
    %v3121 = vpack.c.b16 %v2505, %v2498
    %v3122 = vpack.c.b16 %v2506, %v2499
    %v3123 = vpack.c.b16 %v2514, %v2507
    %v3124 = vpack.c.b16 %v2515, %v2508
    %v3125 = vpack.c.b16 %v2516, %v2509
    %v3126 = vpack.c.b16 %v2517, %v2510
    %v3127 = vpack.c.b16 %v2518, %v2511
    %v3128 = vpack.c.b16 %v2519, %v2512
    %v3129 = vpack.c.b16 %v2520, %v2513
    %v3130 = vpack.c.b16 %v2528, %v2521
    %v3131 = vpack.c.b16 %v2529, %v2522
    %v3132 = vpack.c.b16 %v2530, %v2523
    %v3133 = vpack.c.b16 %v2531, %v2524
    %v3134 = vpack.c.b16 %v2532, %v2525
    %v3135 = vpack.c.b16 %v2533, %v2526
    %v3136 = vpack.c.b16 %v2534, %v2527
    %v3137 = vpack.c.b16 %v2542, %v2535
    %v3138 = vpack.c.b16 %v2543, %v2536
    %v3139 = vpack.c.b16 %v2544, %v2537
    %v3140 = vpack.c.b16 %v2545, %v2538
    %v3141 = vpack.c.b16 %v2546, %v2539
    %v3142 = vpack.c.b16 %v2547, %v2540
    %v3143 = vpack.c.b16 %v2548, %v2541
    %v3144 = vpack.c.b16 %v2556, %v2549
    %v3145 = vpack.c.b16 %v2557, %v2550
    %v3146 = vpack.c.b16 %v2558, %v2551
    %v3147 = vpack.c.b16 %v2559, %v2552
    %v3148 = vpack.c.b16 %v2560, %v2553
    %v3149 = vpack.c.b16 %v2561, %v2554
    %v3150 = vpack.c.b16 %v2562, %v2555
    %v3151 = vpack.c.b16 %v2570, %v2563
    %v3152 = vpack.c.b16 %v2571, %v2564
    %v3153 = vpack.c.b16 %v2572, %v2565
    %v3154 = vpack.c.b16 %v2573, %v2566
    %v3155 = vpack.c.b16 %v2574, %v2567
    %v3156 = vpack.c.b16 %v2575, %v2568
    %v3157 = vpack.c.b16 %v2576, %v2569
    %v3158 = vpack.c.b16 %v2584, %v2577
    %v3159 = vpack.c.b16 %v2585, %v2578
    %v3160 = vpack.c.b16 %v2586, %v2579
    %v3161 = vpack.c.b16 %v2587, %v2580
    %v3162 = vpack.c.b16 %v2588, %v2581
    %v3163 = vpack.c.b16 %v2589, %v2582
    %v3164 = vpack.c.b16 %v2590, %v2583
    %v3165 = vpack.c.b16 %v2598, %v2591
    %v3166 = vpack.c.b16 %v2599, %v2592
    %v3167 = vpack.c.b16 %v2600, %v2593
    %v3168 = vpack.c.b16 %v2601, %v2594
    %v3169 = vpack.c.b16 %v2602, %v2595
    %v3170 = vpack.c.b16 %v2603, %v2596
    %v3171 = vpack.c.b16 %v2604, %v2597
    %v3172 = vpack.c.b16 %v2612, %v2605
    %v3173 = vpack.c.b16 %v2613, %v2606
    %v3174 = vpack.c.b16 %v2614, %v2607
    %v3175 = vpack.c.b16 %v2615, %v2608
    %v3176 = vpack.c.b16 %v2616, %v2609
    %v3177 = vpack.c.b16 %v2617, %v2610
    %v3178 = vpack.c.b16 %v2618, %v2611
    %3739 = vmatpush.bf16.msra.mxu0 %v2668
    %3740 = vmatpush.bf16.msra.mxu0 %v2661
    %3741 = vmatpush.bf16.msra.mxu0 %v2654
    %3742 = vmatpush.bf16.msra.mxu0 %v2647
    %3743 = vmatpush.bf16.msra.mxu0 %v2640
    %3744 = vmatpush.bf16.msra.mxu0 %v2633
    %3745 = vmatpush.bf16.msra.mxu0 %v2626
    %3746 = vmatpush.bf16.msra.mxu0 %v2619
    %3747 = vmatmul.bf16.gmra.mxu0 %v193
    %v3748 = vpop.f32.mrf.mxu0
    %v3749 = vadd.f32 %v845, %v3748
    %v3750 = vpop.f32.mrf.mxu0
    %3751 = vdwg.mxu0
    %3752 = vmatpush.bf16.msra.mxu0 %v2724
    %3753 = vmatpush.bf16.msra.mxu0 %v2717
    %3754 = vmatpush.bf16.msra.mxu0 %v2710
    %3755 = vmatpush.bf16.msra.mxu0 %v2703
    %3756 = vmatpush.bf16.msra.mxu0 %v2696
    %3757 = vmatpush.bf16.msra.mxu0 %v2689
    %3758 = vmatpush.bf16.msra.mxu0 %v2682
    %3759 = vmatpush.bf16.msra.mxu0 %v2675
    %3760 = vmatmul.bf16.gmra.mxu0 %v194
    %v3761 = vpop.f32.mrf.mxu0
    %v3762 = vadd.f32 %v3749, %v3761
    %v3763 = vpop.f32.mrf.mxu0
    %3764 = vdwg.mxu0
    %3765 = vmatpush.bf16.msra.mxu0 %v2780
    %3766 = vmatpush.bf16.msra.mxu0 %v2773
    %3767 = vmatpush.bf16.msra.mxu0 %v2766
    %3768 = vmatpush.bf16.msra.mxu0 %v2759
    %3769 = vmatpush.bf16.msra.mxu0 %v2752
    %3770 = vmatpush.bf16.msra.mxu0 %v2745
    %3771 = vmatpush.bf16.msra.mxu0 %v2738
    %3772 = vmatpush.bf16.msra.mxu0 %v2731
    %3773 = vmatmul.bf16.gmra.mxu0 %v195
    %v3774 = vpop.f32.mrf.mxu0
    %v3775 = vadd.f32 %v3762, %v3774
    %v3776 = vpop.f32.mrf.mxu0
    %3777 = vdwg.mxu0
    %3778 = vmatpush.bf16.msra.mxu0 %v2836
    %3779 = vmatpush.bf16.msra.mxu0 %v2829
    %3780 = vmatpush.bf16.msra.mxu0 %v2822
    %3781 = vmatpush.bf16.msra.mxu0 %v2815
    %3782 = vmatpush.bf16.msra.mxu0 %v2808
    %3783 = vmatpush.bf16.msra.mxu0 %v2801
    %3784 = vmatpush.bf16.msra.mxu0 %v2794
    %3785 = vmatpush.bf16.msra.mxu0 %v2787
    %3786 = vmatmul.bf16.gmra.mxu0 %v196
    %v3787 = vpop.f32.mrf.mxu0
    %v3788 = vadd.f32 %v3775, %v3787
    %v3789 = vpop.f32.mrf.mxu0
    %3790 = vdwg.mxu0
    %3791 = vmatpush.bf16.msra.mxu0 %v2892
    %3792 = vmatpush.bf16.msra.mxu0 %v2885
    %3793 = vmatpush.bf16.msra.mxu0 %v2878
    %3794 = vmatpush.bf16.msra.mxu0 %v2871
    %3795 = vmatpush.bf16.msra.mxu0 %v2864
    %3796 = vmatpush.bf16.msra.mxu0 %v2857
    %3797 = vmatpush.bf16.msra.mxu0 %v2850
    %3798 = vmatpush.bf16.msra.mxu0 %v2843
    %3799 = vmatmul.bf16.gmra.mxu0 %v197
    %v3800 = vpop.f32.mrf.mxu0
    %v3801 = vadd.f32 %v3788, %v3800
    %v3802 = vpop.f32.mrf.mxu0
    %3803 = vdwg.mxu0
    %3804 = vmatpush.bf16.msra.mxu0 %v2948
    %3805 = vmatpush.bf16.msra.mxu0 %v2941
    %3806 = vmatpush.bf16.msra.mxu0 %v2934
    %3807 = vmatpush.bf16.msra.mxu0 %v2927
    %3808 = vmatpush.bf16.msra.mxu0 %v2920
    %3809 = vmatpush.bf16.msra.mxu0 %v2913
    %3810 = vmatpush.bf16.msra.mxu0 %v2906
    %3811 = vmatpush.bf16.msra.mxu0 %v2899
    %3812 = vmatmul.bf16.gmra.mxu0 %v198
    %v3813 = vpop.f32.mrf.mxu0
    %v3814 = vadd.f32 %v3801, %v3813
    %v3815 = vpop.f32.mrf.mxu0
    %3816 = vdwg.mxu0
    %3817 = vmatpush.bf16.msra.mxu0 %v3004
    %3818 = vmatpush.bf16.msra.mxu0 %v2997
    %3819 = vmatpush.bf16.msra.mxu0 %v2990
    %3820 = vmatpush.bf16.msra.mxu0 %v2983
    %3821 = vmatpush.bf16.msra.mxu0 %v2976
    %3822 = vmatpush.bf16.msra.mxu0 %v2969
    %3823 = vmatpush.bf16.msra.mxu0 %v2962
    %3824 = vmatpush.bf16.msra.mxu0 %v2955
    %3825 = vmatmul.bf16.gmra.mxu0 %v199
    %v3826 = vpop.f32.mrf.mxu0
    %v3827 = vadd.f32 %v3814, %v3826
    %v3828 = vpop.f32.mrf.mxu0
    %3829 = vdwg.mxu0
    %3830 = vmatpush.bf16.msra.mxu0 %v3060
    %3831 = vmatpush.bf16.msra.mxu0 %v3053
    %3832 = vmatpush.bf16.msra.mxu0 %v3046
    %3833 = vmatpush.bf16.msra.mxu0 %v3039
    %3834 = vmatpush.bf16.msra.mxu0 %v3032
    %3835 = vmatpush.bf16.msra.mxu0 %v3025
    %3836 = vmatpush.bf16.msra.mxu0 %v3018
    %3837 = vmatpush.bf16.msra.mxu0 %v3011
    %3838 = vmatmul.bf16.gmra.mxu0 %v200
    %v3839 = vpop.f32.mrf.mxu0
    %v3840 = vadd.f32 %v3827, %v3839
    %v3841 = vpop.f32.mrf.mxu0
    %3842 = vdwg.mxu0
    %3843 = vmatpush.bf16.msra.mxu0 %v3116
    %3844 = vmatpush.bf16.msra.mxu0 %v3109
    %3845 = vmatpush.bf16.msra.mxu0 %v3102
    %3846 = vmatpush.bf16.msra.mxu0 %v3095
    %3847 = vmatpush.bf16.msra.mxu0 %v3088
    %3848 = vmatpush.bf16.msra.mxu0 %v3081
    %3849 = vmatpush.bf16.msra.mxu0 %v3074
    %3850 = vmatpush.bf16.msra.mxu0 %v3067
    %3851 = vmatmul.bf16.gmra.mxu0 %v201
    %v3852 = vpop.f32.mrf.mxu0
    %v3853 = vadd.f32 %v3840, %v3852
    %v3854 = vpop.f32.mrf.mxu0
    %3855 = vdwg.mxu0
    %3856 = vmatpush.bf16.msra.mxu0 %v3172
    %3857 = vmatpush.bf16.msra.mxu0 %v3165
    %3858 = vmatpush.bf16.msra.mxu0 %v3158
    %3859 = vmatpush.bf16.msra.mxu0 %v3151
    %3860 = vmatpush.bf16.msra.mxu0 %v3144
    %3861 = vmatpush.bf16.msra.mxu0 %v3137
    %3862 = vmatpush.bf16.msra.mxu0 %v3130
    %3863 = vmatpush.bf16.msra.mxu0 %v3123
    %3864 = vmatmul.bf16.gmra.mxu0 %v202
    %v3865 = vpop.f32.mrf.mxu0
    %v3866 = vadd.f32 %v3853, %v3865
    %v3867 = vpop.f32.mrf.mxu0
    %3868 = vdwg.mxu0
    %3869 = vmatpush.bf16.msra.mxu0 %v2669
    %3870 = vmatpush.bf16.msra.mxu0 %v2662
    %3871 = vmatpush.bf16.msra.mxu0 %v2655
    %3872 = vmatpush.bf16.msra.mxu0 %v2648
    %3873 = vmatpush.bf16.msra.mxu0 %v2641
    %3874 = vmatpush.bf16.msra.mxu0 %v2634
    %3875 = vmatpush.bf16.msra.mxu0 %v2627
    %3876 = vmatpush.bf16.msra.mxu0 %v2620
    %3877 = vmatmul.bf16.gmra.mxu0 %v193
    %v3878 = vpop.f32.mrf.mxu0
    %v3879 = vadd.f32 %v846, %v3878
    %v3880 = vpop.f32.mrf.mxu0
    %3881 = vdwg.mxu0
    %3882 = vmatpush.bf16.msra.mxu0 %v2725
    %3883 = vmatpush.bf16.msra.mxu0 %v2718
    %3884 = vmatpush.bf16.msra.mxu0 %v2711
    %3885 = vmatpush.bf16.msra.mxu0 %v2704
    %3886 = vmatpush.bf16.msra.mxu0 %v2697
    %3887 = vmatpush.bf16.msra.mxu0 %v2690
    %3888 = vmatpush.bf16.msra.mxu0 %v2683
    %3889 = vmatpush.bf16.msra.mxu0 %v2676
    %3890 = vmatmul.bf16.gmra.mxu0 %v194
    %v3891 = vpop.f32.mrf.mxu0
    %v3892 = vadd.f32 %v3879, %v3891
    %v3893 = vpop.f32.mrf.mxu0
    %3894 = vdwg.mxu0
    %3895 = vmatpush.bf16.msra.mxu0 %v2781
    %3896 = vmatpush.bf16.msra.mxu0 %v2774
    %3897 = vmatpush.bf16.msra.mxu0 %v2767
    %3898 = vmatpush.bf16.msra.mxu0 %v2760
    %3899 = vmatpush.bf16.msra.mxu0 %v2753
    %3900 = vmatpush.bf16.msra.mxu0 %v2746
    %3901 = vmatpush.bf16.msra.mxu0 %v2739
    %3902 = vmatpush.bf16.msra.mxu0 %v2732
    %3903 = vmatmul.bf16.gmra.mxu0 %v195
    %v3904 = vpop.f32.mrf.mxu0
    %v3905 = vadd.f32 %v3892, %v3904
    %v3906 = vpop.f32.mrf.mxu0
    %3907 = vdwg.mxu0
    %3908 = vmatpush.bf16.msra.mxu0 %v2837
    %3909 = vmatpush.bf16.msra.mxu0 %v2830
    %3910 = vmatpush.bf16.msra.mxu0 %v2823
    %3911 = vmatpush.bf16.msra.mxu0 %v2816
    %3912 = vmatpush.bf16.msra.mxu0 %v2809
    %3913 = vmatpush.bf16.msra.mxu0 %v2802
    %3914 = vmatpush.bf16.msra.mxu0 %v2795
    %3915 = vmatpush.bf16.msra.mxu0 %v2788
    %3916 = vmatmul.bf16.gmra.mxu0 %v196
    %v3917 = vpop.f32.mrf.mxu0
    %v3918 = vadd.f32 %v3905, %v3917
    %v3919 = vpop.f32.mrf.mxu0
    %3920 = vdwg.mxu0
    %3921 = vmatpush.bf16.msra.mxu0 %v2893
    %3922 = vmatpush.bf16.msra.mxu0 %v2886
    %3923 = vmatpush.bf16.msra.mxu0 %v2879
    %3924 = vmatpush.bf16.msra.mxu0 %v2872
    %3925 = vmatpush.bf16.msra.mxu0 %v2865
    %3926 = vmatpush.bf16.msra.mxu0 %v2858
    %3927 = vmatpush.bf16.msra.mxu0 %v2851
    %3928 = vmatpush.bf16.msra.mxu0 %v2844
    %3929 = vmatmul.bf16.gmra.mxu0 %v197
    %v3930 = vpop.f32.mrf.mxu0
    %v3931 = vadd.f32 %v3918, %v3930
    %v3932 = vpop.f32.mrf.mxu0
    %3933 = vdwg.mxu0
    %3934 = vmatpush.bf16.msra.mxu0 %v2949
    %3935 = vmatpush.bf16.msra.mxu0 %v2942
    %3936 = vmatpush.bf16.msra.mxu0 %v2935
    %3937 = vmatpush.bf16.msra.mxu0 %v2928
    %3938 = vmatpush.bf16.msra.mxu0 %v2921
    %3939 = vmatpush.bf16.msra.mxu0 %v2914
    %3940 = vmatpush.bf16.msra.mxu0 %v2907
    %3941 = vmatpush.bf16.msra.mxu0 %v2900
    %3942 = vmatmul.bf16.gmra.mxu0 %v198
    %v3943 = vpop.f32.mrf.mxu0
    %v3944 = vadd.f32 %v3931, %v3943
    %v3945 = vpop.f32.mrf.mxu0
    %3946 = vdwg.mxu0
    %3947 = vmatpush.bf16.msra.mxu0 %v3005
    %3948 = vmatpush.bf16.msra.mxu0 %v2998
    %3949 = vmatpush.bf16.msra.mxu0 %v2991
    %3950 = vmatpush.bf16.msra.mxu0 %v2984
    %3951 = vmatpush.bf16.msra.mxu0 %v2977
    %3952 = vmatpush.bf16.msra.mxu0 %v2970
    %3953 = vmatpush.bf16.msra.mxu0 %v2963
    %3954 = vmatpush.bf16.msra.mxu0 %v2956
    %3955 = vmatmul.bf16.gmra.mxu0 %v199
    %v3956 = vpop.f32.mrf.mxu0
    %v3957 = vadd.f32 %v3944, %v3956
    %v3958 = vpop.f32.mrf.mxu0
    %3959 = vdwg.mxu0
    %3960 = vmatpush.bf16.msra.mxu0 %v3061
    %3961 = vmatpush.bf16.msra.mxu0 %v3054
    %3962 = vmatpush.bf16.msra.mxu0 %v3047
    %3963 = vmatpush.bf16.msra.mxu0 %v3040
    %3964 = vmatpush.bf16.msra.mxu0 %v3033
    %3965 = vmatpush.bf16.msra.mxu0 %v3026
    %3966 = vmatpush.bf16.msra.mxu0 %v3019
    %3967 = vmatpush.bf16.msra.mxu0 %v3012
    %3968 = vmatmul.bf16.gmra.mxu0 %v200
    %v3969 = vpop.f32.mrf.mxu0
    %v3970 = vadd.f32 %v3957, %v3969
    %v3971 = vpop.f32.mrf.mxu0
    %3972 = vdwg.mxu0
    %3973 = vmatpush.bf16.msra.mxu0 %v3117
    %3974 = vmatpush.bf16.msra.mxu0 %v3110
    %3975 = vmatpush.bf16.msra.mxu0 %v3103
    %3976 = vmatpush.bf16.msra.mxu0 %v3096
    %3977 = vmatpush.bf16.msra.mxu0 %v3089
    %3978 = vmatpush.bf16.msra.mxu0 %v3082
    %3979 = vmatpush.bf16.msra.mxu0 %v3075
    %3980 = vmatpush.bf16.msra.mxu0 %v3068
    %3981 = vmatmul.bf16.gmra.mxu0 %v201
    %v3982 = vpop.f32.mrf.mxu0
    %v3983 = vadd.f32 %v3970, %v3982
    %v3984 = vpop.f32.mrf.mxu0
    %3985 = vdwg.mxu0
    %3986 = vmatpush.bf16.msra.mxu0 %v3173
    %3987 = vmatpush.bf16.msra.mxu0 %v3166
    %3988 = vmatpush.bf16.msra.mxu0 %v3159
    %3989 = vmatpush.bf16.msra.mxu0 %v3152
    %3990 = vmatpush.bf16.msra.mxu0 %v3145
    %3991 = vmatpush.bf16.msra.mxu0 %v3138
    %3992 = vmatpush.bf16.msra.mxu0 %v3131
    %3993 = vmatpush.bf16.msra.mxu0 %v3124
    %3994 = vmatmul.bf16.gmra.mxu0 %v202
    %v3995 = vpop.f32.mrf.mxu0
    %v3996 = vadd.f32 %v3983, %v3995
    %v3997 = vpop.f32.mrf.mxu0
    %3998 = vdwg.mxu0
    %3999 = vmatpush.bf16.msra.mxu0 %v2670
    %4000 = vmatpush.bf16.msra.mxu0 %v2663
    %4001 = vmatpush.bf16.msra.mxu0 %v2656
    %4002 = vmatpush.bf16.msra.mxu0 %v2649
    %4003 = vmatpush.bf16.msra.mxu0 %v2642
    %4004 = vmatpush.bf16.msra.mxu0 %v2635
    %4005 = vmatpush.bf16.msra.mxu0 %v2628
    %4006 = vmatpush.bf16.msra.mxu0 %v2621
    %4007 = vmatmul.bf16.gmra.mxu0 %v193
    %v4008 = vpop.f32.mrf.mxu0
    %v4009 = vadd.f32 %v847, %v4008
    %v4010 = vpop.f32.mrf.mxu0
    %4011 = vdwg.mxu0
    %4012 = vmatpush.bf16.msra.mxu0 %v2726
    %4013 = vmatpush.bf16.msra.mxu0 %v2719
    %4014 = vmatpush.bf16.msra.mxu0 %v2712
    %4015 = vmatpush.bf16.msra.mxu0 %v2705
    %4016 = vmatpush.bf16.msra.mxu0 %v2698
    %4017 = vmatpush.bf16.msra.mxu0 %v2691
    %4018 = vmatpush.bf16.msra.mxu0 %v2684
    %4019 = vmatpush.bf16.msra.mxu0 %v2677
    %4020 = vmatmul.bf16.gmra.mxu0 %v194
    %v4021 = vpop.f32.mrf.mxu0
    %v4022 = vadd.f32 %v4009, %v4021
    %v4023 = vpop.f32.mrf.mxu0
    %4024 = vdwg.mxu0
    %4025 = vmatpush.bf16.msra.mxu0 %v2782
    %4026 = vmatpush.bf16.msra.mxu0 %v2775
    %4027 = vmatpush.bf16.msra.mxu0 %v2768
    %4028 = vmatpush.bf16.msra.mxu0 %v2761
    %4029 = vmatpush.bf16.msra.mxu0 %v2754
    %4030 = vmatpush.bf16.msra.mxu0 %v2747
    %4031 = vmatpush.bf16.msra.mxu0 %v2740
    %4032 = vmatpush.bf16.msra.mxu0 %v2733
    %4033 = vmatmul.bf16.gmra.mxu0 %v195
    %v4034 = vpop.f32.mrf.mxu0
    %v4035 = vadd.f32 %v4022, %v4034
    %v4036 = vpop.f32.mrf.mxu0
    %4037 = vdwg.mxu0
    %4038 = vmatpush.bf16.msra.mxu0 %v2838
    %4039 = vmatpush.bf16.msra.mxu0 %v2831
    %4040 = vmatpush.bf16.msra.mxu0 %v2824
    %4041 = vmatpush.bf16.msra.mxu0 %v2817
    %4042 = vmatpush.bf16.msra.mxu0 %v2810
    %4043 = vmatpush.bf16.msra.mxu0 %v2803
    %4044 = vmatpush.bf16.msra.mxu0 %v2796
    %4045 = vmatpush.bf16.msra.mxu0 %v2789
    %4046 = vmatmul.bf16.gmra.mxu0 %v196
    %v4047 = vpop.f32.mrf.mxu0
    %v4048 = vadd.f32 %v4035, %v4047
    %v4049 = vpop.f32.mrf.mxu0
    %4050 = vdwg.mxu0
    %4051 = vmatpush.bf16.msra.mxu0 %v2894
    %4052 = vmatpush.bf16.msra.mxu0 %v2887
    %4053 = vmatpush.bf16.msra.mxu0 %v2880
    %4054 = vmatpush.bf16.msra.mxu0 %v2873
    %4055 = vmatpush.bf16.msra.mxu0 %v2866
    %4056 = vmatpush.bf16.msra.mxu0 %v2859
    %4057 = vmatpush.bf16.msra.mxu0 %v2852
    %4058 = vmatpush.bf16.msra.mxu0 %v2845
    %4059 = vmatmul.bf16.gmra.mxu0 %v197
    %v4060 = vpop.f32.mrf.mxu0
    %v4061 = vadd.f32 %v4048, %v4060
    %v4062 = vpop.f32.mrf.mxu0
    %4063 = vdwg.mxu0
    %4064 = vmatpush.bf16.msra.mxu0 %v2950
    %4065 = vmatpush.bf16.msra.mxu0 %v2943
    %4066 = vmatpush.bf16.msra.mxu0 %v2936
    %4067 = vmatpush.bf16.msra.mxu0 %v2929
    %4068 = vmatpush.bf16.msra.mxu0 %v2922
    %4069 = vmatpush.bf16.msra.mxu0 %v2915
    %4070 = vmatpush.bf16.msra.mxu0 %v2908
    %4071 = vmatpush.bf16.msra.mxu0 %v2901
    %4072 = vmatmul.bf16.gmra.mxu0 %v198
    %v4073 = vpop.f32.mrf.mxu0
    %v4074 = vadd.f32 %v4061, %v4073
    %v4075 = vpop.f32.mrf.mxu0
    %4076 = vdwg.mxu0
    %4077 = vmatpush.bf16.msra.mxu0 %v3006
    %4078 = vmatpush.bf16.msra.mxu0 %v2999
    %4079 = vmatpush.bf16.msra.mxu0 %v2992
    %4080 = vmatpush.bf16.msra.mxu0 %v2985
    %4081 = vmatpush.bf16.msra.mxu0 %v2978
    %4082 = vmatpush.bf16.msra.mxu0 %v2971
    %4083 = vmatpush.bf16.msra.mxu0 %v2964
    %4084 = vmatpush.bf16.msra.mxu0 %v2957
    %4085 = vmatmul.bf16.gmra.mxu0 %v199
    %v4086 = vpop.f32.mrf.mxu0
    %v4087 = vadd.f32 %v4074, %v4086
    %v4088 = vpop.f32.mrf.mxu0
    %4089 = vdwg.mxu0
    %4090 = vmatpush.bf16.msra.mxu0 %v3062
    %4091 = vmatpush.bf16.msra.mxu0 %v3055
    %4092 = vmatpush.bf16.msra.mxu0 %v3048
    %4093 = vmatpush.bf16.msra.mxu0 %v3041
    %4094 = vmatpush.bf16.msra.mxu0 %v3034
    %4095 = vmatpush.bf16.msra.mxu0 %v3027
    %4096 = vmatpush.bf16.msra.mxu0 %v3020
    %4097 = vmatpush.bf16.msra.mxu0 %v3013
    %4098 = vmatmul.bf16.gmra.mxu0 %v200
    %v4099 = vpop.f32.mrf.mxu0
    %v4100 = vadd.f32 %v4087, %v4099
    %v4101 = vpop.f32.mrf.mxu0
    %4102 = vdwg.mxu0
    %4103 = vmatpush.bf16.msra.mxu0 %v3118
    %4104 = vmatpush.bf16.msra.mxu0 %v3111
    %4105 = vmatpush.bf16.msra.mxu0 %v3104
    %4106 = vmatpush.bf16.msra.mxu0 %v3097
    %4107 = vmatpush.bf16.msra.mxu0 %v3090
    %4108 = vmatpush.bf16.msra.mxu0 %v3083
    %4109 = vmatpush.bf16.msra.mxu0 %v3076
    %4110 = vmatpush.bf16.msra.mxu0 %v3069
    %4111 = vmatmul.bf16.gmra.mxu0 %v201
    %v4112 = vpop.f32.mrf.mxu0
    %v4113 = vadd.f32 %v4100, %v4112
    %v4114 = vpop.f32.mrf.mxu0
    %4115 = vdwg.mxu0
    %4116 = vmatpush.bf16.msra.mxu0 %v3174
    %4117 = vmatpush.bf16.msra.mxu0 %v3167
    %4118 = vmatpush.bf16.msra.mxu0 %v3160
    %4119 = vmatpush.bf16.msra.mxu0 %v3153
    %4120 = vmatpush.bf16.msra.mxu0 %v3146
    %4121 = vmatpush.bf16.msra.mxu0 %v3139
    %4122 = vmatpush.bf16.msra.mxu0 %v3132
    %4123 = vmatpush.bf16.msra.mxu0 %v3125
    %4124 = vmatmul.bf16.gmra.mxu0 %v202
    %v4125 = vpop.f32.mrf.mxu0
    %v4126 = vadd.f32 %v4113, %v4125
    %v4127 = vpop.f32.mrf.mxu0
    %4128 = vdwg.mxu0
    %4129 = vmatpush.bf16.msra.mxu0 %v2671
    %4130 = vmatpush.bf16.msra.mxu0 %v2664
    %4131 = vmatpush.bf16.msra.mxu0 %v2657
    %4132 = vmatpush.bf16.msra.mxu0 %v2650
    %4133 = vmatpush.bf16.msra.mxu0 %v2643
    %4134 = vmatpush.bf16.msra.mxu0 %v2636
    %4135 = vmatpush.bf16.msra.mxu0 %v2629
    %4136 = vmatpush.bf16.msra.mxu0 %v2622
    %4137 = vmatmul.bf16.gmra.mxu0 %v193
    %v4138 = vpop.f32.mrf.mxu0
    %v4139 = vadd.f32 %v848, %v4138
    %v4140 = vpop.f32.mrf.mxu0
    %4141 = vdwg.mxu0
    %4142 = vmatpush.bf16.msra.mxu0 %v2727
    %4143 = vmatpush.bf16.msra.mxu0 %v2720
    %4144 = vmatpush.bf16.msra.mxu0 %v2713
    %4145 = vmatpush.bf16.msra.mxu0 %v2706
    %4146 = vmatpush.bf16.msra.mxu0 %v2699
    %4147 = vmatpush.bf16.msra.mxu0 %v2692
    %4148 = vmatpush.bf16.msra.mxu0 %v2685
    %4149 = vmatpush.bf16.msra.mxu0 %v2678
    %4150 = vmatmul.bf16.gmra.mxu0 %v194
    %v4151 = vpop.f32.mrf.mxu0
    %v4152 = vadd.f32 %v4139, %v4151
    %v4153 = vpop.f32.mrf.mxu0
    %4154 = vdwg.mxu0
    %4155 = vmatpush.bf16.msra.mxu0 %v2783
    %4156 = vmatpush.bf16.msra.mxu0 %v2776
    %4157 = vmatpush.bf16.msra.mxu0 %v2769
    %4158 = vmatpush.bf16.msra.mxu0 %v2762
    %4159 = vmatpush.bf16.msra.mxu0 %v2755
    %4160 = vmatpush.bf16.msra.mxu0 %v2748
    %4161 = vmatpush.bf16.msra.mxu0 %v2741
    %4162 = vmatpush.bf16.msra.mxu0 %v2734
    %4163 = vmatmul.bf16.gmra.mxu0 %v195
    %v4164 = vpop.f32.mrf.mxu0
    %v4165 = vadd.f32 %v4152, %v4164
    %v4166 = vpop.f32.mrf.mxu0
    %4167 = vdwg.mxu0
    %4168 = vmatpush.bf16.msra.mxu0 %v2839
    %4169 = vmatpush.bf16.msra.mxu0 %v2832
    %4170 = vmatpush.bf16.msra.mxu0 %v2825
    %4171 = vmatpush.bf16.msra.mxu0 %v2818
    %4172 = vmatpush.bf16.msra.mxu0 %v2811
    %4173 = vmatpush.bf16.msra.mxu0 %v2804
    %4174 = vmatpush.bf16.msra.mxu0 %v2797
    %4175 = vmatpush.bf16.msra.mxu0 %v2790
    %4176 = vmatmul.bf16.gmra.mxu0 %v196
    %v4177 = vpop.f32.mrf.mxu0
    %v4178 = vadd.f32 %v4165, %v4177
    %v4179 = vpop.f32.mrf.mxu0
    %4180 = vdwg.mxu0
    %4181 = vmatpush.bf16.msra.mxu0 %v2895
    %4182 = vmatpush.bf16.msra.mxu0 %v2888
    %4183 = vmatpush.bf16.msra.mxu0 %v2881
    %4184 = vmatpush.bf16.msra.mxu0 %v2874
    %4185 = vmatpush.bf16.msra.mxu0 %v2867
    %4186 = vmatpush.bf16.msra.mxu0 %v2860
    %4187 = vmatpush.bf16.msra.mxu0 %v2853
    %4188 = vmatpush.bf16.msra.mxu0 %v2846
    %4189 = vmatmul.bf16.gmra.mxu0 %v197
    %v4190 = vpop.f32.mrf.mxu0
    %v4191 = vadd.f32 %v4178, %v4190
    %v4192 = vpop.f32.mrf.mxu0
    %4193 = vdwg.mxu0
    %4194 = vmatpush.bf16.msra.mxu0 %v2951
    %4195 = vmatpush.bf16.msra.mxu0 %v2944
    %4196 = vmatpush.bf16.msra.mxu0 %v2937
    %4197 = vmatpush.bf16.msra.mxu0 %v2930
    %4198 = vmatpush.bf16.msra.mxu0 %v2923
    %4199 = vmatpush.bf16.msra.mxu0 %v2916
    %4200 = vmatpush.bf16.msra.mxu0 %v2909
    %4201 = vmatpush.bf16.msra.mxu0 %v2902
    %4202 = vmatmul.bf16.gmra.mxu0 %v198
    %v4203 = vpop.f32.mrf.mxu0
    %v4204 = vadd.f32 %v4191, %v4203
    %v4205 = vpop.f32.mrf.mxu0
    %4206 = vdwg.mxu0
    %4207 = vmatpush.bf16.msra.mxu0 %v3007
    %4208 = vmatpush.bf16.msra.mxu0 %v3000
    %4209 = vmatpush.bf16.msra.mxu0 %v2993
    %4210 = vmatpush.bf16.msra.mxu0 %v2986
    %4211 = vmatpush.bf16.msra.mxu0 %v2979
    %4212 = vmatpush.bf16.msra.mxu0 %v2972
    %4213 = vmatpush.bf16.msra.mxu0 %v2965
    %4214 = vmatpush.bf16.msra.mxu0 %v2958
    %4215 = vmatmul.bf16.gmra.mxu0 %v199
    %v4216 = vpop.f32.mrf.mxu0
    %v4217 = vadd.f32 %v4204, %v4216
    %v4218 = vpop.f32.mrf.mxu0
    %4219 = vdwg.mxu0
    %4220 = vmatpush.bf16.msra.mxu0 %v3063
    %4221 = vmatpush.bf16.msra.mxu0 %v3056
    %4222 = vmatpush.bf16.msra.mxu0 %v3049
    %4223 = vmatpush.bf16.msra.mxu0 %v3042
    %4224 = vmatpush.bf16.msra.mxu0 %v3035
    %4225 = vmatpush.bf16.msra.mxu0 %v3028
    %4226 = vmatpush.bf16.msra.mxu0 %v3021
    %4227 = vmatpush.bf16.msra.mxu0 %v3014
    %4228 = vmatmul.bf16.gmra.mxu0 %v200
    %v4229 = vpop.f32.mrf.mxu0
    %v4230 = vadd.f32 %v4217, %v4229
    %v4231 = vpop.f32.mrf.mxu0
    %4232 = vdwg.mxu0
    %4233 = vmatpush.bf16.msra.mxu0 %v3119
    %4234 = vmatpush.bf16.msra.mxu0 %v3112
    %4235 = vmatpush.bf16.msra.mxu0 %v3105
    %4236 = vmatpush.bf16.msra.mxu0 %v3098
    %4237 = vmatpush.bf16.msra.mxu0 %v3091
    %4238 = vmatpush.bf16.msra.mxu0 %v3084
    %4239 = vmatpush.bf16.msra.mxu0 %v3077
    %4240 = vmatpush.bf16.msra.mxu0 %v3070
    %4241 = vmatmul.bf16.gmra.mxu0 %v201
    %v4242 = vpop.f32.mrf.mxu0
    %v4243 = vadd.f32 %v4230, %v4242
    %v4244 = vpop.f32.mrf.mxu0
    %4245 = vdwg.mxu0
    %4246 = vmatpush.bf16.msra.mxu0 %v3175
    %4247 = vmatpush.bf16.msra.mxu0 %v3168
    %4248 = vmatpush.bf16.msra.mxu0 %v3161
    %4249 = vmatpush.bf16.msra.mxu0 %v3154
    %4250 = vmatpush.bf16.msra.mxu0 %v3147
    %4251 = vmatpush.bf16.msra.mxu0 %v3140
    %4252 = vmatpush.bf16.msra.mxu0 %v3133
    %4253 = vmatpush.bf16.msra.mxu0 %v3126
    %4254 = vmatmul.bf16.gmra.mxu0 %v202
    %v4255 = vpop.f32.mrf.mxu0
    %v4256 = vadd.f32 %v4243, %v4255
    %v4257 = vpop.f32.mrf.mxu0
    %4258 = vdwg.mxu0
    %4259 = vmatpush.bf16.msra.mxu0 %v2672
    %4260 = vmatpush.bf16.msra.mxu0 %v2665
    %4261 = vmatpush.bf16.msra.mxu0 %v2658
    %4262 = vmatpush.bf16.msra.mxu0 %v2651
    %4263 = vmatpush.bf16.msra.mxu0 %v2644
    %4264 = vmatpush.bf16.msra.mxu0 %v2637
    %4265 = vmatpush.bf16.msra.mxu0 %v2630
    %4266 = vmatpush.bf16.msra.mxu0 %v2623
    %4267 = vmatmul.bf16.gmra.mxu0 %v193
    %v4268 = vpop.f32.mrf.mxu0
    %v4269 = vadd.f32 %v849, %v4268
    %v4270 = vpop.f32.mrf.mxu0
    %4271 = vdwg.mxu0
    %4272 = vmatpush.bf16.msra.mxu0 %v2728
    %4273 = vmatpush.bf16.msra.mxu0 %v2721
    %4274 = vmatpush.bf16.msra.mxu0 %v2714
    %4275 = vmatpush.bf16.msra.mxu0 %v2707
    %4276 = vmatpush.bf16.msra.mxu0 %v2700
    %4277 = vmatpush.bf16.msra.mxu0 %v2693
    %4278 = vmatpush.bf16.msra.mxu0 %v2686
    %4279 = vmatpush.bf16.msra.mxu0 %v2679
    %4280 = vmatmul.bf16.gmra.mxu0 %v194
    %v4281 = vpop.f32.mrf.mxu0
    %v4282 = vadd.f32 %v4269, %v4281
    %v4283 = vpop.f32.mrf.mxu0
    %4284 = vdwg.mxu0
    %4285 = vmatpush.bf16.msra.mxu0 %v2784
    %4286 = vmatpush.bf16.msra.mxu0 %v2777
    %4287 = vmatpush.bf16.msra.mxu0 %v2770
    %4288 = vmatpush.bf16.msra.mxu0 %v2763
    %4289 = vmatpush.bf16.msra.mxu0 %v2756
    %4290 = vmatpush.bf16.msra.mxu0 %v2749
    %4291 = vmatpush.bf16.msra.mxu0 %v2742
    %4292 = vmatpush.bf16.msra.mxu0 %v2735
    %4293 = vmatmul.bf16.gmra.mxu0 %v195
    %v4294 = vpop.f32.mrf.mxu0
    %v4295 = vadd.f32 %v4282, %v4294
    %v4296 = vpop.f32.mrf.mxu0
    %4297 = vdwg.mxu0
    %4298 = vmatpush.bf16.msra.mxu0 %v2840
    %4299 = vmatpush.bf16.msra.mxu0 %v2833
    %4300 = vmatpush.bf16.msra.mxu0 %v2826
    %4301 = vmatpush.bf16.msra.mxu0 %v2819
    %4302 = vmatpush.bf16.msra.mxu0 %v2812
    %4303 = vmatpush.bf16.msra.mxu0 %v2805
    %4304 = vmatpush.bf16.msra.mxu0 %v2798
    %4305 = vmatpush.bf16.msra.mxu0 %v2791
    %4306 = vmatmul.bf16.gmra.mxu0 %v196
    %v4307 = vpop.f32.mrf.mxu0
    %v4308 = vadd.f32 %v4295, %v4307
    %v4309 = vpop.f32.mrf.mxu0
    %4310 = vdwg.mxu0
    %4311 = vmatpush.bf16.msra.mxu0 %v2896
    %4312 = vmatpush.bf16.msra.mxu0 %v2889
    %4313 = vmatpush.bf16.msra.mxu0 %v2882
    %4314 = vmatpush.bf16.msra.mxu0 %v2875
    %4315 = vmatpush.bf16.msra.mxu0 %v2868
    %4316 = vmatpush.bf16.msra.mxu0 %v2861
    %4317 = vmatpush.bf16.msra.mxu0 %v2854
    %4318 = vmatpush.bf16.msra.mxu0 %v2847
    %4319 = vmatmul.bf16.gmra.mxu0 %v197
    %v4320 = vpop.f32.mrf.mxu0
    %v4321 = vadd.f32 %v4308, %v4320
    %v4322 = vpop.f32.mrf.mxu0
    %4323 = vdwg.mxu0
    %4324 = vmatpush.bf16.msra.mxu0 %v2952
    %4325 = vmatpush.bf16.msra.mxu0 %v2945
    %4326 = vmatpush.bf16.msra.mxu0 %v2938
    %4327 = vmatpush.bf16.msra.mxu0 %v2931
    %4328 = vmatpush.bf16.msra.mxu0 %v2924
    %4329 = vmatpush.bf16.msra.mxu0 %v2917
    %4330 = vmatpush.bf16.msra.mxu0 %v2910
    %4331 = vmatpush.bf16.msra.mxu0 %v2903
    %4332 = vmatmul.bf16.gmra.mxu0 %v198
    %v4333 = vpop.f32.mrf.mxu0
    %v4334 = vadd.f32 %v4321, %v4333
    %v4335 = vpop.f32.mrf.mxu0
    %4336 = vdwg.mxu0
    %4337 = vmatpush.bf16.msra.mxu0 %v3008
    %4338 = vmatpush.bf16.msra.mxu0 %v3001
    %4339 = vmatpush.bf16.msra.mxu0 %v2994
    %4340 = vmatpush.bf16.msra.mxu0 %v2987
    %4341 = vmatpush.bf16.msra.mxu0 %v2980
    %4342 = vmatpush.bf16.msra.mxu0 %v2973
    %4343 = vmatpush.bf16.msra.mxu0 %v2966
    %4344 = vmatpush.bf16.msra.mxu0 %v2959
    %4345 = vmatmul.bf16.gmra.mxu0 %v199
    %v4346 = vpop.f32.mrf.mxu0
    %v4347 = vadd.f32 %v4334, %v4346
    %v4348 = vpop.f32.mrf.mxu0
    %4349 = vdwg.mxu0
    %4350 = vmatpush.bf16.msra.mxu0 %v3064
    %4351 = vmatpush.bf16.msra.mxu0 %v3057
    %4352 = vmatpush.bf16.msra.mxu0 %v3050
    %4353 = vmatpush.bf16.msra.mxu0 %v3043
    %4354 = vmatpush.bf16.msra.mxu0 %v3036
    %4355 = vmatpush.bf16.msra.mxu0 %v3029
    %4356 = vmatpush.bf16.msra.mxu0 %v3022
    %4357 = vmatpush.bf16.msra.mxu0 %v3015
    %4358 = vmatmul.bf16.gmra.mxu0 %v200
    %v4359 = vpop.f32.mrf.mxu0
    %v4360 = vadd.f32 %v4347, %v4359
    %v4361 = vpop.f32.mrf.mxu0
    %4362 = vdwg.mxu0
    %4363 = vmatpush.bf16.msra.mxu0 %v3120
    %4364 = vmatpush.bf16.msra.mxu0 %v3113
    %4365 = vmatpush.bf16.msra.mxu0 %v3106
    %4366 = vmatpush.bf16.msra.mxu0 %v3099
    %4367 = vmatpush.bf16.msra.mxu0 %v3092
    %4368 = vmatpush.bf16.msra.mxu0 %v3085
    %4369 = vmatpush.bf16.msra.mxu0 %v3078
    %4370 = vmatpush.bf16.msra.mxu0 %v3071
    %4371 = vmatmul.bf16.gmra.mxu0 %v201
    %v4372 = vpop.f32.mrf.mxu0
    %v4373 = vadd.f32 %v4360, %v4372
    %v4374 = vpop.f32.mrf.mxu0
    %4375 = vdwg.mxu0
    %4376 = vmatpush.bf16.msra.mxu0 %v3176
    %4377 = vmatpush.bf16.msra.mxu0 %v3169
    %4378 = vmatpush.bf16.msra.mxu0 %v3162
    %4379 = vmatpush.bf16.msra.mxu0 %v3155
    %4380 = vmatpush.bf16.msra.mxu0 %v3148
    %4381 = vmatpush.bf16.msra.mxu0 %v3141
    %4382 = vmatpush.bf16.msra.mxu0 %v3134
    %4383 = vmatpush.bf16.msra.mxu0 %v3127
    %4384 = vmatmul.bf16.gmra.mxu0 %v202
    %v4385 = vpop.f32.mrf.mxu0
    %v4386 = vadd.f32 %v4373, %v4385
    %v4387 = vpop.f32.mrf.mxu0
    %4388 = vdwg.mxu0
    %4389 = vmatpush.bf16.msra.mxu0 %v2673
    %4390 = vmatpush.bf16.msra.mxu0 %v2666
    %4391 = vmatpush.bf16.msra.mxu0 %v2659
    %4392 = vmatpush.bf16.msra.mxu0 %v2652
    %4393 = vmatpush.bf16.msra.mxu0 %v2645
    %4394 = vmatpush.bf16.msra.mxu0 %v2638
    %4395 = vmatpush.bf16.msra.mxu0 %v2631
    %4396 = vmatpush.bf16.msra.mxu0 %v2624
    %4397 = vmatmul.bf16.gmra.mxu0 %v193
    %v4398 = vpop.f32.mrf.mxu0
    %v4399 = vadd.f32 %v850, %v4398
    %v4400 = vpop.f32.mrf.mxu0
    %4401 = vdwg.mxu0
    %4402 = vmatpush.bf16.msra.mxu0 %v2729
    %4403 = vmatpush.bf16.msra.mxu0 %v2722
    %4404 = vmatpush.bf16.msra.mxu0 %v2715
    %4405 = vmatpush.bf16.msra.mxu0 %v2708
    %4406 = vmatpush.bf16.msra.mxu0 %v2701
    %4407 = vmatpush.bf16.msra.mxu0 %v2694
    %4408 = vmatpush.bf16.msra.mxu0 %v2687
    %4409 = vmatpush.bf16.msra.mxu0 %v2680
    %4410 = vmatmul.bf16.gmra.mxu0 %v194
    %v4411 = vpop.f32.mrf.mxu0
    %v4412 = vadd.f32 %v4399, %v4411
    %v4413 = vpop.f32.mrf.mxu0
    %4414 = vdwg.mxu0
    %4415 = vmatpush.bf16.msra.mxu0 %v2785
    %4416 = vmatpush.bf16.msra.mxu0 %v2778
    %4417 = vmatpush.bf16.msra.mxu0 %v2771
    %4418 = vmatpush.bf16.msra.mxu0 %v2764
    %4419 = vmatpush.bf16.msra.mxu0 %v2757
    %4420 = vmatpush.bf16.msra.mxu0 %v2750
    %4421 = vmatpush.bf16.msra.mxu0 %v2743
    %4422 = vmatpush.bf16.msra.mxu0 %v2736
    %4423 = vmatmul.bf16.gmra.mxu0 %v195
    %v4424 = vpop.f32.mrf.mxu0
    %v4425 = vadd.f32 %v4412, %v4424
    %v4426 = vpop.f32.mrf.mxu0
    %4427 = vdwg.mxu0
    %4428 = vmatpush.bf16.msra.mxu0 %v2841
    %4429 = vmatpush.bf16.msra.mxu0 %v2834
    %4430 = vmatpush.bf16.msra.mxu0 %v2827
    %4431 = vmatpush.bf16.msra.mxu0 %v2820
    %4432 = vmatpush.bf16.msra.mxu0 %v2813
    %4433 = vmatpush.bf16.msra.mxu0 %v2806
    %4434 = vmatpush.bf16.msra.mxu0 %v2799
    %4435 = vmatpush.bf16.msra.mxu0 %v2792
    %4436 = vmatmul.bf16.gmra.mxu0 %v196
    %v4437 = vpop.f32.mrf.mxu0
    %v4438 = vadd.f32 %v4425, %v4437
    %v4439 = vpop.f32.mrf.mxu0
    %4440 = vdwg.mxu0
    %4441 = vmatpush.bf16.msra.mxu0 %v2897
    %4442 = vmatpush.bf16.msra.mxu0 %v2890
    %4443 = vmatpush.bf16.msra.mxu0 %v2883
    %4444 = vmatpush.bf16.msra.mxu0 %v2876
    %4445 = vmatpush.bf16.msra.mxu0 %v2869
    %4446 = vmatpush.bf16.msra.mxu0 %v2862
    %4447 = vmatpush.bf16.msra.mxu0 %v2855
    %4448 = vmatpush.bf16.msra.mxu0 %v2848
    %4449 = vmatmul.bf16.gmra.mxu0 %v197
    %v4450 = vpop.f32.mrf.mxu0
    %v4451 = vadd.f32 %v4438, %v4450
    %v4452 = vpop.f32.mrf.mxu0
    %4453 = vdwg.mxu0
    %4454 = vmatpush.bf16.msra.mxu0 %v2953
    %4455 = vmatpush.bf16.msra.mxu0 %v2946
    %4456 = vmatpush.bf16.msra.mxu0 %v2939
    %4457 = vmatpush.bf16.msra.mxu0 %v2932
    %4458 = vmatpush.bf16.msra.mxu0 %v2925
    %4459 = vmatpush.bf16.msra.mxu0 %v2918
    %4460 = vmatpush.bf16.msra.mxu0 %v2911
    %4461 = vmatpush.bf16.msra.mxu0 %v2904
    %4462 = vmatmul.bf16.gmra.mxu0 %v198
    %v4463 = vpop.f32.mrf.mxu0
    %v4464 = vadd.f32 %v4451, %v4463
    %v4465 = vpop.f32.mrf.mxu0
    %4466 = vdwg.mxu0
    %4467 = vmatpush.bf16.msra.mxu0 %v3009
    %4468 = vmatpush.bf16.msra.mxu0 %v3002
    %4469 = vmatpush.bf16.msra.mxu0 %v2995
    %4470 = vmatpush.bf16.msra.mxu0 %v2988
    %4471 = vmatpush.bf16.msra.mxu0 %v2981
    %4472 = vmatpush.bf16.msra.mxu0 %v2974
    %4473 = vmatpush.bf16.msra.mxu0 %v2967
    %4474 = vmatpush.bf16.msra.mxu0 %v2960
    %4475 = vmatmul.bf16.gmra.mxu0 %v199
    %v4476 = vpop.f32.mrf.mxu0
    %v4477 = vadd.f32 %v4464, %v4476
    %v4478 = vpop.f32.mrf.mxu0
    %4479 = vdwg.mxu0
    %4480 = vmatpush.bf16.msra.mxu0 %v3065
    %4481 = vmatpush.bf16.msra.mxu0 %v3058
    %4482 = vmatpush.bf16.msra.mxu0 %v3051
    %4483 = vmatpush.bf16.msra.mxu0 %v3044
    %4484 = vmatpush.bf16.msra.mxu0 %v3037
    %4485 = vmatpush.bf16.msra.mxu0 %v3030
    %4486 = vmatpush.bf16.msra.mxu0 %v3023
    %4487 = vmatpush.bf16.msra.mxu0 %v3016
    %4488 = vmatmul.bf16.gmra.mxu0 %v200
    %v4489 = vpop.f32.mrf.mxu0
    %v4490 = vadd.f32 %v4477, %v4489
    %v4491 = vpop.f32.mrf.mxu0
    %4492 = vdwg.mxu0
    %4493 = vmatpush.bf16.msra.mxu0 %v3121
    %4494 = vmatpush.bf16.msra.mxu0 %v3114
    %4495 = vmatpush.bf16.msra.mxu0 %v3107
    %4496 = vmatpush.bf16.msra.mxu0 %v3100
    %4497 = vmatpush.bf16.msra.mxu0 %v3093
    %4498 = vmatpush.bf16.msra.mxu0 %v3086
    %4499 = vmatpush.bf16.msra.mxu0 %v3079
    %4500 = vmatpush.bf16.msra.mxu0 %v3072
    %4501 = vmatmul.bf16.gmra.mxu0 %v201
    %v4502 = vpop.f32.mrf.mxu0
    %v4503 = vadd.f32 %v4490, %v4502
    %v4504 = vpop.f32.mrf.mxu0
    %4505 = vdwg.mxu0
    %4506 = vmatpush.bf16.msra.mxu0 %v3177
    %4507 = vmatpush.bf16.msra.mxu0 %v3170
    %4508 = vmatpush.bf16.msra.mxu0 %v3163
    %4509 = vmatpush.bf16.msra.mxu0 %v3156
    %4510 = vmatpush.bf16.msra.mxu0 %v3149
    %4511 = vmatpush.bf16.msra.mxu0 %v3142
    %4512 = vmatpush.bf16.msra.mxu0 %v3135
    %4513 = vmatpush.bf16.msra.mxu0 %v3128
    %4514 = vmatmul.bf16.gmra.mxu0 %v202
    %v4515 = vpop.f32.mrf.mxu0
    %v4516 = vadd.f32 %v4503, %v4515
    %v4517 = vpop.f32.mrf.mxu0
    %4518 = vdwg.mxu0
    %4519 = vmatpush.bf16.msra.mxu0 %v2674
    %4520 = vmatpush.bf16.msra.mxu0 %v2667
    %4521 = vmatpush.bf16.msra.mxu0 %v2660
    %4522 = vmatpush.bf16.msra.mxu0 %v2653
    %4523 = vmatpush.bf16.msra.mxu0 %v2646
    %4524 = vmatpush.bf16.msra.mxu0 %v2639
    %4525 = vmatpush.bf16.msra.mxu0 %v2632
    %4526 = vmatpush.bf16.msra.mxu0 %v2625
    %4527 = vmatmul.bf16.gmra.mxu0 %v193
    %v4528 = vpop.f32.mrf.mxu0
    %v4529 = vadd.f32 %v851, %v4528
    %v4530 = vpop.f32.mrf.mxu0
    %4531 = vdwg.mxu0
    %4532 = vmatpush.bf16.msra.mxu0 %v2730
    %4533 = vmatpush.bf16.msra.mxu0 %v2723
    %4534 = vmatpush.bf16.msra.mxu0 %v2716
    %4535 = vmatpush.bf16.msra.mxu0 %v2709
    %4536 = vmatpush.bf16.msra.mxu0 %v2702
    %4537 = vmatpush.bf16.msra.mxu0 %v2695
    %4538 = vmatpush.bf16.msra.mxu0 %v2688
    %4539 = vmatpush.bf16.msra.mxu0 %v2681
    %4540 = vmatmul.bf16.gmra.mxu0 %v194
    %v4541 = vpop.f32.mrf.mxu0
    %v4542 = vadd.f32 %v4529, %v4541
    %v4543 = vpop.f32.mrf.mxu0
    %4544 = vdwg.mxu0
    %4545 = vmatpush.bf16.msra.mxu0 %v2786
    %4546 = vmatpush.bf16.msra.mxu0 %v2779
    %4547 = vmatpush.bf16.msra.mxu0 %v2772
    %4548 = vmatpush.bf16.msra.mxu0 %v2765
    %4549 = vmatpush.bf16.msra.mxu0 %v2758
    %4550 = vmatpush.bf16.msra.mxu0 %v2751
    %4551 = vmatpush.bf16.msra.mxu0 %v2744
    %4552 = vmatpush.bf16.msra.mxu0 %v2737
    %4553 = vmatmul.bf16.gmra.mxu0 %v195
    %v4554 = vpop.f32.mrf.mxu0
    %v4555 = vadd.f32 %v4542, %v4554
    %v4556 = vpop.f32.mrf.mxu0
    %4557 = vdwg.mxu0
    %4558 = vmatpush.bf16.msra.mxu0 %v2842
    %4559 = vmatpush.bf16.msra.mxu0 %v2835
    %4560 = vmatpush.bf16.msra.mxu0 %v2828
    %4561 = vmatpush.bf16.msra.mxu0 %v2821
    %4562 = vmatpush.bf16.msra.mxu0 %v2814
    %4563 = vmatpush.bf16.msra.mxu0 %v2807
    %4564 = vmatpush.bf16.msra.mxu0 %v2800
    %4565 = vmatpush.bf16.msra.mxu0 %v2793
    %4566 = vmatmul.bf16.gmra.mxu0 %v196
    %v4567 = vpop.f32.mrf.mxu0
    %v4568 = vadd.f32 %v4555, %v4567
    %v4569 = vpop.f32.mrf.mxu0
    %4570 = vdwg.mxu0
    %4571 = vmatpush.bf16.msra.mxu0 %v2898
    %4572 = vmatpush.bf16.msra.mxu0 %v2891
    %4573 = vmatpush.bf16.msra.mxu0 %v2884
    %4574 = vmatpush.bf16.msra.mxu0 %v2877
    %4575 = vmatpush.bf16.msra.mxu0 %v2870
    %4576 = vmatpush.bf16.msra.mxu0 %v2863
    %4577 = vmatpush.bf16.msra.mxu0 %v2856
    %4578 = vmatpush.bf16.msra.mxu0 %v2849
    %4579 = vmatmul.bf16.gmra.mxu0 %v197
    %v4580 = vpop.f32.mrf.mxu0
    %v4581 = vadd.f32 %v4568, %v4580
    %v4582 = vpop.f32.mrf.mxu0
    %4583 = vdwg.mxu0
    %4584 = vmatpush.bf16.msra.mxu0 %v2954
    %4585 = vmatpush.bf16.msra.mxu0 %v2947
    %4586 = vmatpush.bf16.msra.mxu0 %v2940
    %4587 = vmatpush.bf16.msra.mxu0 %v2933
    %4588 = vmatpush.bf16.msra.mxu0 %v2926
    %4589 = vmatpush.bf16.msra.mxu0 %v2919
    %4590 = vmatpush.bf16.msra.mxu0 %v2912
    %4591 = vmatpush.bf16.msra.mxu0 %v2905
    %4592 = vmatmul.bf16.gmra.mxu0 %v198
    %v4593 = vpop.f32.mrf.mxu0
    %v4594 = vadd.f32 %v4581, %v4593
    %v4595 = vpop.f32.mrf.mxu0
    %4596 = vdwg.mxu0
    %4597 = vmatpush.bf16.msra.mxu0 %v3010
    %4598 = vmatpush.bf16.msra.mxu0 %v3003
    %4599 = vmatpush.bf16.msra.mxu0 %v2996
    %4600 = vmatpush.bf16.msra.mxu0 %v2989
    %4601 = vmatpush.bf16.msra.mxu0 %v2982
    %4602 = vmatpush.bf16.msra.mxu0 %v2975
    %4603 = vmatpush.bf16.msra.mxu0 %v2968
    %4604 = vmatpush.bf16.msra.mxu0 %v2961
    %4605 = vmatmul.bf16.gmra.mxu0 %v199
    %v4606 = vpop.f32.mrf.mxu0
    %v4607 = vadd.f32 %v4594, %v4606
    %v4608 = vpop.f32.mrf.mxu0
    %4609 = vdwg.mxu0
    %4610 = vmatpush.bf16.msra.mxu0 %v3066
    %4611 = vmatpush.bf16.msra.mxu0 %v3059
    %4612 = vmatpush.bf16.msra.mxu0 %v3052
    %4613 = vmatpush.bf16.msra.mxu0 %v3045
    %4614 = vmatpush.bf16.msra.mxu0 %v3038
    %4615 = vmatpush.bf16.msra.mxu0 %v3031
    %4616 = vmatpush.bf16.msra.mxu0 %v3024
    %4617 = vmatpush.bf16.msra.mxu0 %v3017
    %4618 = vmatmul.bf16.gmra.mxu0 %v200
    %v4619 = vpop.f32.mrf.mxu0
    %v4620 = vadd.f32 %v4607, %v4619
    %v4621 = vpop.f32.mrf.mxu0
    %4622 = vdwg.mxu0
    %4623 = vmatpush.bf16.msra.mxu0 %v3122
    %4624 = vmatpush.bf16.msra.mxu0 %v3115
    %4625 = vmatpush.bf16.msra.mxu0 %v3108
    %4626 = vmatpush.bf16.msra.mxu0 %v3101
    %4627 = vmatpush.bf16.msra.mxu0 %v3094
    %4628 = vmatpush.bf16.msra.mxu0 %v3087
    %4629 = vmatpush.bf16.msra.mxu0 %v3080
    %4630 = vmatpush.bf16.msra.mxu0 %v3073
    %4631 = vmatmul.bf16.gmra.mxu0 %v201
    %v4632 = vpop.f32.mrf.mxu0
    %v4633 = vadd.f32 %v4620, %v4632
    %v4634 = vpop.f32.mrf.mxu0
    %4635 = vdwg.mxu0
    %4636 = vmatpush.bf16.msra.mxu0 %v3178
    %4637 = vmatpush.bf16.msra.mxu0 %v3171
    %4638 = vmatpush.bf16.msra.mxu0 %v3164
    %4639 = vmatpush.bf16.msra.mxu0 %v3157
    %4640 = vmatpush.bf16.msra.mxu0 %v3150
    %4641 = vmatpush.bf16.msra.mxu0 %v3143
    %4642 = vmatpush.bf16.msra.mxu0 %v3136
    %4643 = vmatpush.bf16.msra.mxu0 %v3129
    %4644 = vmatmul.bf16.gmra.mxu0 %v202
    %v4645 = vpop.f32.mrf.mxu0
    %v4646 = vadd.f32 %v4633, %v4645
    %v4647 = vpop.f32.mrf.mxu0
    %4648 = vdwg.mxu0
    %v4649 = vmax.f32 %v3866, 0.0
    %v4650 = vmax.f32 %v3996, 0.0
    %v4651 = vmax.f32 %v4126, 0.0
    %v4652 = vmax.f32 %v4256, 0.0
    %v4653 = vpack.c.bf16 %v4649, %v4649
    %v4654 = vpack.c.bf16 %v4650, %v4650
    %v4655 = vpack.c.bf16 %v4651, %v4651
    %v4656 = vpack.c.bf16 %v4652, %v4652
    %v4657 = vld [vmem:[#allocation11] sm:$0xff]
    %v4658 = vld [vmem:[#allocation11 + $0x8] sm:$0xf]
    %v4659 = vld [vmem:[#allocation11 + $0xc] sm:$0xff]
    %v4660 = vld [vmem:[#allocation11 + $0x14] sm:$0xf]
    %v4661 = vld [vmem:[#allocation11 + $0x18] sm:$0xff]
    %v4662 = vld [vmem:[#allocation11 + $0x20] sm:$0xf]
    %v4663 = vld [vmem:[#allocation11 + $0x24] sm:$0xff]
    %v4664 = vld [vmem:[#allocation11 + $0x2c] sm:$0xf]
    %v4665 = vld [vmem:[#allocation11 + $0x30] sm:$0xff]
    %v4666 = vld [vmem:[#allocation11 + $0x38] sm:$0xf]
    %v4667 = vld [vmem:[#allocation11 + $0x3c] sm:$0xff]
    %v4668 = vld [vmem:[#allocation11 + $0x44] sm:$0xf]
    %v4669 = vld [vmem:[#allocation11 + $0x48] sm:$0xff]
    %v4670 = vld [vmem:[#allocation11 + $0x50] sm:$0xf]
    %v4671 = vld [vmem:[#allocation11 + $0x54] sm:$0xff]
    %v4672 = vld [vmem:[#allocation11 + $0x5c] sm:$0xf]
    %v4673 = vld [vmem:[#allocation11 + $0x60] sm:$0xff]
    %v4674 = vld [vmem:[#allocation11 + $0x68] sm:$0xf]
    %v4675 = vld [vmem:[#allocation11 + $0x6c] sm:$0xff]
    %v4676 = vld [vmem:[#allocation11 + $0x74] sm:$0xf]
    %v4677 = vld [vmem:[#allocation11 + $0x78] sm:$0xff]
    %v4678 = vld [vmem:[#allocation11 + $0x80] sm:$0xf]
    %v4679 = vld [vmem:[#allocation11 + $0x84] sm:$0xff]
    %v4680 = vld [vmem:[#allocation11 + $0x8c] sm:$0xf]
    %v4681 = vld [vmem:[#allocation11 + $0x90] sm:$0xff]
    %v4682 = vld [vmem:[#allocation11 + $0x98] sm:$0xf]
    %v4683 = vld [vmem:[#allocation11 + $0x9c] sm:$0xff]
    %v4684 = vld [vmem:[#allocation11 + $0xa4] sm:$0xf]
    %v4685 = vld [vmem:[#allocation11 + $0xa8] sm:$0xff]
    %v4686 = vld [vmem:[#allocation11 + $0xb0] sm:$0xf]
    %v4687 = vld [vmem:[#allocation11 + $0xb4] sm:$0xff]
    %v4688 = vld [vmem:[#allocation11 + $0xbc] sm:$0xf]
    %v4689 = vld [vmem:[#allocation11 + $0xc0] sm:$0xff]
    %v4690 = vld [vmem:[#allocation11 + $0xc8] sm:$0xf]
    %v4691 = vld [vmem:[#allocation11 + $0xcc] sm:$0xff]
    %v4692 = vld [vmem:[#allocation11 + $0xd4] sm:$0xf]
    %v4693 = vld [vmem:[#allocation11 + $0xd8] sm:$0xff]
    %v4694 = vld [vmem:[#allocation11 + $0xe0] sm:$0xf]
    %v4695 = vld [vmem:[#allocation11 + $0xe4] sm:$0xff]
    %v4696 = vld [vmem:[#allocation11 + $0xec] sm:$0xf]
    %v4697 = vld [vmem:[#allocation11 + $0xf0] sm:$0xff]
    %v4698 = vld [vmem:[#allocation11 + $0xf8] sm:$0xf]
    %v4699 = vld [vmem:[#allocation11 + $0xfc] sm:$0xff]
    %v4700 = vld [vmem:[#allocation11 + $0x104] sm:$0xf]
    %v4701 = vld [vmem:[#allocation11 + $0x108] sm:$0xff]
    %v4702 = vld [vmem:[#allocation11 + $0x110] sm:$0xf]
    %v4703 = vld [vmem:[#allocation11 + $0x114] sm:$0xff]
    %v4704 = vld [vmem:[#allocation11 + $0x11c] sm:$0xf]
    %v4705 = vld [vmem:[#allocation11 + $0x120] sm:$0xff]
    %v4706 = vld [vmem:[#allocation11 + $0x128] sm:$0xf]
    %v4707 = vld [vmem:[#allocation11 + $0x12c] sm:$0xff]
    %v4708 = vld [vmem:[#allocation11 + $0x134] sm:$0xf]
    %v4709 = vld [vmem:[#allocation11 + $0x138] sm:$0xff]
    %v4710 = vld [vmem:[#allocation11 + $0x140] sm:$0xf]
    %v4711 = vld [vmem:[#allocation11 + $0x144] sm:$0xff]
    %v4712 = vld [vmem:[#allocation11 + $0x14c] sm:$0xf]
    %v4713 = vld [vmem:[#allocation11 + $0x150] sm:$0xff]
    %v4714 = vld [vmem:[#allocation11 + $0x158] sm:$0xf]
    %v4715 = vld [vmem:[#allocation11 + $0x15c] sm:$0xff]
    %v4716 = vld [vmem:[#allocation11 + $0x164] sm:$0xf]
    %v4717 = vld [vmem:[#allocation11 + $0x168] sm:$0xff]
    %v4718 = vld [vmem:[#allocation11 + $0x170] sm:$0xf]
    %v4719 = vld [vmem:[#allocation11 + $0x174] sm:$0xff]
    %v4720 = vld [vmem:[#allocation11 + $0x17c] sm:$0xf]
    %v4721 = vld [vmem:[#allocation11 + $0x180] sm:$0xff]
    %v4722 = vld [vmem:[#allocation11 + $0x188] sm:$0xf]
    %v4723 = vld [vmem:[#allocation11 + $0x18c] sm:$0xff]
    %v4724 = vld [vmem:[#allocation11 + $0x194] sm:$0xf]
    %v4725 = vld [vmem:[#allocation11 + $0x198] sm:$0xff]
    %v4726 = vld [vmem:[#allocation11 + $0x1a0] sm:$0xf]
    %v4727 = vld [vmem:[#allocation11 + $0x1a4] sm:$0xff]
    %v4728 = vld [vmem:[#allocation11 + $0x1ac] sm:$0xf]
    %v4729 = vld [vmem:[#allocation11 + $0x1b0] sm:$0xff]
    %v4730 = vld [vmem:[#allocation11 + $0x1b8] sm:$0xf]
    %v4731 = vld [vmem:[#allocation11 + $0x1bc] sm:$0xff]
    %v4732 = vld [vmem:[#allocation11 + $0x1c4] sm:$0xf]
    %v4733 = vld [vmem:[#allocation11 + $0x1c8] sm:$0xff]
    %v4734 = vld [vmem:[#allocation11 + $0x1d0] sm:$0xf]
    %v4735 = vld [vmem:[#allocation11 + $0x1d4] sm:$0xff]
    %v4736 = vld [vmem:[#allocation11 + $0x1dc] sm:$0xf]
    %v4737 = vld [vmem:[#allocation11 + $0x1e0] sm:$0xff]
    %v4738 = vld [vmem:[#allocation11 + $0x1e8] sm:$0xf]
    %v4739 = vld [vmem:[#allocation11 + $0x1ec] sm:$0xff]
    %v4740 = vld [vmem:[#allocation11 + $0x1f4] sm:$0xf]
    %v4741 = vld [vmem:[#allocation11 + $0x1f8] sm:$0xff]
    %v4742 = vld [vmem:[#allocation11 + $0x200] sm:$0xf]
    %v4743 = vld [vmem:[#allocation11 + $0x204] sm:$0xff]
    %v4744 = vld [vmem:[#allocation11 + $0x20c] sm:$0xf]
    %v4745 = vld [vmem:[#allocation11 + $0x210] sm:$0xff]
    %v4746 = vld [vmem:[#allocation11 + $0x218] sm:$0xf]
    %v4747 = vld [vmem:[#allocation11 + $0x21c] sm:$0xff]
    %v4748 = vld [vmem:[#allocation11 + $0x224] sm:$0xf]
    %v4749 = vld [vmem:[#allocation11 + $0x228] sm:$0xff]
    %v4750 = vld [vmem:[#allocation11 + $0x230] sm:$0xf]
    %v4751 = vld [vmem:[#allocation11 + $0x234] sm:$0xff]
    %v4752 = vld [vmem:[#allocation11 + $0x23c] sm:$0xf]
    %v4753 = vld [vmem:[#allocation11 + $0x240] sm:$0xff]
    %v4754 = vld [vmem:[#allocation11 + $0x248] sm:$0xf]
    %v4755 = vld [vmem:[#allocation11 + $0x24c] sm:$0xff]
    %v4756 = vld [vmem:[#allocation11 + $0x254] sm:$0xf]
    %v4757 = vld [vmem:[#allocation11 + $0x258] sm:$0xff]
    %v4758 = vld [vmem:[#allocation11 + $0x260] sm:$0xf]
    %v4759 = vld [vmem:[#allocation11 + $0x264] sm:$0xff]
    %v4760 = vld [vmem:[#allocation11 + $0x26c] sm:$0xf]
    %v4761 = vld [vmem:[#allocation11 + $0x270] sm:$0xff]
    %v4762 = vld [vmem:[#allocation11 + $0x278] sm:$0xf]
    %v4763 = vld [vmem:[#allocation11 + $0x27c] sm:$0xff]
    %v4764 = vld [vmem:[#allocation11 + $0x284] sm:$0xf]
    %v4765 = vld [vmem:[#allocation11 + $0x288] sm:$0xff]
    %v4766 = vld [vmem:[#allocation11 + $0x290] sm:$0xf]
    %v4767 = vld [vmem:[#allocation11 + $0x294] sm:$0xff]
    %v4768 = vld [vmem:[#allocation11 + $0x29c] sm:$0xf]
    %v4769 = vld [vmem:[#allocation11 + $0x2a0] sm:$0xff]
    %v4770 = vld [vmem:[#allocation11 + $0x2a8] sm:$0xf]
    %v4771 = vld [vmem:[#allocation11 + $0x2ac] sm:$0xff]
    %v4772 = vld [vmem:[#allocation11 + $0x2b4] sm:$0xf]
    %v4773 = vld [vmem:[#allocation11 + $0x2b8] sm:$0xff]
    %v4774 = vld [vmem:[#allocation11 + $0x2c0] sm:$0xf]
    %v4775 = vld [vmem:[#allocation11 + $0x2c4] sm:$0xff]
    %v4776 = vld [vmem:[#allocation11 + $0x2cc] sm:$0xf]
    %v4777 = vld [vmem:[#allocation11 + $0x2d0] sm:$0xff]
    %v4778 = vld [vmem:[#allocation11 + $0x2d8] sm:$0xf]
    %v4779 = vld [vmem:[#allocation11 + $0x2dc] sm:$0xff]
    %v4780 = vld [vmem:[#allocation11 + $0x2e4] sm:$0xf]
    %v4781 = vld [vmem:[#allocation11 + $0x2e8] sm:$0xff]
    %v4782 = vld [vmem:[#allocation11 + $0x2f0] sm:$0xf]
    %v4783 = vld [vmem:[#allocation11 + $0x2f4] sm:$0xff]
    %v4784 = vld [vmem:[#allocation11 + $0x2fc] sm:$0xf]
    %v4913 = vunpack.c.l.b16 %v4657
    %v4914 = vunpack.c.h.b16 %v4657
    %v4915 = vunpack.c.l.b16 %v4658
    %v4916 = vunpack.c.l.b16 %v4659
    %v4917 = vunpack.c.h.b16 %v4659
    %v4918 = vunpack.c.l.b16 %v4660
    %v4919 = vunpack.c.l.b16 %v4661
    %v4920 = vunpack.c.h.b16 %v4661
    %v4921 = vunpack.c.l.b16 %v4662
    %v4922 = vunpack.c.l.b16 %v4663
    %v4923 = vunpack.c.h.b16 %v4663
    %v4924 = vunpack.c.l.b16 %v4664
    %v4925 = vunpack.c.l.b16 %v4665
    %v4926 = vunpack.c.h.b16 %v4665
    %v4927 = vunpack.c.l.b16 %v4666
    %v4928 = vunpack.c.l.b16 %v4667
    %v4929 = vunpack.c.h.b16 %v4667
    %v4930 = vunpack.c.l.b16 %v4668
    %v4931 = vunpack.c.l.b16 %v4669
    %v4932 = vunpack.c.h.b16 %v4669
    %v4933 = vunpack.c.l.b16 %v4670
    %v4934 = vunpack.c.l.b16 %v4671
    %v4935 = vunpack.c.h.b16 %v4671
    %v4936 = vunpack.c.l.b16 %v4672
    %v4937 = vunpack.c.l.b16 %v4673
    %v4938 = vunpack.c.h.b16 %v4673
    %v4939 = vunpack.c.l.b16 %v4674
    %v4940 = vunpack.c.l.b16 %v4675
    %v4941 = vunpack.c.h.b16 %v4675
    %v4942 = vunpack.c.l.b16 %v4676
    %v4943 = vunpack.c.l.b16 %v4677
    %v4944 = vunpack.c.h.b16 %v4677
    %v4945 = vunpack.c.l.b16 %v4678
    %v4946 = vunpack.c.l.b16 %v4679
    %v4947 = vunpack.c.h.b16 %v4679
    %v4948 = vunpack.c.l.b16 %v4680
    %v4949 = vunpack.c.l.b16 %v4681
    %v4950 = vunpack.c.h.b16 %v4681
    %v4951 = vunpack.c.l.b16 %v4682
    %v4952 = vunpack.c.l.b16 %v4683
    %v4953 = vunpack.c.h.b16 %v4683
    %v4954 = vunpack.c.l.b16 %v4684
    %v4955 = vunpack.c.l.b16 %v4685
    %v4956 = vunpack.c.h.b16 %v4685
    %v4957 = vunpack.c.l.b16 %v4686
    %v4958 = vunpack.c.l.b16 %v4687
    %v4959 = vunpack.c.h.b16 %v4687
    %v4960 = vunpack.c.l.b16 %v4688
    %v4961 = vunpack.c.l.b16 %v4689
    %v4962 = vunpack.c.h.b16 %v4689
    %v4963 = vunpack.c.l.b16 %v4690
    %v4964 = vunpack.c.l.b16 %v4691
    %v4965 = vunpack.c.h.b16 %v4691
    %v4966 = vunpack.c.l.b16 %v4692
    %v4967 = vunpack.c.l.b16 %v4693
    %v4968 = vunpack.c.h.b16 %v4693
    %v4969 = vunpack.c.l.b16 %v4694
    %v4970 = vunpack.c.l.b16 %v4695
    %v4971 = vunpack.c.h.b16 %v4695
    %v4972 = vunpack.c.l.b16 %v4696
    %v4973 = vunpack.c.l.b16 %v4697
    %v4974 = vunpack.c.h.b16 %v4697
    %v4975 = vunpack.c.l.b16 %v4698
    %v4976 = vunpack.c.l.b16 %v4699
    %v4977 = vunpack.c.h.b16 %v4699
    %v4978 = vunpack.c.l.b16 %v4700
    %v4979 = vunpack.c.l.b16 %v4701
    %v4980 = vunpack.c.h.b16 %v4701
    %v4981 = vunpack.c.l.b16 %v4702
    %v4982 = vunpack.c.l.b16 %v4703
    %v4983 = vunpack.c.h.b16 %v4703
    %v4984 = vunpack.c.l.b16 %v4704
    %v4985 = vunpack.c.l.b16 %v4705
    %v4986 = vunpack.c.h.b16 %v4705
    %v4987 = vunpack.c.l.b16 %v4706
    %v4988 = vunpack.c.l.b16 %v4707
    %v4989 = vunpack.c.h.b16 %v4707
    %v4990 = vunpack.c.l.b16 %v4708
    %v4991 = vunpack.c.l.b16 %v4709
    %v4992 = vunpack.c.h.b16 %v4709
    %v4993 = vunpack.c.l.b16 %v4710
    %v4994 = vunpack.c.l.b16 %v4711
    %v4995 = vunpack.c.h.b16 %v4711
    %v4996 = vunpack.c.l.b16 %v4712
    %v4997 = vunpack.c.l.b16 %v4713
    %v4998 = vunpack.c.h.b16 %v4713
    %v4999 = vunpack.c.l.b16 %v4714
    %v5000 = vunpack.c.l.b16 %v4715
    %v5001 = vunpack.c.h.b16 %v4715
    %v5002 = vunpack.c.l.b16 %v4716
    %v5003 = vunpack.c.l.b16 %v4717
    %v5004 = vunpack.c.h.b16 %v4717
    %v5005 = vunpack.c.l.b16 %v4718
    %v5006 = vunpack.c.l.b16 %v4719
    %v5007 = vunpack.c.h.b16 %v4719
    %v5008 = vunpack.c.l.b16 %v4720
    %v5009 = vunpack.c.l.b16 %v4721
    %v5010 = vunpack.c.h.b16 %v4721
    %v5011 = vunpack.c.l.b16 %v4722
    %v5012 = vunpack.c.l.b16 %v4723
    %v5013 = vunpack.c.h.b16 %v4723
    %v5014 = vunpack.c.l.b16 %v4724
    %v5015 = vunpack.c.l.b16 %v4725
    %v5016 = vunpack.c.h.b16 %v4725
    %v5017 = vunpack.c.l.b16 %v4726
    %v5018 = vunpack.c.l.b16 %v4727
    %v5019 = vunpack.c.h.b16 %v4727
    %v5020 = vunpack.c.l.b16 %v4728
    %v5021 = vunpack.c.l.b16 %v4729
    %v5022 = vunpack.c.h.b16 %v4729
    %v5023 = vunpack.c.l.b16 %v4730
    %v5024 = vunpack.c.l.b16 %v4731
    %v5025 = vunpack.c.h.b16 %v4731
    %v5026 = vunpack.c.l.b16 %v4732
    %v5027 = vunpack.c.l.b16 %v4733
    %v5028 = vunpack.c.h.b16 %v4733
    %v5029 = vunpack.c.l.b16 %v4734
    %v5030 = vunpack.c.l.b16 %v4735
    %v5031 = vunpack.c.h.b16 %v4735
    %v5032 = vunpack.c.l.b16 %v4736
    %v5033 = vunpack.c.l.b16 %v4737
    %v5034 = vunpack.c.h.b16 %v4737
    %v5035 = vunpack.c.l.b16 %v4738
    %v5036 = vunpack.c.l.b16 %v4739
    %v5037 = vunpack.c.h.b16 %v4739
    %v5038 = vunpack.c.l.b16 %v4740
    %v5039 = vunpack.c.l.b16 %v4741
    %v5040 = vunpack.c.h.b16 %v4741
    %v5041 = vunpack.c.l.b16 %v4742
    %v5042 = vunpack.c.l.b16 %v4743
    %v5043 = vunpack.c.h.b16 %v4743
    %v5044 = vunpack.c.l.b16 %v4744
    %v5045 = vunpack.c.l.b16 %v4745
    %v5046 = vunpack.c.h.b16 %v4745
    %v5047 = vunpack.c.l.b16 %v4746
    %v5048 = vunpack.c.l.b16 %v4747
    %v5049 = vunpack.c.h.b16 %v4747
    %v5050 = vunpack.c.l.b16 %v4748
    %v5051 = vunpack.c.l.b16 %v4749
    %v5052 = vunpack.c.h.b16 %v4749
    %v5053 = vunpack.c.l.b16 %v4750
    %v5054 = vunpack.c.l.b16 %v4751
    %v5055 = vunpack.c.h.b16 %v4751
    %v5056 = vunpack.c.l.b16 %v4752
    %v5057 = vunpack.c.l.b16 %v4753
    %v5058 = vunpack.c.h.b16 %v4753
    %v5059 = vunpack.c.l.b16 %v4754
    %v5060 = vunpack.c.l.b16 %v4755
    %v5061 = vunpack.c.h.b16 %v4755
    %v5062 = vunpack.c.l.b16 %v4756
    %v5063 = vunpack.c.l.b16 %v4757
    %v5064 = vunpack.c.h.b16 %v4757
    %v5065 = vunpack.c.l.b16 %v4758
    %v5066 = vunpack.c.l.b16 %v4759
    %v5067 = vunpack.c.h.b16 %v4759
    %v5068 = vunpack.c.l.b16 %v4760
    %v5069 = vunpack.c.l.b16 %v4761
    %v5070 = vunpack.c.h.b16 %v4761
    %v5071 = vunpack.c.l.b16 %v4762
    %v5072 = vunpack.c.l.b16 %v4763
    %v5073 = vunpack.c.h.b16 %v4763
    %v5074 = vunpack.c.l.b16 %v4764
    %v5075 = vunpack.c.l.b16 %v4765
    %v5076 = vunpack.c.h.b16 %v4765
    %v5077 = vunpack.c.l.b16 %v4766
    %v5078 = vunpack.c.l.b16 %v4767
    %v5079 = vunpack.c.h.b16 %v4767
    %v5080 = vunpack.c.l.b16 %v4768
    %v5081 = vunpack.c.l.b16 %v4769
    %v5082 = vunpack.c.h.b16 %v4769
    %v5083 = vunpack.c.l.b16 %v4770
    %v5084 = vunpack.c.l.b16 %v4771
    %v5085 = vunpack.c.h.b16 %v4771
    %v5086 = vunpack.c.l.b16 %v4772
    %v5087 = vunpack.c.l.b16 %v4773
    %v5088 = vunpack.c.h.b16 %v4773
    %v5089 = vunpack.c.l.b16 %v4774
    %v5090 = vunpack.c.l.b16 %v4775
    %v5091 = vunpack.c.h.b16 %v4775
    %v5092 = vunpack.c.l.b16 %v4776
    %v5093 = vunpack.c.l.b16 %v4777
    %v5094 = vunpack.c.h.b16 %v4777
    %v5095 = vunpack.c.l.b16 %v4778
    %v5096 = vunpack.c.l.b16 %v4779
    %v5097 = vunpack.c.h.b16 %v4779
    %v5098 = vunpack.c.l.b16 %v4780
    %v5099 = vunpack.c.l.b16 %v4781
    %v5100 = vunpack.c.h.b16 %v4781
    %v5101 = vunpack.c.l.b16 %v4782
    %v5102 = vunpack.c.l.b16 %v4783
    %v5103 = vunpack.c.h.b16 %v4783
    %v5104 = vunpack.c.l.b16 %v4784
    %v5105 = vpack.c.b16 %v4916, %v4913
    %v5106 = vpack.c.b16 %v4917, %v4914
    %v5107 = vpack.c.b16 %v4918, %v4915
    %v5108 = vpack.c.b16 %v4922, %v4919
    %v5109 = vpack.c.b16 %v4923, %v4920
    %v5110 = vpack.c.b16 %v4924, %v4921
    %v5111 = vpack.c.b16 %v4928, %v4925
    %v5112 = vpack.c.b16 %v4929, %v4926
    %v5113 = vpack.c.b16 %v4930, %v4927
    %v5114 = vpack.c.b16 %v4934, %v4931
    %v5115 = vpack.c.b16 %v4935, %v4932
    %v5116 = vpack.c.b16 %v4936, %v4933
    %v5117 = vpack.c.b16 %v4940, %v4937
    %v5118 = vpack.c.b16 %v4941, %v4938
    %v5119 = vpack.c.b16 %v4942, %v4939
    %v5120 = vpack.c.b16 %v4946, %v4943
    %v5121 = vpack.c.b16 %v4947, %v4944
    %v5122 = vpack.c.b16 %v4948, %v4945
    %v5123 = vpack.c.b16 %v4952, %v4949
    %v5124 = vpack.c.b16 %v4953, %v4950
    %v5125 = vpack.c.b16 %v4954, %v4951
    %v5126 = vpack.c.b16 %v4958, %v4955
    %v5127 = vpack.c.b16 %v4959, %v4956
    %v5128 = vpack.c.b16 %v4960, %v4957
    %v5129 = vpack.c.b16 %v4964, %v4961
    %v5130 = vpack.c.b16 %v4965, %v4962
    %v5131 = vpack.c.b16 %v4966, %v4963
    %v5132 = vpack.c.b16 %v4970, %v4967
    %v5133 = vpack.c.b16 %v4971, %v4968
    %v5134 = vpack.c.b16 %v4972, %v4969
    %v5135 = vpack.c.b16 %v4976, %v4973
    %v5136 = vpack.c.b16 %v4977, %v4974
    %v5137 = vpack.c.b16 %v4978, %v4975
    %v5138 = vpack.c.b16 %v4982, %v4979
    %v5139 = vpack.c.b16 %v4983, %v4980
    %v5140 = vpack.c.b16 %v4984, %v4981
    %v5141 = vpack.c.b16 %v4988, %v4985
    %v5142 = vpack.c.b16 %v4989, %v4986
    %v5143 = vpack.c.b16 %v4990, %v4987
    %v5144 = vpack.c.b16 %v4994, %v4991
    %v5145 = vpack.c.b16 %v4995, %v4992
    %v5146 = vpack.c.b16 %v4996, %v4993
    %v5147 = vpack.c.b16 %v5000, %v4997
    %v5148 = vpack.c.b16 %v5001, %v4998
    %v5149 = vpack.c.b16 %v5002, %v4999
    %v5150 = vpack.c.b16 %v5006, %v5003
    %v5151 = vpack.c.b16 %v5007, %v5004
    %v5152 = vpack.c.b16 %v5008, %v5005
    %v5153 = vpack.c.b16 %v5012, %v5009
    %v5154 = vpack.c.b16 %v5013, %v5010
    %v5155 = vpack.c.b16 %v5014, %v5011
    %v5156 = vpack.c.b16 %v5018, %v5015
    %v5157 = vpack.c.b16 %v5019, %v5016
    %v5158 = vpack.c.b16 %v5020, %v5017
    %v5159 = vpack.c.b16 %v5024, %v5021
    %v5160 = vpack.c.b16 %v5025, %v5022
    %v5161 = vpack.c.b16 %v5026, %v5023
    %v5162 = vpack.c.b16 %v5030, %v5027
    %v5163 = vpack.c.b16 %v5031, %v5028
    %v5164 = vpack.c.b16 %v5032, %v5029
    %v5165 = vpack.c.b16 %v5036, %v5033
    %v5166 = vpack.c.b16 %v5037, %v5034
    %v5167 = vpack.c.b16 %v5038, %v5035
    %v5168 = vpack.c.b16 %v5042, %v5039
    %v5169 = vpack.c.b16 %v5043, %v5040
    %v5170 = vpack.c.b16 %v5044, %v5041
    %v5171 = vpack.c.b16 %v5048, %v5045
    %v5172 = vpack.c.b16 %v5049, %v5046
    %v5173 = vpack.c.b16 %v5050, %v5047
    %v5174 = vpack.c.b16 %v5054, %v5051
    %v5175 = vpack.c.b16 %v5055, %v5052
    %v5176 = vpack.c.b16 %v5056, %v5053
    %v5177 = vpack.c.b16 %v5060, %v5057
    %v5178 = vpack.c.b16 %v5061, %v5058
    %v5179 = vpack.c.b16 %v5062, %v5059
    %v5180 = vpack.c.b16 %v5066, %v5063
    %v5181 = vpack.c.b16 %v5067, %v5064
    %v5182 = vpack.c.b16 %v5068, %v5065
    %v5183 = vpack.c.b16 %v5072, %v5069
    %v5184 = vpack.c.b16 %v5073, %v5070
    %v5185 = vpack.c.b16 %v5074, %v5071
    %v5186 = vpack.c.b16 %v5078, %v5075
    %v5187 = vpack.c.b16 %v5079, %v5076
    %v5188 = vpack.c.b16 %v5080, %v5077
    %v5189 = vpack.c.b16 %v5084, %v5081
    %v5190 = vpack.c.b16 %v5085, %v5082
    %v5191 = vpack.c.b16 %v5086, %v5083
    %v5192 = vpack.c.b16 %v5090, %v5087
    %v5193 = vpack.c.b16 %v5091, %v5088
    %v5194 = vpack.c.b16 %v5092, %v5089
    %v5195 = vpack.c.b16 %v5096, %v5093
    %v5196 = vpack.c.b16 %v5097, %v5094
    %v5197 = vpack.c.b16 %v5098, %v5095
    %v5198 = vpack.c.b16 %v5102, %v5099
    %v5199 = vpack.c.b16 %v5103, %v5100
    %v5200 = vpack.c.b16 %v5104, %v5101
    %5297 = vmatpush.bf16.msra.mxu0 %v5126
    %5298 = vmatpush.bf16.msra.mxu0 %v5123
    %5299 = vmatpush.bf16.msra.mxu0 %v5120
    %5300 = vmatpush.bf16.msra.mxu0 %v5117
    %5301 = vmatpush.bf16.msra.mxu0 %v5114
    %5302 = vmatpush.bf16.msra.mxu0 %v5111
    %5303 = vmatpush.bf16.msra.mxu0 %v5108
    %5304 = vmatpush.bf16.msra.mxu0 %v5105
    %5305 = vmatmul.bf16.gmra.mxu0 %v4653
    %v5306 = vpop.f32.mrf.mxu0
    %v5307 = vadd.f32 %v4386, %v5306
    %v5308 = vpop.f32.mrf.mxu0
    %5309 = vdwg.mxu0
    %5310 = vmatpush.bf16.msra.mxu0 %v5150
    %5311 = vmatpush.bf16.msra.mxu0 %v5147
    %5312 = vmatpush.bf16.msra.mxu0 %v5144
    %5313 = vmatpush.bf16.msra.mxu0 %v5141
    %5314 = vmatpush.bf16.msra.mxu0 %v5138
    %5315 = vmatpush.bf16.msra.mxu0 %v5135
    %5316 = vmatpush.bf16.msra.mxu0 %v5132
    %5317 = vmatpush.bf16.msra.mxu0 %v5129
    %5318 = vmatmul.bf16.gmra.mxu0 %v4654
    %v5319 = vpop.f32.mrf.mxu0
    %v5320 = vadd.f32 %v5307, %v5319
    %v5321 = vpop.f32.mrf.mxu0
    %5322 = vdwg.mxu0
    %5323 = vmatpush.bf16.msra.mxu0 %v5174
    %5324 = vmatpush.bf16.msra.mxu0 %v5171
    %5325 = vmatpush.bf16.msra.mxu0 %v5168
    %5326 = vmatpush.bf16.msra.mxu0 %v5165
    %5327 = vmatpush.bf16.msra.mxu0 %v5162
    %5328 = vmatpush.bf16.msra.mxu0 %v5159
    %5329 = vmatpush.bf16.msra.mxu0 %v5156
    %5330 = vmatpush.bf16.msra.mxu0 %v5153
    %5331 = vmatmul.bf16.gmra.mxu0 %v4655
    %v5332 = vpop.f32.mrf.mxu0
    %v5333 = vadd.f32 %v5320, %v5332
    %v5334 = vpop.f32.mrf.mxu0
    %5335 = vdwg.mxu0
    %5336 = vmatpush.bf16.msra.mxu0 %v5198
    %5337 = vmatpush.bf16.msra.mxu0 %v5195
    %5338 = vmatpush.bf16.msra.mxu0 %v5192
    %5339 = vmatpush.bf16.msra.mxu0 %v5189
    %5340 = vmatpush.bf16.msra.mxu0 %v5186
    %5341 = vmatpush.bf16.msra.mxu0 %v5183
    %5342 = vmatpush.bf16.msra.mxu0 %v5180
    %5343 = vmatpush.bf16.msra.mxu0 %v5177
    %5344 = vmatmul.bf16.gmra.mxu0 %v4656
    %v5345 = vpop.f32.mrf.mxu0
    %v5346 = vadd.f32 %v5333, %v5345
    %v5347 = vpop.f32.mrf.mxu0
    %5348 = vdwg.mxu0
    %5349 = vmatpush.bf16.msra.mxu0 %v5127
    %5350 = vmatpush.bf16.msra.mxu0 %v5124
    %5351 = vmatpush.bf16.msra.mxu0 %v5121
    %5352 = vmatpush.bf16.msra.mxu0 %v5118
    %5353 = vmatpush.bf16.msra.mxu0 %v5115
    %5354 = vmatpush.bf16.msra.mxu0 %v5112
    %5355 = vmatpush.bf16.msra.mxu0 %v5109
    %5356 = vmatpush.bf16.msra.mxu0 %v5106
    %5357 = vmatmul.bf16.gmra.mxu0 %v4653
    %v5358 = vpop.f32.mrf.mxu0
    %v5359 = vadd.f32 %v4516, %v5358
    %v5360 = vpop.f32.mrf.mxu0
    %5361 = vdwg.mxu0
    %5362 = vmatpush.bf16.msra.mxu0 %v5151
    %5363 = vmatpush.bf16.msra.mxu0 %v5148
    %5364 = vmatpush.bf16.msra.mxu0 %v5145
    %5365 = vmatpush.bf16.msra.mxu0 %v5142
    %5366 = vmatpush.bf16.msra.mxu0 %v5139
    %5367 = vmatpush.bf16.msra.mxu0 %v5136
    %5368 = vmatpush.bf16.msra.mxu0 %v5133
    %5369 = vmatpush.bf16.msra.mxu0 %v5130
    %5370 = vmatmul.bf16.gmra.mxu0 %v4654
    %v5371 = vpop.f32.mrf.mxu0
    %v5372 = vadd.f32 %v5359, %v5371
    %v5373 = vpop.f32.mrf.mxu0
    %5374 = vdwg.mxu0
    %5375 = vmatpush.bf16.msra.mxu0 %v5175
    %5376 = vmatpush.bf16.msra.mxu0 %v5172
    %5377 = vmatpush.bf16.msra.mxu0 %v5169
    %5378 = vmatpush.bf16.msra.mxu0 %v5166
    %5379 = vmatpush.bf16.msra.mxu0 %v5163
    %5380 = vmatpush.bf16.msra.mxu0 %v5160
    %5381 = vmatpush.bf16.msra.mxu0 %v5157
    %5382 = vmatpush.bf16.msra.mxu0 %v5154
    %5383 = vmatmul.bf16.gmra.mxu0 %v4655
    %v5384 = vpop.f32.mrf.mxu0
    %v5385 = vadd.f32 %v5372, %v5384
    %v5386 = vpop.f32.mrf.mxu0
    %5387 = vdwg.mxu0
    %5388 = vmatpush.bf16.msra.mxu0 %v5199
    %5389 = vmatpush.bf16.msra.mxu0 %v5196
    %5390 = vmatpush.bf16.msra.mxu0 %v5193
    %5391 = vmatpush.bf16.msra.mxu0 %v5190
    %5392 = vmatpush.bf16.msra.mxu0 %v5187
    %5393 = vmatpush.bf16.msra.mxu0 %v5184
    %5394 = vmatpush.bf16.msra.mxu0 %v5181
    %5395 = vmatpush.bf16.msra.mxu0 %v5178
    %5396 = vmatmul.bf16.gmra.mxu0 %v4656
    %v5397 = vpop.f32.mrf.mxu0
    %v5398 = vadd.f32 %v5385, %v5397
    %v5399 = vpop.f32.mrf.mxu0
    %5400 = vdwg.mxu0
    %5401 = vmatpush.bf16.msra.mxu0 %v5128
    %5402 = vmatpush.bf16.msra.mxu0 %v5125
    %5403 = vmatpush.bf16.msra.mxu0 %v5122
    %5404 = vmatpush.bf16.msra.mxu0 %v5119
    %5405 = vmatpush.bf16.msra.mxu0 %v5116
    %5406 = vmatpush.bf16.msra.mxu0 %v5113
    %5407 = vmatpush.bf16.msra.mxu0 %v5110
    %5408 = vmatpush.bf16.msra.mxu0 %v5107
    %5409 = vmatmul.bf16.gmra.mxu0 %v4653
    %v5410 = vpop.f32.mrf.mxu0
    %v5411 = vadd.f32 %v4646, %v5410
    %v5412 = vpop.f32.mrf.mxu0
    %5413 = vdwg.mxu0
    %5414 = vmatpush.bf16.msra.mxu0 %v5152
    %5415 = vmatpush.bf16.msra.mxu0 %v5149
    %5416 = vmatpush.bf16.msra.mxu0 %v5146
    %5417 = vmatpush.bf16.msra.mxu0 %v5143
    %5418 = vmatpush.bf16.msra.mxu0 %v5140
    %5419 = vmatpush.bf16.msra.mxu0 %v5137
    %5420 = vmatpush.bf16.msra.mxu0 %v5134
    %5421 = vmatpush.bf16.msra.mxu0 %v5131
    %5422 = vmatmul.bf16.gmra.mxu0 %v4654
    %v5423 = vpop.f32.mrf.mxu0
    %v5424 = vadd.f32 %v5411, %v5423
    %v5425 = vpop.f32.mrf.mxu0
    %5426 = vdwg.mxu0
    %5427 = vmatpush.bf16.msra.mxu0 %v5176
    %5428 = vmatpush.bf16.msra.mxu0 %v5173
    %5429 = vmatpush.bf16.msra.mxu0 %v5170
    %5430 = vmatpush.bf16.msra.mxu0 %v5167
    %5431 = vmatpush.bf16.msra.mxu0 %v5164
    %5432 = vmatpush.bf16.msra.mxu0 %v5161
    %5433 = vmatpush.bf16.msra.mxu0 %v5158
    %5434 = vmatpush.bf16.msra.mxu0 %v5155
    %5435 = vmatmul.bf16.gmra.mxu0 %v4655
    %v5436 = vpop.f32.mrf.mxu0
    %v5437 = vadd.f32 %v5424, %v5436
    %v5438 = vpop.f32.mrf.mxu0
    %5439 = vdwg.mxu0
    %5440 = vmatpush.bf16.msra.mxu0 %v5200
    %5441 = vmatpush.bf16.msra.mxu0 %v5197
    %5442 = vmatpush.bf16.msra.mxu0 %v5194
    %5443 = vmatpush.bf16.msra.mxu0 %v5191
    %5444 = vmatpush.bf16.msra.mxu0 %v5188
    %5445 = vmatpush.bf16.msra.mxu0 %v5185
    %5446 = vmatpush.bf16.msra.mxu0 %v5182
    %5447 = vmatpush.bf16.msra.mxu0 %v5179
    %5448 = vmatmul.bf16.gmra.mxu0 %v4656
    %v5449 = vpop.f32.mrf.mxu0
    %v5450 = vadd.f32 %v5437, %v5449
    %v5451 = vpop.f32.mrf.mxu0
    %5452 = vdwg.mxu0
    %v5453 = vadd.f32 %v5346, %v5398
    %v5454 = vadd.f32 %v5453, %v5450
    %5455 = vadd.xlane.f32.xlu0 %v5454
    %v5456 = vpop.xlane.xlu0 %5455
    %v5457 = vmul.f32 %v5456, 0.0036630037
    %v5458 = vsub.f32 %v5346, %v5457
    %v5459 = vsub.f32 %v5398, %v5457
    %v5460 = vsub.f32 %v5450, %v5457
    %v5461 = vmul.f32 %v5458, %v5458
    %v5462 = vmul.f32 %v5459, %v5459
    %v5463 = vmul.f32 %v5460, %v5460
    %v5464 = vadd.f32 %v5461, %v5462
    %v5465 = vadd.f32 %v5464, %v5463
    %5466 = vadd.xlane.f32.xlu0 %v5465
    %v5467 = vpop.xlane.xlu0 %5466
    %v5468 = vmul.f32 %v5457, %v5457
    %v5469 = vmul.f32 %v5468, 111.0
    %v5470 = vsub.f32 %v5467, %v5469
    %v5471 = vmul.f32 %v5470, 0.0036630037
    %v5472 = vadd.f32 %v5471, 1e-05
    %v5473 = vrsqrt.pop %v5472
    %v5474 = vmul.f32 %v5473, %v5472
    %v5475 = vmul.f32 %v5474, %v5473
    %v5476 = vmul.f32 0.5, %v5475
    %v5477 = vsub.f32 1.5, %v5476
    %v5478 = vmul.f32 %v5473, %v5477
    %vm5479 = vweird.f32 %v5472
    %vm5480 = vweird.f32 %v5473
    %vm5481 = vmor %vm5479, %vm5480
    %v5482 = vsel %vm5481, %v5473, %v5478
    %v5483 = vmul.f32 %v5458, %v5482
    %v5484 = vmul.f32 %v5459, %v5482
    %v5485 = vmul.f32 %v5460, %v5482
    %v5486 = vld [vmem:[#allocation13] sm:$0x7]
    %v5488 = vperm.slane %v5486, 0
    %v5489 = vperm.slane %v5486, 1
    %v5490 = vperm.slane %v5486, 2
    %v5494 = vmul.f32 %v5483, %v5488
    %v5495 = vmul.f32 %v5484, %v5489
    %v5496 = vmul.f32 %v5485, %v5490
    %v5497 = vld [vmem:[#allocation14] sm:$0x7]
    %v5499 = vperm.slane %v5497, 0
    %v5500 = vperm.slane %v5497, 1
    %v5501 = vperm.slane %v5497, 2
    %v5505 = vadd.f32 %v5494, %v5499
    %v5506 = vadd.f32 %v5495, %v5500
    %v5507 = vadd.f32 %v5496, %v5501
    %5508 = vst [vmem:[#allocation16] sm:$0xff] %v5505
    %5509 = vst [vmem:[#allocation16 + $0x8] sm:$0xff] %v5506
    %5510 = vst [vmem:[#allocation16 + $0x10] sm:$0xff] %v5507
    // Predicated region
    $region66: #{tpu_custom_call.1} parent=1 // pred_check
      _
    $region67: #{tpu_custom_call.1} parent=1 // pred_check_branch
      %5512 = sbr.rel (0) target = $region69
    $region68: #{tpu_custom_call.1} parent=1 // pred_region
      %5514 = vsyncadd [#allocation4], 0
      %s5516 = sshll.u32 [#allocation16], 4
      %s5517 = int_to_ptr.vmem [resolvable:$true] %s5516
      %s5518 = sshll.u32 %s8, 4
      %s5519 = int_to_ptr.hbm [resolvable:$true] %s5518
      %5521 = dma.vmem_to_hbm [thread:$0]  %s5517, 384, %s5519, [#allocation4]
    $region69: #{tpu_custom_call.1} parent=1 // pred_fallthru
      _
    // Predicated region
    $region70: #{tpu_custom_call.1} parent=1 // pred_check
      _
    $region71: #{tpu_custom_call.1} parent=1 // pred_check_branch
      %5523 = sbr.rel (0) target = $region73
    $region72: #{tpu_custom_call.1} parent=1 // pred_region
      %5525 = dma.done [#allocation4], 384
    $region73: #{tpu_custom_call.1} parent=1 // pred_fallthru
      _
    %5526 = vsyncpa [#allocation3], 1
    %5527 = vsyncpa [#allocation6], 1
    %5528 = vsyncpa [#allocation9], 1
    %5529 = vsyncpa [#allocation12], 1
    %5530 = vsyncpa [#allocation15], 1
    %5531 = vsyncpa [#allocation4], 1

</llo_original>
